<compile_context>
chip_gen: v6e
topology: v6e:2x2x1
jax: 0.10.0
libtpu: 0.0.40
codegen_flags: <defaults>
</compile_context>

<pallas_src>
import numpy as np
import jax
import jax.numpy as jnp
from jax.experimental import pallas as pl
from jax.experimental.pallas import tpu as pltpu

# ---------------- configuration (a concrete instantiation of the module) ----------------
N_NODES    = 16
IN_DIM     = 16
NUM_HIDDEN = 32
OUT_DIM    = 16
NUM_LAYERS = 2
NHEAD      = 4
HEAD_DIM   = NUM_HIDDEN // NHEAD          # 8
NEG_SLOPE  = 0.2
NORM       = True
LN_EPS     = 1e-5
F_PAD      = 128                          # lane-padded feature width
BATCH      = 8                            # diffusion timesteps batched into one pallas_call
# TODO(synk): if instantiated with activation='gelu', swap jnp.maximum(x, 0) for jax.nn.gelu.


# ---------------- fused Pallas kernel (all layers + MLP, one grid step per graph) ----------------
def _make_fused_kernel(n, residual_flags, mxu_dtype):
    num_layers = len(residual_flags)
    assert n & (n - 1) == 0 and n >= 4, "tree/partial reductions below assume n = power of two >= 4"
    fast = (mxu_dtype != jnp.float32)     # perf config: approx reciprocal on the (idle) EUP slot

    def kernel(h0_ref, mask_ref, rows_ref, wsd_ref, arep_ref, wmlp_ref, out_ref, hid_ref):
        inv_hid = jnp.float32(1.0 / NUM_HIDDEN)
        # lane mask of the real NUM_HIDDEN feature columns (pad lanes must stay exactly zero).
        featmask = (jax.lax.broadcasted_iota(jnp.int32, (n, F_PAD), 1) < NUM_HIDDEN
                    ).astype(jnp.float32)

        h = h0_ref[...]                                          # (n, F_PAD) f32, pad cols zero

        for l in range(num_layers):
            r0 = 4 * l
            bsrc  = rows_ref[r0 + 0:r0 + 1, :]
            bdst  = rows_ref[r0 + 1:r0 + 2, :]
            gamma = rows_ref[r0 + 2:r0 + 3, :]
            beta  = rows_ref[r0 + 3:r0 + 4, :]

            # fused fc_src|fc_dst projection: ONE (n,128)@(128,256) MXU matmul, split at lane 128.
            proj = jnp.dot(h.astype(mxu_dtype), wsd_ref[l * F_PAD:(l + 1) * F_PAD, :],
                           preferred_element_type=jnp.float32)   # (n, 2*F_PAD) f32
            el = proj[:, :F_PAD] + bsrc                          # (n, F_PAD)
            er = proj[:, F_PAD:] + bdst

            # GATv2 additive attention for all (src u, dst v) pairs and all heads at once:
            # one (n*n,128)@(128,128) MXU matmul vs the head-replicated block-diagonal matrix.
            s = el[:, None, :] + er[None, :, :]                  # (n_src, n_dst, F_PAD)
            s = jnp.where(s >= 0, s, NEG_SLOPE * s)              # LeakyReLU
            e = jnp.dot(s.reshape(n * n, F_PAD).astype(mxu_dtype),
                        arep_ref[l * F_PAD:(l + 1) * F_PAD, :],
                        preferred_element_type=jnp.float32)      # (n*n, F_PAD); row = u*n+v
            # mask bias applied ONCE to the whole score matrix (0 on edges, -1e30 off-edges).
            eb = e + (mask_ref[...] - jnp.float32(1.0)) * jnp.float32(1e30)

            # edge softmax over sources u per destination v, per head.
            # tree-shaped max (depth log2 n) instead of a serial depth-n chain.
            lvl = [jnp.maximum(eb[(2 * u) * n:(2 * u + 1) * n, :],
                               eb[(2 * u + 1) * n:(2 * u + 2) * n, :]) for u in range(n // 2)]
            while len(lvl) > 1:
                lvl = [jnp.maximum(lvl[2 * i], lvl[2 * i + 1]) for i in range(len(lvl) // 2)]
            m = lvl[0]                                           # (n, F_PAD)

            # exp + masked aggregation with 4 independent partial accumulators (short dep chains).
            npart = 4
            dens, wsums = [None] * npart, [None] * npart
            for u in range(n):
                p_u = jnp.exp(eb[u * n:(u + 1) * n, :] - m) * mask_ref[u * n:(u + 1) * n, :]
                w_u = p_u * el[u:u + 1, :]                       # aggregate fc_src features
                k = u % npart
                dens[k]  = p_u if dens[k]  is None else dens[k]  + p_u
                wsums[k] = w_u if wsums[k] is None else wsums[k] + w_u
            den  = (dens[0] + dens[1]) + (dens[2] + dens[3])
            wsum = (wsums[0] + wsums[1]) + (wsums[2] + wsums[3])

            den = jnp.maximum(den, jnp.float32(1e-30))
            if fast:
                rst = wsum * pl.reciprocal(den, approx=True)     # EUP slot, off the VPU path
            else:
                rst = wsum / den                                 # exact divide (strict-check path)

            rst = jnp.maximum(rst, 0.0)                          # GATv2Conv activation (relu)
            if residual_flags[l]:                                # torch: h.shape == h_in.shape
                rst = rst + h

            if NORM:                                             # LayerNorm over real NUM_HIDDEN feats
                mean = jnp.sum(rst, axis=-1, keepdims=True) * inv_hid   # pad cols are exactly zero
                cent = (rst - mean) * featmask
                var = jnp.sum(cent * cent, axis=-1, keepdims=True) * inv_hid
                rst = cent * jax.lax.rsqrt(var + LN_EPS) * gamma + beta
            h = rst

        # self.output = Linear -> ReLU -> Linear
        b1 = rows_ref[4 * num_layers + 0:4 * num_layers + 1, :]
        b2 = rows_ref[4 * num_layers + 1:4 * num_layers + 2, :]
        z = jnp.maximum(
            jnp.dot(h.astype(mxu_dtype), wmlp_ref[:F_PAD, :],
                    preferred_element_type=jnp.float32) + b1, 0.0)
        out = jnp.dot(z.astype(mxu_dtype), wmlp_ref[F_PAD:2 * F_PAD, :],
                      preferred_element_type=jnp.float32) + b2

        out_ref[...] = out
        hid_ref[...] = h

    return kernel


# ---------------- wrapper: parameter packing (lane padding + slabs) + one pallas_call ----------------
def _pad2(x, rows, cols):
    x = jnp.asarray(x, jnp.float32)
    return jnp.zeros((rows, cols), jnp.float32).at[:x.shape[0], :x.shape[1]].set(x)


def _make_arep(attn):
    """Head-replicated block-diagonal attention matrix: arep[h*D+d, h*D+d2] = attn[h, d]."""
    attn = jnp.asarray(attn, jnp.float32)                        # (NHEAD, HEAD_DIM)
    eye_h = jnp.eye(NHEAD, dtype=jnp.float32)
    blocks = attn[:, :, None, None] * eye_h[:, None, :, None]    # (H, D, H, 1)
    blocks = jnp.broadcast_to(blocks, (NHEAD, HEAD_DIM, NHEAD, HEAD_DIM))
    return _pad2(blocks.reshape(NUM_HIDDEN, NUM_HIDDEN), F_PAD, F_PAD)


def denoising_unet_forward(params, adj, x_t, time_embed, mxu_dtype=jnp.bfloat16):
    """x_t:(B,n,IN_DIM), time_embed:(B,n,NUM_HIDDEN), adj[v,u]=1 iff edge u->v (graph shared across batch)."""
    x_t = jnp.asarray(x_t, jnp.float32)
    time_embed = jnp.asarray(time_embed, jnp.float32)
    if x_t.ndim == 2:                                            # allow a single unbatched graph
        x_t, time_embed = x_t[None], time_embed[None]
    B, n = x_t.shape[0], x_t.shape[1]

    h0 = jnp.concatenate([x_t, time_embed], axis=-1)             # torch.cat([x_t, time_embed], dim=1)
    h0 = jnp.pad(h0, ((0, 0), (0, 0), (0, F_PAD - h0.shape[-1])))
    h0_flat = h0.reshape(B * n, F_PAD)                           # 2-D, lane-dense per-graph blocks

    # adjacency, pre-broadcast to lane-dense (n*n, F_PAD): row u*n+v = adj[v, u]
    adj = jnp.asarray(adj, jnp.float32)
    maskf = jnp.broadcast_to(adj.T.reshape(n * n, 1), (n * n, F_PAD))

    # ---- pack parameters into a handful of VMEM-resident slabs (few DMAs, lane-dense) ----
    residual_flags, rows, wsd_blocks, arep_blocks = [], [], [], []
    din = x_t.shape[-1] + time_embed.shape[-1]
    for lp in params["layers"]:
        residual_flags.append(din == NUM_HIDDEN)                 # torch: h.shape == h_in.shape
        rows += [_pad2(lp["bsrc"], 1, F_PAD), _pad2(lp["bdst"], 1, F_PAD),
                 _pad2(lp["gamma"], 1, F_PAD), _pad2(lp["beta"], 1, F_PAD)]
        wsd_blocks.append(jnp.concatenate(
            [_pad2(lp["wsrc"], F_PAD, F_PAD), _pad2(lp["wdst"], F_PAD, F_PAD)], axis=1))
        arep_blocks.append(_make_arep(lp["attn"]))
        din = NUM_HIDDEN
    mp = params["mlp"]
    rows += [_pad2(mp["b1"], 1, F_PAD), _pad2(mp["b2"], 1, F_PAD)]
    n_rows = ((len(rows) + 7) // 8) * 8                          # sublane-pad the row slab
    rows += [jnp.zeros((1, F_PAD), jnp.float32)] * (n_rows - len(rows))

    rows_all = jnp.concatenate(rows, axis=0)                             # (n_rows, 128) f32
    wsd_all  = jnp.concatenate(wsd_blocks, axis=0).astype(mxu_dtype)     # (L*128, 256)
    arep_all = jnp.concatenate(arep_blocks, axis=0).astype(mxu_dtype)    # (L*128, 128)
    wmlp_all = jnp.concatenate([_pad2(mp["w1"], F_PAD, F_PAD),
                                _pad2(mp["w2"], F_PAD, F_PAD)], axis=0).astype(mxu_dtype)

    L = len(params["layers"])
    grid_spec = pltpu.PrefetchScalarGridSpec(
        num_scalar_prefetch=0,
        grid=(B,),                                               # batch of graphs / diffusion timesteps
        in_specs=[
            pl.BlockSpec((n, F_PAD), lambda b: (b, 0)),                  # per-graph node features
            pl.BlockSpec((n * n, F_PAD), lambda b: (0, 0)),              # shared adjacency mask (resident)
            pl.BlockSpec((n_rows, F_PAD), lambda b: (0, 0)),             # packed 1-row params (resident)
            pl.BlockSpec((L * F_PAD, 2 * F_PAD), lambda b: (0, 0)),      # per-layer [wsrc|wdst] (resident)
            pl.BlockSpec((L * F_PAD, F_PAD), lambda b: (0, 0)),          # per-layer arep (resident)
            pl.BlockSpec((2 * F_PAD, F_PAD), lambda b: (0, 0)),          # MLP [w1; w2] (resident)
        ],
        out_specs=[
            pl.BlockSpec((n, F_PAD), lambda b: (b, 0)),
            pl.BlockSpec((n, F_PAD), lambda b: (b, 0)),
        ],
    )
    out_flat, hid_flat = pl.pallas_call(
        _make_fused_kernel(n, tuple(residual_flags), mxu_dtype),
        grid_spec=grid_spec,
        out_shape=(jax.ShapeDtypeStruct((B * n, F_PAD), jnp.float32),
                   jax.ShapeDtypeStruct((B * n, F_PAD), jnp.float32)),
        compiler_params=pltpu.CompilerParams(
            dimension_semantics=("parallel",)),                  # second TensorCore on v7x
    )(h0_flat, maskf, rows_all, wsd_all, arep_all, wmlp_all)

    out = out_flat.reshape(B, n, F_PAD)[:, :, :OUT_DIM]
    hid = hid_flat.reshape(B, n, F_PAD)[:, :, :NUM_HIDDEN]
    return out, hid


# ---------------- pure-JAX reference (mxu_dtype controls matmul-input precision only) ----------------
def reference_forward(params, adj, x_t, time_embed, mxu_dtype=jnp.float32):
    dt = mxu_dtype
    h = jnp.concatenate([x_t, time_embed], axis=1)
    for lp in params["layers"]:
        h_in = h
        n = h.shape[0]
        el = (jnp.dot(h.astype(dt), lp["wsrc"].astype(dt), preferred_element_type=jnp.float32)
              + lp["bsrc"]).reshape(n, NHEAD, HEAD_DIM)
        er = (jnp.dot(h.astype(dt), lp["wdst"].astype(dt), preferred_element_type=jnp.float32)
              + lp["bdst"]).reshape(n, NHEAD, HEAD_DIM)
        s = el[None, :, :, :] + er[:, None, :, :]                # (Nv, Nu, H, D)
        s = jnp.where(s >= 0, s, NEG_SLOPE * s)
        e = jnp.einsum("vuhd,hd->vuh", s.astype(dt), lp["attn"].astype(dt),
                       preferred_element_type=jnp.float32)
        e = jnp.where(adj[:, :, None] > 0, e, -1e30)
        e = e - e.max(axis=1, keepdims=True)
        p = jnp.exp(e) * adj[:, :, None]
        alpha = p / jnp.maximum(p.sum(axis=1, keepdims=True), 1e-30)
        rst = jnp.einsum("vuh,uhd->vhd", alpha, el).reshape(n, NUM_HIDDEN)
        rst = jnp.maximum(rst, 0.0)
        if rst.shape == h_in.shape:
            rst = rst + h_in
        mean = rst.mean(axis=-1, keepdims=True)
        var = ((rst - mean) ** 2).mean(axis=-1, keepdims=True)
        rst = (rst - mean) * jax.lax.rsqrt(var + LN_EPS)
        h = rst * lp["gamma"] + lp["beta"]
    mp = params["mlp"]
    z = jnp.maximum(jnp.dot(h.astype(dt), mp["w1"].astype(dt),
                            preferred_element_type=jnp.float32) + mp["b1"], 0.0)
    out = jnp.dot(z.astype(dt), mp["w2"].astype(dt),
                  preferred_element_type=jnp.float32) + mp["b2"]
    return out, h


# ---------------- deterministic parameter init ----------------
def init_params(key):
    def nrm(k, shape, scale=0.1):
        return scale * jax.random.normal(k, shape, dtype=jnp.float32)

    layers = []
    din = IN_DIM + NUM_HIDDEN
    for _ in range(NUM_LAYERS):
        key, k0, k1, k2, k3, k4 = jax.random.split(key, 6)
        layers.append(dict(
            wsrc=nrm(k0, (din, NUM_HIDDEN)),
            bsrc=nrm(k1, (1, NUM_HIDDEN)),
            wdst=nrm(k2, (din, NUM_HIDDEN)),
            bdst=nrm(k3, (1, NUM_HIDDEN)),
            attn=nrm(k4, (NHEAD, HEAD_DIM), scale=0.5),
            gamma=jnp.ones((1, NUM_HIDDEN), jnp.float32),
            beta=jnp.zeros((1, NUM_HIDDEN), jnp.float32),
        ))
        din = NUM_HIDDEN
    key, k1, k2, k3, k4 = jax.random.split(key, 5)
    mlp = dict(
        w1=nrm(k1, (NUM_HIDDEN, NUM_HIDDEN)),
        b1=nrm(k2, (1, NUM_HIDDEN)),
        w2=nrm(k3, (NUM_HIDDEN, OUT_DIM)),
        b2=nrm(k4, (1, OUT_DIM)),
    )
    return dict(layers=layers, mlp=mlp)


# ---------------- main ----------------
if __name__ == "__main__":
    key = jax.random.PRNGKey(0)
    key, kp, kg, kx, kt = jax.random.split(key, 5)

    params = init_params(kp)

    # synthetic shared graph: random edges + self-loops (every node has in-degree >= 1)
    rand_edges = jax.random.bernoulli(kg, 0.3, (N_NODES, N_NODES)).astype(jnp.float32)
    adj = jnp.maximum(rand_edges, jnp.eye(N_NODES, dtype=jnp.float32))   # adj[v, u]

    x_t = jax.random.normal(kx, (BATCH, N_NODES, IN_DIM), dtype=jnp.float32)
    time_embed = jax.random.normal(kt, (BATCH, N_NODES, NUM_HIDDEN), dtype=jnp.float32)

    fwd_perf   = jax.jit(lambda p, a, x, t: denoising_unet_forward(p, a, x, t, jnp.bfloat16))
    fwd_strict = jax.jit(lambda p, a, x, t: denoising_unet_forward(p, a, x, t, jnp.float32))

    out_bf, h_bf = jax.block_until_ready(fwd_perf(params, adj, x_t, time_embed))
    out_f32, h_f32 = jax.block_until_ready(fwd_strict(params, adj, x_t, time_embed))

    # per-graph pure-JAX references (f32, and bf16-matmul-input variant matching the perf config)
    r32 = [reference_forward(params, adj, x_t[b], time_embed[b], jnp.float32) for b in range(BATCH)]
    r16 = [reference_forward(params, adj, x_t[b], time_embed[b], jnp.bfloat16) for b in range(BATCH)]
    out_ref32, h_ref32 = jnp.stack([r[0] for r in r32]), jnp.stack([r[1] for r in r32])
    out_ref16, h_ref16 = jnp.stack([r[0] for r in r16]), jnp.stack([r[1] for r in r16])

    assert out_f32.shape == (BATCH, N_NODES, OUT_DIM) and h_f32.shape == (BATCH, N_NODES, NUM_HIDDEN)
    assert out_bf.shape == out_f32.shape and h_bf.shape == h_f32.shape

    # strict check: f32-MXU kernel matches the f32 (PyTorch-semantics) reference tightly
    np.testing.assert_allclose(np.asarray(out_f32), np.asarray(out_ref32), rtol=5e-3, atol=5e-3)
    np.testing.assert_allclose(np.asarray(h_f32), np.asarray(h_ref32), rtol=5e-3, atol=5e-3)
    # perf config (bf16 MXU inputs + approx reciprocal) vs the matching bf16-matmul reference
    np.testing.assert_allclose(np.asarray(out_bf), np.asarray(out_ref16), rtol=2e-2, atol=2e-2)
    np.testing.assert_allclose(np.asarray(h_bf), np.asarray(h_ref16), rtol=2e-2, atol=2e-2)

    print("KERNEL_OK")
</pallas_src>

<mosaic_0001>
module attributes {stable_mosaic.version = 11 : i64} {
  func.func @kernel(%arg0: i32, %arg1: memref<16x128xf32, #tpu.memory_space<vmem>>, %arg2: memref<256x128xf32, #tpu.memory_space<vmem>>, %arg3: memref<16x128xf32, #tpu.memory_space<vmem>>, %arg4: memref<256x256xbf16, #tpu.memory_space<vmem>>, %arg5: memref<256x128xbf16, #tpu.memory_space<vmem>>, %arg6: memref<256x128xbf16, #tpu.memory_space<vmem>>, %arg7: memref<16x128xf32, #tpu.memory_space<vmem>>, %arg8: memref<16x128xf32, #tpu.memory_space<vmem>>) attributes {dimension_semantics = [#tpu.dimension_semantics<parallel>], iteration_bounds = array<i64: 8>, scalar_prefetch = 0 : i64, scratch_operands = 0 : i64, tpu.core_type = #tpu.core_type<tc>, window_params = [{transform_indices = @transform_0, window_bounds = array<i64: 16, 128>}, {pipeline_mode = #tpu.pipeline_mode<synchronous>, transform_indices = @transform_1, window_bounds = array<i64: 256, 128>}, {pipeline_mode = #tpu.pipeline_mode<synchronous>, transform_indices = @transform_2, window_bounds = array<i64: 16, 128>}, {pipeline_mode = #tpu.pipeline_mode<synchronous>, transform_indices = @transform_3, window_bounds = array<i64: 256, 256>}, {pipeline_mode = #tpu.pipeline_mode<synchronous>, transform_indices = @transform_4, window_bounds = array<i64: 256, 128>}, {pipeline_mode = #tpu.pipeline_mode<synchronous>, transform_indices = @transform_5, window_bounds = array<i64: 256, 128>}, {transform_indices = @transform_6, window_bounds = array<i64: 16, 128>}, {transform_indices = @transform_7, window_bounds = array<i64: 16, 128>}]} {
    %0 = tpu.iota {dimensions = array<i32: 1>} : vector<16x128xi32>
    %c32_i32 = arith.constant 32 : i32
    %1 = vector.broadcast %c32_i32 : i32 to vector<16x128xi32>
    %2 = arith.cmpi slt, %0, %1 : vector<16x128xi32>
    %3 = arith.extui %2 : vector<16x128xi1> to vector<16x128xi32>
    %4 = arith.sitofp %3 : vector<16x128xi32> to vector<16x128xf32>
    %c0 = arith.constant 0 : index
    %c0_0 = arith.constant 0 : index
    %5 = vector.load %arg1[%c0, %c0_0] : memref<16x128xf32, #tpu.memory_space<vmem>>, vector<16x128xf32>
    %c0_1 = arith.constant 0 : index
    %c0_2 = arith.constant 0 : index
    %6 = vector.load %arg3[%c0_1, %c0_2] : memref<16x128xf32, #tpu.memory_space<vmem>>, vector<1x128xf32>
    %c1 = arith.constant 1 : index
    %c0_3 = arith.constant 0 : index
    %7 = vector.load %arg3[%c1, %c0_3] : memref<16x128xf32, #tpu.memory_space<vmem>>, vector<1x128xf32>
    %c2 = arith.constant 2 : index
    %c0_4 = arith.constant 0 : index
    %8 = vector.load %arg3[%c2, %c0_4] : memref<16x128xf32, #tpu.memory_space<vmem>>, vector<1x128xf32>
    %c3 = arith.constant 3 : index
    %c0_5 = arith.constant 0 : index
    %9 = vector.load %arg3[%c3, %c0_5] : memref<16x128xf32, #tpu.memory_space<vmem>>, vector<1x128xf32>
    %10 = arith.truncf %5 : vector<16x128xf32> to vector<16x128xbf16>
    %c0_6 = arith.constant 0 : index
    %c0_7 = arith.constant 0 : index
    %11 = vector.load %arg4[%c0_6, %c0_7] : memref<256x256xbf16, #tpu.memory_space<vmem>>, vector<128x256xbf16>
    %cst = arith.constant dense<0.000000e+00> : vector<16x256xf32>
    %12 = tpu.matmul %10, %11, %cst {dimension_numbers = #tpu.dot_dimension_numbers<[1], [0], [0], [1], [0, 0, 1, 1], [], []>} : vector<16x128xbf16>, vector<128x256xbf16>, vector<16x256xf32> -> vector<16x256xf32>
    %13 = vector.extract_strided_slice %12 {offsets = [0, 0], sizes = [16, 128], strides = [1, 1]} : vector<16x256xf32> to vector<16x128xf32>
    %14 = vector.broadcast %6 : vector<1x128xf32> to vector<16x128xf32>
    %15 = arith.addf %13, %14 : vector<16x128xf32>
    %16 = vector.extract_strided_slice %12 {offsets = [0, 128], sizes = [16, 128], strides = [1, 1]} : vector<16x256xf32> to vector<16x128xf32>
    %17 = vector.broadcast %7 : vector<1x128xf32> to vector<16x128xf32>
    %18 = arith.addf %16, %17 : vector<16x128xf32>
    %19 = vector.shape_cast %15 : vector<16x128xf32> to vector<16x1x128xf32>
    %20 = vector.shape_cast %18 : vector<16x128xf32> to vector<1x16x128xf32>
    %21 = vector.broadcast %19 : vector<16x1x128xf32> to vector<16x16x128xf32>
    %22 = vector.broadcast %20 : vector<1x16x128xf32> to vector<16x16x128xf32>
    %23 = arith.addf %21, %22 : vector<16x16x128xf32>
    %cst_8 = arith.constant 0.000000e+00 : f32
    %24 = vector.broadcast %cst_8 : f32 to vector<16x16x128xf32>
    %25 = arith.cmpf oge, %23, %24 : vector<16x16x128xf32>
    %cst_9 = arith.constant 2.000000e-01 : f32
    %26 = vector.broadcast %cst_9 : f32 to vector<16x16x128xf32>
    %27 = arith.mulf %26, %23 : vector<16x16x128xf32>
    %28 = arith.select %25, %23, %27 : vector<16x16x128xi1>, vector<16x16x128xf32>
    %29 = vector.shape_cast %28 : vector<16x16x128xf32> to vector<256x128xf32>
    %30 = arith.truncf %29 : vector<256x128xf32> to vector<256x128xbf16>
    %c0_10 = arith.constant 0 : index
    %c0_11 = arith.constant 0 : index
    %31 = vector.load %arg5[%c0_10, %c0_11] : memref<256x128xbf16, #tpu.memory_space<vmem>>, vector<128x128xbf16>
    %cst_12 = arith.constant dense<0.000000e+00> : vector<256x128xf32>
    %32 = tpu.matmul %30, %31, %cst_12 {dimension_numbers = #tpu.dot_dimension_numbers<[1], [0], [0], [1], [0, 0, 1, 1], [], []>} : vector<256x128xbf16>, vector<128x128xbf16>, vector<256x128xf32> -> vector<256x128xf32>
    %c0_13 = arith.constant 0 : index
    %c0_14 = arith.constant 0 : index
    %33 = vector.load %arg2[%c0_13, %c0_14] : memref<256x128xf32, #tpu.memory_space<vmem>>, vector<256x128xf32>
    %cst_15 = arith.constant 1.000000e+00 : f32
    %34 = vector.broadcast %cst_15 : f32 to vector<256x128xf32>
    %35 = arith.subf %33, %34 : vector<256x128xf32>
    %cst_16 = arith.constant 1.000000e+30 : f32
    %36 = vector.broadcast %cst_16 : f32 to vector<256x128xf32>
    %37 = arith.mulf %35, %36 : vector<256x128xf32>
    %38 = arith.addf %32, %37 : vector<256x128xf32>
    %39 = vector.extract_strided_slice %38 {offsets = [0, 0], sizes = [16, 128], strides = [1, 1]} : vector<256x128xf32> to vector<16x128xf32>
    %40 = vector.extract_strided_slice %38 {offsets = [16, 0], sizes = [16, 128], strides = [1, 1]} : vector<256x128xf32> to vector<16x128xf32>
    %41 = arith.maximumf %39, %40 : vector<16x128xf32>
    %42 = vector.extract_strided_slice %38 {offsets = [32, 0], sizes = [16, 128], strides = [1, 1]} : vector<256x128xf32> to vector<16x128xf32>
    %43 = vector.extract_strided_slice %38 {offsets = [48, 0], sizes = [16, 128], strides = [1, 1]} : vector<256x128xf32> to vector<16x128xf32>
    %44 = arith.maximumf %42, %43 : vector<16x128xf32>
    %45 = vector.extract_strided_slice %38 {offsets = [64, 0], sizes = [16, 128], strides = [1, 1]} : vector<256x128xf32> to vector<16x128xf32>
    %46 = vector.extract_strided_slice %38 {offsets = [80, 0], sizes = [16, 128], strides = [1, 1]} : vector<256x128xf32> to vector<16x128xf32>
    %47 = arith.maximumf %45, %46 : vector<16x128xf32>
    %48 = vector.extract_strided_slice %38 {offsets = [96, 0], sizes = [16, 128], strides = [1, 1]} : vector<256x128xf32> to vector<16x128xf32>
    %49 = vector.extract_strided_slice %38 {offsets = [112, 0], sizes = [16, 128], strides = [1, 1]} : vector<256x128xf32> to vector<16x128xf32>
    %50 = arith.maximumf %48, %49 : vector<16x128xf32>
    %51 = vector.extract_strided_slice %38 {offsets = [128, 0], sizes = [16, 128], strides = [1, 1]} : vector<256x128xf32> to vector<16x128xf32>
    %52 = vector.extract_strided_slice %38 {offsets = [144, 0], sizes = [16, 128], strides = [1, 1]} : vector<256x128xf32> to vector<16x128xf32>
    %53 = arith.maximumf %51, %52 : vector<16x128xf32>
    %54 = vector.extract_strided_slice %38 {offsets = [160, 0], sizes = [16, 128], strides = [1, 1]} : vector<256x128xf32> to vector<16x128xf32>
    %55 = vector.extract_strided_slice %38 {offsets = [176, 0], sizes = [16, 128], strides = [1, 1]} : vector<256x128xf32> to vector<16x128xf32>
    %56 = arith.maximumf %54, %55 : vector<16x128xf32>
    %57 = vector.extract_strided_slice %38 {offsets = [192, 0], sizes = [16, 128], strides = [1, 1]} : vector<256x128xf32> to vector<16x128xf32>
    %58 = vector.extract_strided_slice %38 {offsets = [208, 0], sizes = [16, 128], strides = [1, 1]} : vector<256x128xf32> to vector<16x128xf32>
    %59 = arith.maximumf %57, %58 : vector<16x128xf32>
    %60 = vector.extract_strided_slice %38 {offsets = [224, 0], sizes = [16, 128], strides = [1, 1]} : vector<256x128xf32> to vector<16x128xf32>
    %61 = vector.extract_strided_slice %38 {offsets = [240, 0], sizes = [16, 128], strides = [1, 1]} : vector<256x128xf32> to vector<16x128xf32>
    %62 = arith.maximumf %60, %61 : vector<16x128xf32>
    %63 = arith.maximumf %41, %44 : vector<16x128xf32>
    %64 = arith.maximumf %47, %50 : vector<16x128xf32>
    %65 = arith.maximumf %53, %56 : vector<16x128xf32>
    %66 = arith.maximumf %59, %62 : vector<16x128xf32>
    %67 = arith.maximumf %63, %64 : vector<16x128xf32>
    %68 = arith.maximumf %65, %66 : vector<16x128xf32>
    %69 = arith.maximumf %67, %68 : vector<16x128xf32>
    %70 = vector.extract_strided_slice %38 {offsets = [0, 0], sizes = [16, 128], strides = [1, 1]} : vector<256x128xf32> to vector<16x128xf32>
    %71 = arith.subf %70, %69 : vector<16x128xf32>
    %72 = math.exp %71 : vector<16x128xf32>
    %c0_17 = arith.constant 0 : index
    %c0_18 = arith.constant 0 : index
    %73 = vector.load %arg2[%c0_17, %c0_18] : memref<256x128xf32, #tpu.memory_space<vmem>>, vector<16x128xf32>
    %74 = arith.mulf %72, %73 : vector<16x128xf32>
    %75 = vector.extract_strided_slice %15 {offsets = [0, 0], sizes = [1, 128], strides = [1, 1]} : vector<16x128xf32> to vector<1x128xf32>
    %76 = vector.broadcast %75 : vector<1x128xf32> to vector<16x128xf32>
    %77 = arith.mulf %74, %76 : vector<16x128xf32>
    %78 = vector.extract_strided_slice %38 {offsets = [16, 0], sizes = [16, 128], strides = [1, 1]} : vector<256x128xf32> to vector<16x128xf32>
    %79 = arith.subf %78, %69 : vector<16x128xf32>
    %80 = math.exp %79 : vector<16x128xf32>
    %c16 = arith.constant 16 : index
    %c0_19 = arith.constant 0 : index
    %81 = vector.load %arg2[%c16, %c0_19] : memref<256x128xf32, #tpu.memory_space<vmem>>, vector<16x128xf32>
    %82 = arith.mulf %80, %81 : vector<16x128xf32>
    %83 = vector.extract_strided_slice %15 {offsets = [1, 0], sizes = [1, 128], strides = [1, 1]} : vector<16x128xf32> to vector<1x128xf32>
    %84 = vector.broadcast %83 : vector<1x128xf32> to vector<16x128xf32>
    %85 = arith.mulf %82, %84 : vector<16x128xf32>
    %86 = vector.extract_strided_slice %38 {offsets = [32, 0], sizes = [16, 128], strides = [1, 1]} : vector<256x128xf32> to vector<16x128xf32>
    %87 = arith.subf %86, %69 : vector<16x128xf32>
    %88 = math.exp %87 : vector<16x128xf32>
    %c32 = arith.constant 32 : index
    %c0_20 = arith.constant 0 : index
    %89 = vector.load %arg2[%c32, %c0_20] : memref<256x128xf32, #tpu.memory_space<vmem>>, vector<16x128xf32>
    %90 = arith.mulf %88, %89 : vector<16x128xf32>
    %91 = vector.extract_strided_slice %15 {offsets = [2, 0], sizes = [1, 128], strides = [1, 1]} : vector<16x128xf32> to vector<1x128xf32>
    %92 = vector.broadcast %91 : vector<1x128xf32> to vector<16x128xf32>
    %93 = arith.mulf %90, %92 : vector<16x128xf32>
    %94 = vector.extract_strided_slice %38 {offsets = [48, 0], sizes = [16, 128], strides = [1, 1]} : vector<256x128xf32> to vector<16x128xf32>
    %95 = arith.subf %94, %69 : vector<16x128xf32>
    %96 = math.exp %95 : vector<16x128xf32>
    %c48 = arith.constant 48 : index
    %c0_21 = arith.constant 0 : index
    %97 = vector.load %arg2[%c48, %c0_21] : memref<256x128xf32, #tpu.memory_space<vmem>>, vector<16x128xf32>
    %98 = arith.mulf %96, %97 : vector<16x128xf32>
    %99 = vector.extract_strided_slice %15 {offsets = [3, 0], sizes = [1, 128], strides = [1, 1]} : vector<16x128xf32> to vector<1x128xf32>
    %100 = vector.broadcast %99 : vector<1x128xf32> to vector<16x128xf32>
    %101 = arith.mulf %98, %100 : vector<16x128xf32>
    %102 = vector.extract_strided_slice %38 {offsets = [64, 0], sizes = [16, 128], strides = [1, 1]} : vector<256x128xf32> to vector<16x128xf32>
    %103 = arith.subf %102, %69 : vector<16x128xf32>
    %104 = math.exp %103 : vector<16x128xf32>
    %c64 = arith.constant 64 : index
    %c0_22 = arith.constant 0 : index
    %105 = vector.load %arg2[%c64, %c0_22] : memref<256x128xf32, #tpu.memory_space<vmem>>, vector<16x128xf32>
    %106 = arith.mulf %104, %105 : vector<16x128xf32>
    %107 = vector.extract_strided_slice %15 {offsets = [4, 0], sizes = [1, 128], strides = [1, 1]} : vector<16x128xf32> to vector<1x128xf32>
    %108 = vector.broadcast %107 : vector<1x128xf32> to vector<16x128xf32>
    %109 = arith.mulf %106, %108 : vector<16x128xf32>
    %110 = arith.addf %74, %106 : vector<16x128xf32>
    %111 = arith.addf %77, %109 : vector<16x128xf32>
    %112 = vector.extract_strided_slice %38 {offsets = [80, 0], sizes = [16, 128], strides = [1, 1]} : vector<256x128xf32> to vector<16x128xf32>
    %113 = arith.subf %112, %69 : vector<16x128xf32>
    %114 = math.exp %113 : vector<16x128xf32>
    %c80 = arith.constant 80 : index
    %c0_23 = arith.constant 0 : index
    %115 = vector.load %arg2[%c80, %c0_23] : memref<256x128xf32, #tpu.memory_space<vmem>>, vector<16x128xf32>
    %116 = arith.mulf %114, %115 : vector<16x128xf32>
    %117 = vector.extract_strided_slice %15 {offsets = [5, 0], sizes = [1, 128], strides = [1, 1]} : vector<16x128xf32> to vector<1x128xf32>
    %118 = vector.broadcast %117 : vector<1x128xf32> to vector<16x128xf32>
    %119 = arith.mulf %116, %118 : vector<16x128xf32>
    %120 = arith.addf %82, %116 : vector<16x128xf32>
    %121 = arith.addf %85, %119 : vector<16x128xf32>
    %122 = vector.extract_strided_slice %38 {offsets = [96, 0], sizes = [16, 128], strides = [1, 1]} : vector<256x128xf32> to vector<16x128xf32>
    %123 = arith.subf %122, %69 : vector<16x128xf32>
    %124 = math.exp %123 : vector<16x128xf32>
    %c96 = arith.constant 96 : index
    %c0_24 = arith.constant 0 : index
    %125 = vector.load %arg2[%c96, %c0_24] : memref<256x128xf32, #tpu.memory_space<vmem>>, vector<16x128xf32>
    %126 = arith.mulf %124, %125 : vector<16x128xf32>
    %127 = vector.extract_strided_slice %15 {offsets = [6, 0], sizes = [1, 128], strides = [1, 1]} : vector<16x128xf32> to vector<1x128xf32>
    %128 = vector.broadcast %127 : vector<1x128xf32> to vector<16x128xf32>
    %129 = arith.mulf %126, %128 : vector<16x128xf32>
    %130 = arith.addf %90, %126 : vector<16x128xf32>
    %131 = arith.addf %93, %129 : vector<16x128xf32>
    %132 = vector.extract_strided_slice %38 {offsets = [112, 0], sizes = [16, 128], strides = [1, 1]} : vector<256x128xf32> to vector<16x128xf32>
    %133 = arith.subf %132, %69 : vector<16x128xf32>
    %134 = math.exp %133 : vector<16x128xf32>
    %c112 = arith.constant 112 : index
    %c0_25 = arith.constant 0 : index
    %135 = vector.load %arg2[%c112, %c0_25] : memref<256x128xf32, #tpu.memory_space<vmem>>, vector<16x128xf32>
    %136 = arith.mulf %134, %135 : vector<16x128xf32>
    %137 = vector.extract_strided_slice %15 {offsets = [7, 0], sizes = [1, 128], strides = [1, 1]} : vector<16x128xf32> to vector<1x128xf32>
    %138 = vector.broadcast %137 : vector<1x128xf32> to vector<16x128xf32>
    %139 = arith.mulf %136, %138 : vector<16x128xf32>
    %140 = arith.addf %98, %136 : vector<16x128xf32>
    %141 = arith.addf %101, %139 : vector<16x128xf32>
    %142 = vector.extract_strided_slice %38 {offsets = [128, 0], sizes = [16, 128], strides = [1, 1]} : vector<256x128xf32> to vector<16x128xf32>
    %143 = arith.subf %142, %69 : vector<16x128xf32>
    %144 = math.exp %143 : vector<16x128xf32>
    %c128 = arith.constant 128 : index
    %c0_26 = arith.constant 0 : index
    %145 = vector.load %arg2[%c128, %c0_26] : memref<256x128xf32, #tpu.memory_space<vmem>>, vector<16x128xf32>
    %146 = arith.mulf %144, %145 : vector<16x128xf32>
    %147 = vector.extract_strided_slice %15 {offsets = [8, 0], sizes = [1, 128], strides = [1, 1]} : vector<16x128xf32> to vector<1x128xf32>
    %148 = vector.broadcast %147 : vector<1x128xf32> to vector<16x128xf32>
    %149 = arith.mulf %146, %148 : vector<16x128xf32>
    %150 = arith.addf %110, %146 : vector<16x128xf32>
    %151 = arith.addf %111, %149 : vector<16x128xf32>
    %152 = vector.extract_strided_slice %38 {offsets = [144, 0], sizes = [16, 128], strides = [1, 1]} : vector<256x128xf32> to vector<16x128xf32>
    %153 = arith.subf %152, %69 : vector<16x128xf32>
    %154 = math.exp %153 : vector<16x128xf32>
    %c144 = arith.constant 144 : index
    %c0_27 = arith.constant 0 : index
    %155 = vector.load %arg2[%c144, %c0_27] : memref<256x128xf32, #tpu.memory_space<vmem>>, vector<16x128xf32>
    %156 = arith.mulf %154, %155 : vector<16x128xf32>
    %157 = vector.extract_strided_slice %15 {offsets = [9, 0], sizes = [1, 128], strides = [1, 1]} : vector<16x128xf32> to vector<1x128xf32>
    %158 = vector.broadcast %157 : vector<1x128xf32> to vector<16x128xf32>
    %159 = arith.mulf %156, %158 : vector<16x128xf32>
    %160 = arith.addf %120, %156 : vector<16x128xf32>
    %161 = arith.addf %121, %159 : vector<16x128xf32>
    %162 = vector.extract_strided_slice %38 {offsets = [160, 0], sizes = [16, 128], strides = [1, 1]} : vector<256x128xf32> to vector<16x128xf32>
    %163 = arith.subf %162, %69 : vector<16x128xf32>
    %164 = math.exp %163 : vector<16x128xf32>
    %c160 = arith.constant 160 : index
    %c0_28 = arith.constant 0 : index
    %165 = vector.load %arg2[%c160, %c0_28] : memref<256x128xf32, #tpu.memory_space<vmem>>, vector<16x128xf32>
    %166 = arith.mulf %164, %165 : vector<16x128xf32>
    %167 = vector.extract_strided_slice %15 {offsets = [10, 0], sizes = [1, 128], strides = [1, 1]} : vector<16x128xf32> to vector<1x128xf32>
    %168 = vector.broadcast %167 : vector<1x128xf32> to vector<16x128xf32>
    %169 = arith.mulf %166, %168 : vector<16x128xf32>
    %170 = arith.addf %130, %166 : vector<16x128xf32>
    %171 = arith.addf %131, %169 : vector<16x128xf32>
    %172 = vector.extract_strided_slice %38 {offsets = [176, 0], sizes = [16, 128], strides = [1, 1]} : vector<256x128xf32> to vector<16x128xf32>
    %173 = arith.subf %172, %69 : vector<16x128xf32>
    %174 = math.exp %173 : vector<16x128xf32>
    %c176 = arith.constant 176 : index
    %c0_29 = arith.constant 0 : index
    %175 = vector.load %arg2[%c176, %c0_29] : memref<256x128xf32, #tpu.memory_space<vmem>>, vector<16x128xf32>
    %176 = arith.mulf %174, %175 : vector<16x128xf32>
    %177 = vector.extract_strided_slice %15 {offsets = [11, 0], sizes = [1, 128], strides = [1, 1]} : vector<16x128xf32> to vector<1x128xf32>
    %178 = vector.broadcast %177 : vector<1x128xf32> to vector<16x128xf32>
    %179 = arith.mulf %176, %178 : vector<16x128xf32>
    %180 = arith.addf %140, %176 : vector<16x128xf32>
    %181 = arith.addf %141, %179 : vector<16x128xf32>
    %182 = vector.extract_strided_slice %38 {offsets = [192, 0], sizes = [16, 128], strides = [1, 1]} : vector<256x128xf32> to vector<16x128xf32>
    %183 = arith.subf %182, %69 : vector<16x128xf32>
    %184 = math.exp %183 : vector<16x128xf32>
    %c192 = arith.constant 192 : index
    %c0_30 = arith.constant 0 : index
    %185 = vector.load %arg2[%c192, %c0_30] : memref<256x128xf32, #tpu.memory_space<vmem>>, vector<16x128xf32>
    %186 = arith.mulf %184, %185 : vector<16x128xf32>
    %187 = vector.extract_strided_slice %15 {offsets = [12, 0], sizes = [1, 128], strides = [1, 1]} : vector<16x128xf32> to vector<1x128xf32>
    %188 = vector.broadcast %187 : vector<1x128xf32> to vector<16x128xf32>
    %189 = arith.mulf %186, %188 : vector<16x128xf32>
    %190 = arith.addf %150, %186 : vector<16x128xf32>
    %191 = arith.addf %151, %189 : vector<16x128xf32>
    %192 = vector.extract_strided_slice %38 {offsets = [208, 0], sizes = [16, 128], strides = [1, 1]} : vector<256x128xf32> to vector<16x128xf32>
    %193 = arith.subf %192, %69 : vector<16x128xf32>
    %194 = math.exp %193 : vector<16x128xf32>
    %c208 = arith.constant 208 : index
    %c0_31 = arith.constant 0 : index
    %195 = vector.load %arg2[%c208, %c0_31] : memref<256x128xf32, #tpu.memory_space<vmem>>, vector<16x128xf32>
    %196 = arith.mulf %194, %195 : vector<16x128xf32>
    %197 = vector.extract_strided_slice %15 {offsets = [13, 0], sizes = [1, 128], strides = [1, 1]} : vector<16x128xf32> to vector<1x128xf32>
    %198 = vector.broadcast %197 : vector<1x128xf32> to vector<16x128xf32>
    %199 = arith.mulf %196, %198 : vector<16x128xf32>
    %200 = arith.addf %160, %196 : vector<16x128xf32>
    %201 = arith.addf %161, %199 : vector<16x128xf32>
    %202 = vector.extract_strided_slice %38 {offsets = [224, 0], sizes = [16, 128], strides = [1, 1]} : vector<256x128xf32> to vector<16x128xf32>
    %203 = arith.subf %202, %69 : vector<16x128xf32>
    %204 = math.exp %203 : vector<16x128xf32>
    %c224 = arith.constant 224 : index
    %c0_32 = arith.constant 0 : index
    %205 = vector.load %arg2[%c224, %c0_32] : memref<256x128xf32, #tpu.memory_space<vmem>>, vector<16x128xf32>
    %206 = arith.mulf %204, %205 : vector<16x128xf32>
    %207 = vector.extract_strided_slice %15 {offsets = [14, 0], sizes = [1, 128], strides = [1, 1]} : vector<16x128xf32> to vector<1x128xf32>
    %208 = vector.broadcast %207 : vector<1x128xf32> to vector<16x128xf32>
    %209 = arith.mulf %206, %208 : vector<16x128xf32>
    %210 = arith.addf %170, %206 : vector<16x128xf32>
    %211 = arith.addf %171, %209 : vector<16x128xf32>
    %212 = vector.extract_strided_slice %38 {offsets = [240, 0], sizes = [16, 128], strides = [1, 1]} : vector<256x128xf32> to vector<16x128xf32>
    %213 = arith.subf %212, %69 : vector<16x128xf32>
    %214 = math.exp %213 : vector<16x128xf32>
    %c240 = arith.constant 240 : index
    %c0_33 = arith.constant 0 : index
    %215 = vector.load %arg2[%c240, %c0_33] : memref<256x128xf32, #tpu.memory_space<vmem>>, vector<16x128xf32>
    %216 = arith.mulf %214, %215 : vector<16x128xf32>
    %217 = vector.extract_strided_slice %15 {offsets = [15, 0], sizes = [1, 128], strides = [1, 1]} : vector<16x128xf32> to vector<1x128xf32>
    %218 = vector.broadcast %217 : vector<1x128xf32> to vector<16x128xf32>
    %219 = arith.mulf %216, %218 : vector<16x128xf32>
    %220 = arith.addf %180, %216 : vector<16x128xf32>
    %221 = arith.addf %181, %219 : vector<16x128xf32>
    %222 = arith.addf %190, %200 : vector<16x128xf32>
    %223 = arith.addf %210, %220 : vector<16x128xf32>
    %224 = arith.addf %222, %223 : vector<16x128xf32>
    %225 = arith.addf %191, %201 : vector<16x128xf32>
    %226 = arith.addf %211, %221 : vector<16x128xf32>
    %227 = arith.addf %225, %226 : vector<16x128xf32>
    %cst_34 = arith.constant 1.000000e-30 : f32
    %228 = vector.broadcast %cst_34 : f32 to vector<16x128xf32>
    %229 = arith.maximumf %224, %228 : vector<16x128xf32>
    %230 = tpu.reciprocal %229 {approx = true} : vector<16x128xf32> -> vector<16x128xf32>
    %231 = arith.mulf %227, %230 : vector<16x128xf32>
    %cst_35 = arith.constant 0.000000e+00 : f32
    %232 = vector.broadcast %cst_35 : f32 to vector<16x128xf32>
    %233 = arith.maximumf %231, %232 : vector<16x128xf32>
    %cst_36 = arith.constant dense<0.000000e+00> : vector<16xf32>
    %234 = vector.multi_reduction <add>, %233, %cst_36 [1] : vector<16x128xf32> to vector<16xf32>
    %235 = vector.shape_cast %234 : vector<16xf32> to vector<16x1xf32>
    %cst_37 = arith.constant 3.125000e-02 : f32
    %236 = vector.broadcast %cst_37 : f32 to vector<16x1xf32>
    %237 = arith.mulf %235, %236 : vector<16x1xf32>
    %238 = vector.broadcast %237 : vector<16x1xf32> to vector<16x128xf32>
    %239 = arith.subf %233, %238 : vector<16x128xf32>
    %240 = arith.mulf %239, %4 : vector<16x128xf32>
    %241 = arith.mulf %240, %240 : vector<16x128xf32>
    %cst_38 = arith.constant dense<0.000000e+00> : vector<16xf32>
    %242 = vector.multi_reduction <add>, %241, %cst_38 [1] : vector<16x128xf32> to vector<16xf32>
    %243 = vector.shape_cast %242 : vector<16xf32> to vector<16x1xf32>
    %cst_39 = arith.constant 3.125000e-02 : f32
    %244 = vector.broadcast %cst_39 : f32 to vector<16x1xf32>
    %245 = arith.mulf %243, %244 : vector<16x1xf32>
    %cst_40 = arith.constant 9.99999974E-6 : f32
    %246 = vector.broadcast %cst_40 : f32 to vector<16x1xf32>
    %247 = arith.addf %245, %246 : vector<16x1xf32>
    %248 = math.rsqrt %247 : vector<16x1xf32>
    %249 = vector.broadcast %248 : vector<16x1xf32> to vector<16x128xf32>
    %250 = arith.mulf %240, %249 : vector<16x128xf32>
    %251 = vector.broadcast %8 : vector<1x128xf32> to vector<16x128xf32>
    %252 = arith.mulf %250, %251 : vector<16x128xf32>
    %253 = vector.broadcast %9 : vector<1x128xf32> to vector<16x128xf32>
    %254 = arith.addf %252, %253 : vector<16x128xf32>
    %c4 = arith.constant 4 : index
    %c0_41 = arith.constant 0 : index
    %255 = vector.load %arg3[%c4, %c0_41] : memref<16x128xf32, #tpu.memory_space<vmem>>, vector<1x128xf32>
    %c5 = arith.constant 5 : index
    %c0_42 = arith.constant 0 : index
    %256 = vector.load %arg3[%c5, %c0_42] : memref<16x128xf32, #tpu.memory_space<vmem>>, vector<1x128xf32>
    %c6 = arith.constant 6 : index
    %c0_43 = arith.constant 0 : index
    %257 = vector.load %arg3[%c6, %c0_43] : memref<16x128xf32, #tpu.memory_space<vmem>>, vector<1x128xf32>
    %c7 = arith.constant 7 : index
    %c0_44 = arith.constant 0 : index
    %258 = vector.load %arg3[%c7, %c0_44] : memref<16x128xf32, #tpu.memory_space<vmem>>, vector<1x128xf32>
    %259 = arith.truncf %254 : vector<16x128xf32> to vector<16x128xbf16>
    %c128_45 = arith.constant 128 : index
    %c0_46 = arith.constant 0 : index
    %260 = vector.load %arg4[%c128_45, %c0_46] : memref<256x256xbf16, #tpu.memory_space<vmem>>, vector<128x256xbf16>
    %cst_47 = arith.constant dense<0.000000e+00> : vector<16x256xf32>
    %261 = tpu.matmul %259, %260, %cst_47 {dimension_numbers = #tpu.dot_dimension_numbers<[1], [0], [0], [1], [0, 0, 1, 1], [], []>} : vector<16x128xbf16>, vector<128x256xbf16>, vector<16x256xf32> -> vector<16x256xf32>
    %262 = vector.extract_strided_slice %261 {offsets = [0, 0], sizes = [16, 128], strides = [1, 1]} : vector<16x256xf32> to vector<16x128xf32>
    %263 = vector.broadcast %255 : vector<1x128xf32> to vector<16x128xf32>
    %264 = arith.addf %262, %263 : vector<16x128xf32>
    %265 = vector.extract_strided_slice %261 {offsets = [0, 128], sizes = [16, 128], strides = [1, 1]} : vector<16x256xf32> to vector<16x128xf32>
    %266 = vector.broadcast %256 : vector<1x128xf32> to vector<16x128xf32>
    %267 = arith.addf %265, %266 : vector<16x128xf32>
    %268 = vector.shape_cast %264 : vector<16x128xf32> to vector<16x1x128xf32>
    %269 = vector.shape_cast %267 : vector<16x128xf32> to vector<1x16x128xf32>
    %270 = vector.broadcast %268 : vector<16x1x128xf32> to vector<16x16x128xf32>
    %271 = vector.broadcast %269 : vector<1x16x128xf32> to vector<16x16x128xf32>
    %272 = arith.addf %270, %271 : vector<16x16x128xf32>
    %cst_48 = arith.constant 0.000000e+00 : f32
    %273 = vector.broadcast %cst_48 : f32 to vector<16x16x128xf32>
    %274 = arith.cmpf oge, %272, %273 : vector<16x16x128xf32>
    %cst_49 = arith.constant 2.000000e-01 : f32
    %275 = vector.broadcast %cst_49 : f32 to vector<16x16x128xf32>
    %276 = arith.mulf %275, %272 : vector<16x16x128xf32>
    %277 = arith.select %274, %272, %276 : vector<16x16x128xi1>, vector<16x16x128xf32>
    %278 = vector.shape_cast %277 : vector<16x16x128xf32> to vector<256x128xf32>
    %279 = arith.truncf %278 : vector<256x128xf32> to vector<256x128xbf16>
    %c128_50 = arith.constant 128 : index
    %c0_51 = arith.constant 0 : index
    %280 = vector.load %arg5[%c128_50, %c0_51] : memref<256x128xbf16, #tpu.memory_space<vmem>>, vector<128x128xbf16>
    %cst_52 = arith.constant dense<0.000000e+00> : vector<256x128xf32>
    %281 = tpu.matmul %279, %280, %cst_52 {dimension_numbers = #tpu.dot_dimension_numbers<[1], [0], [0], [1], [0, 0, 1, 1], [], []>} : vector<256x128xbf16>, vector<128x128xbf16>, vector<256x128xf32> -> vector<256x128xf32>
    %c0_53 = arith.constant 0 : index
    %c0_54 = arith.constant 0 : index
    %282 = vector.load %arg2[%c0_53, %c0_54] : memref<256x128xf32, #tpu.memory_space<vmem>>, vector<256x128xf32>
    %cst_55 = arith.constant 1.000000e+00 : f32
    %283 = vector.broadcast %cst_55 : f32 to vector<256x128xf32>
    %284 = arith.subf %282, %283 : vector<256x128xf32>
    %cst_56 = arith.constant 1.000000e+30 : f32
    %285 = vector.broadcast %cst_56 : f32 to vector<256x128xf32>
    %286 = arith.mulf %284, %285 : vector<256x128xf32>
    %287 = arith.addf %281, %286 : vector<256x128xf32>
    %288 = vector.extract_strided_slice %287 {offsets = [0, 0], sizes = [16, 128], strides = [1, 1]} : vector<256x128xf32> to vector<16x128xf32>
    %289 = vector.extract_strided_slice %287 {offsets = [16, 0], sizes = [16, 128], strides = [1, 1]} : vector<256x128xf32> to vector<16x128xf32>
    %290 = arith.maximumf %288, %289 : vector<16x128xf32>
    %291 = vector.extract_strided_slice %287 {offsets = [32, 0], sizes = [16, 128], strides = [1, 1]} : vector<256x128xf32> to vector<16x128xf32>
    %292 = vector.extract_strided_slice %287 {offsets = [48, 0], sizes = [16, 128], strides = [1, 1]} : vector<256x128xf32> to vector<16x128xf32>
    %293 = arith.maximumf %291, %292 : vector<16x128xf32>
    %294 = vector.extract_strided_slice %287 {offsets = [64, 0], sizes = [16, 128], strides = [1, 1]} : vector<256x128xf32> to vector<16x128xf32>
    %295 = vector.extract_strided_slice %287 {offsets = [80, 0], sizes = [16, 128], strides = [1, 1]} : vector<256x128xf32> to vector<16x128xf32>
    %296 = arith.maximumf %294, %295 : vector<16x128xf32>
    %297 = vector.extract_strided_slice %287 {offsets = [96, 0], sizes = [16, 128], strides = [1, 1]} : vector<256x128xf32> to vector<16x128xf32>
    %298 = vector.extract_strided_slice %287 {offsets = [112, 0], sizes = [16, 128], strides = [1, 1]} : vector<256x128xf32> to vector<16x128xf32>
    %299 = arith.maximumf %297, %298 : vector<16x128xf32>
    %300 = vector.extract_strided_slice %287 {offsets = [128, 0], sizes = [16, 128], strides = [1, 1]} : vector<256x128xf32> to vector<16x128xf32>
    %301 = vector.extract_strided_slice %287 {offsets = [144, 0], sizes = [16, 128], strides = [1, 1]} : vector<256x128xf32> to vector<16x128xf32>
    %302 = arith.maximumf %300, %301 : vector<16x128xf32>
    %303 = vector.extract_strided_slice %287 {offsets = [160, 0], sizes = [16, 128], strides = [1, 1]} : vector<256x128xf32> to vector<16x128xf32>
    %304 = vector.extract_strided_slice %287 {offsets = [176, 0], sizes = [16, 128], strides = [1, 1]} : vector<256x128xf32> to vector<16x128xf32>
    %305 = arith.maximumf %303, %304 : vector<16x128xf32>
    %306 = vector.extract_strided_slice %287 {offsets = [192, 0], sizes = [16, 128], strides = [1, 1]} : vector<256x128xf32> to vector<16x128xf32>
    %307 = vector.extract_strided_slice %287 {offsets = [208, 0], sizes = [16, 128], strides = [1, 1]} : vector<256x128xf32> to vector<16x128xf32>
    %308 = arith.maximumf %306, %307 : vector<16x128xf32>
    %309 = vector.extract_strided_slice %287 {offsets = [224, 0], sizes = [16, 128], strides = [1, 1]} : vector<256x128xf32> to vector<16x128xf32>
    %310 = vector.extract_strided_slice %287 {offsets = [240, 0], sizes = [16, 128], strides = [1, 1]} : vector<256x128xf32> to vector<16x128xf32>
    %311 = arith.maximumf %309, %310 : vector<16x128xf32>
    %312 = arith.maximumf %290, %293 : vector<16x128xf32>
    %313 = arith.maximumf %296, %299 : vector<16x128xf32>
    %314 = arith.maximumf %302, %305 : vector<16x128xf32>
    %315 = arith.maximumf %308, %311 : vector<16x128xf32>
    %316 = arith.maximumf %312, %313 : vector<16x128xf32>
    %317 = arith.maximumf %314, %315 : vector<16x128xf32>
    %318 = arith.maximumf %316, %317 : vector<16x128xf32>
    %319 = vector.extract_strided_slice %287 {offsets = [0, 0], sizes = [16, 128], strides = [1, 1]} : vector<256x128xf32> to vector<16x128xf32>
    %320 = arith.subf %319, %318 : vector<16x128xf32>
    %321 = math.exp %320 : vector<16x128xf32>
    %c0_57 = arith.constant 0 : index
    %c0_58 = arith.constant 0 : index
    %322 = vector.load %arg2[%c0_57, %c0_58] : memref<256x128xf32, #tpu.memory_space<vmem>>, vector<16x128xf32>
    %323 = arith.mulf %321, %322 : vector<16x128xf32>
    %324 = vector.extract_strided_slice %264 {offsets = [0, 0], sizes = [1, 128], strides = [1, 1]} : vector<16x128xf32> to vector<1x128xf32>
    %325 = vector.broadcast %324 : vector<1x128xf32> to vector<16x128xf32>
    %326 = arith.mulf %323, %325 : vector<16x128xf32>
    %327 = vector.extract_strided_slice %287 {offsets = [16, 0], sizes = [16, 128], strides = [1, 1]} : vector<256x128xf32> to vector<16x128xf32>
    %328 = arith.subf %327, %318 : vector<16x128xf32>
    %329 = math.exp %328 : vector<16x128xf32>
    %c16_59 = arith.constant 16 : index
    %c0_60 = arith.constant 0 : index
    %330 = vector.load %arg2[%c16_59, %c0_60] : memref<256x128xf32, #tpu.memory_space<vmem>>, vector<16x128xf32>
    %331 = arith.mulf %329, %330 : vector<16x128xf32>
    %332 = vector.extract_strided_slice %264 {offsets = [1, 0], sizes = [1, 128], strides = [1, 1]} : vector<16x128xf32> to vector<1x128xf32>
    %333 = vector.broadcast %332 : vector<1x128xf32> to vector<16x128xf32>
    %334 = arith.mulf %331, %333 : vector<16x128xf32>
    %335 = vector.extract_strided_slice %287 {offsets = [32, 0], sizes = [16, 128], strides = [1, 1]} : vector<256x128xf32> to vector<16x128xf32>
    %336 = arith.subf %335, %318 : vector<16x128xf32>
    %337 = math.exp %336 : vector<16x128xf32>
    %c32_61 = arith.constant 32 : index
    %c0_62 = arith.constant 0 : index
    %338 = vector.load %arg2[%c32_61, %c0_62] : memref<256x128xf32, #tpu.memory_space<vmem>>, vector<16x128xf32>
    %339 = arith.mulf %337, %338 : vector<16x128xf32>
    %340 = vector.extract_strided_slice %264 {offsets = [2, 0], sizes = [1, 128], strides = [1, 1]} : vector<16x128xf32> to vector<1x128xf32>
    %341 = vector.broadcast %340 : vector<1x128xf32> to vector<16x128xf32>
    %342 = arith.mulf %339, %341 : vector<16x128xf32>
    %343 = vector.extract_strided_slice %287 {offsets = [48, 0], sizes = [16, 128], strides = [1, 1]} : vector<256x128xf32> to vector<16x128xf32>
    %344 = arith.subf %343, %318 : vector<16x128xf32>
    %345 = math.exp %344 : vector<16x128xf32>
    %c48_63 = arith.constant 48 : index
    %c0_64 = arith.constant 0 : index
    %346 = vector.load %arg2[%c48_63, %c0_64] : memref<256x128xf32, #tpu.memory_space<vmem>>, vector<16x128xf32>
    %347 = arith.mulf %345, %346 : vector<16x128xf32>
    %348 = vector.extract_strided_slice %264 {offsets = [3, 0], sizes = [1, 128], strides = [1, 1]} : vector<16x128xf32> to vector<1x128xf32>
    %349 = vector.broadcast %348 : vector<1x128xf32> to vector<16x128xf32>
    %350 = arith.mulf %347, %349 : vector<16x128xf32>
    %351 = vector.extract_strided_slice %287 {offsets = [64, 0], sizes = [16, 128], strides = [1, 1]} : vector<256x128xf32> to vector<16x128xf32>
    %352 = arith.subf %351, %318 : vector<16x128xf32>
    %353 = math.exp %352 : vector<16x128xf32>
    %c64_65 = arith.constant 64 : index
    %c0_66 = arith.constant 0 : index
    %354 = vector.load %arg2[%c64_65, %c0_66] : memref<256x128xf32, #tpu.memory_space<vmem>>, vector<16x128xf32>
    %355 = arith.mulf %353, %354 : vector<16x128xf32>
    %356 = vector.extract_strided_slice %264 {offsets = [4, 0], sizes = [1, 128], strides = [1, 1]} : vector<16x128xf32> to vector<1x128xf32>
    %357 = vector.broadcast %356 : vector<1x128xf32> to vector<16x128xf32>
    %358 = arith.mulf %355, %357 : vector<16x128xf32>
    %359 = arith.addf %323, %355 : vector<16x128xf32>
    %360 = arith.addf %326, %358 : vector<16x128xf32>
    %361 = vector.extract_strided_slice %287 {offsets = [80, 0], sizes = [16, 128], strides = [1, 1]} : vector<256x128xf32> to vector<16x128xf32>
    %362 = arith.subf %361, %318 : vector<16x128xf32>
    %363 = math.exp %362 : vector<16x128xf32>
    %c80_67 = arith.constant 80 : index
    %c0_68 = arith.constant 0 : index
    %364 = vector.load %arg2[%c80_67, %c0_68] : memref<256x128xf32, #tpu.memory_space<vmem>>, vector<16x128xf32>
    %365 = arith.mulf %363, %364 : vector<16x128xf32>
    %366 = vector.extract_strided_slice %264 {offsets = [5, 0], sizes = [1, 128], strides = [1, 1]} : vector<16x128xf32> to vector<1x128xf32>
    %367 = vector.broadcast %366 : vector<1x128xf32> to vector<16x128xf32>
    %368 = arith.mulf %365, %367 : vector<16x128xf32>
    %369 = arith.addf %331, %365 : vector<16x128xf32>
    %370 = arith.addf %334, %368 : vector<16x128xf32>
    %371 = vector.extract_strided_slice %287 {offsets = [96, 0], sizes = [16, 128], strides = [1, 1]} : vector<256x128xf32> to vector<16x128xf32>
    %372 = arith.subf %371, %318 : vector<16x128xf32>
    %373 = math.exp %372 : vector<16x128xf32>
    %c96_69 = arith.constant 96 : index
    %c0_70 = arith.constant 0 : index
    %374 = vector.load %arg2[%c96_69, %c0_70] : memref<256x128xf32, #tpu.memory_space<vmem>>, vector<16x128xf32>
    %375 = arith.mulf %373, %374 : vector<16x128xf32>
    %376 = vector.extract_strided_slice %264 {offsets = [6, 0], sizes = [1, 128], strides = [1, 1]} : vector<16x128xf32> to vector<1x128xf32>
    %377 = vector.broadcast %376 : vector<1x128xf32> to vector<16x128xf32>
    %378 = arith.mulf %375, %377 : vector<16x128xf32>
    %379 = arith.addf %339, %375 : vector<16x128xf32>
    %380 = arith.addf %342, %378 : vector<16x128xf32>
    %381 = vector.extract_strided_slice %287 {offsets = [112, 0], sizes = [16, 128], strides = [1, 1]} : vector<256x128xf32> to vector<16x128xf32>
    %382 = arith.subf %381, %318 : vector<16x128xf32>
    %383 = math.exp %382 : vector<16x128xf32>
    %c112_71 = arith.constant 112 : index
    %c0_72 = arith.constant 0 : index
    %384 = vector.load %arg2[%c112_71, %c0_72] : memref<256x128xf32, #tpu.memory_space<vmem>>, vector<16x128xf32>
    %385 = arith.mulf %383, %384 : vector<16x128xf32>
    %386 = vector.extract_strided_slice %264 {offsets = [7, 0], sizes = [1, 128], strides = [1, 1]} : vector<16x128xf32> to vector<1x128xf32>
    %387 = vector.broadcast %386 : vector<1x128xf32> to vector<16x128xf32>
    %388 = arith.mulf %385, %387 : vector<16x128xf32>
    %389 = arith.addf %347, %385 : vector<16x128xf32>
    %390 = arith.addf %350, %388 : vector<16x128xf32>
    %391 = vector.extract_strided_slice %287 {offsets = [128, 0], sizes = [16, 128], strides = [1, 1]} : vector<256x128xf32> to vector<16x128xf32>
    %392 = arith.subf %391, %318 : vector<16x128xf32>
    %393 = math.exp %392 : vector<16x128xf32>
    %c128_73 = arith.constant 128 : index
    %c0_74 = arith.constant 0 : index
    %394 = vector.load %arg2[%c128_73, %c0_74] : memref<256x128xf32, #tpu.memory_space<vmem>>, vector<16x128xf32>
    %395 = arith.mulf %393, %394 : vector<16x128xf32>
    %396 = vector.extract_strided_slice %264 {offsets = [8, 0], sizes = [1, 128], strides = [1, 1]} : vector<16x128xf32> to vector<1x128xf32>
    %397 = vector.broadcast %396 : vector<1x128xf32> to vector<16x128xf32>
    %398 = arith.mulf %395, %397 : vector<16x128xf32>
    %399 = arith.addf %359, %395 : vector<16x128xf32>
    %400 = arith.addf %360, %398 : vector<16x128xf32>
    %401 = vector.extract_strided_slice %287 {offsets = [144, 0], sizes = [16, 128], strides = [1, 1]} : vector<256x128xf32> to vector<16x128xf32>
    %402 = arith.subf %401, %318 : vector<16x128xf32>
    %403 = math.exp %402 : vector<16x128xf32>
    %c144_75 = arith.constant 144 : index
    %c0_76 = arith.constant 0 : index
    %404 = vector.load %arg2[%c144_75, %c0_76] : memref<256x128xf32, #tpu.memory_space<vmem>>, vector<16x128xf32>
    %405 = arith.mulf %403, %404 : vector<16x128xf32>
    %406 = vector.extract_strided_slice %264 {offsets = [9, 0], sizes = [1, 128], strides = [1, 1]} : vector<16x128xf32> to vector<1x128xf32>
    %407 = vector.broadcast %406 : vector<1x128xf32> to vector<16x128xf32>
    %408 = arith.mulf %405, %407 : vector<16x128xf32>
    %409 = arith.addf %369, %405 : vector<16x128xf32>
    %410 = arith.addf %370, %408 : vector<16x128xf32>
    %411 = vector.extract_strided_slice %287 {offsets = [160, 0], sizes = [16, 128], strides = [1, 1]} : vector<256x128xf32> to vector<16x128xf32>
    %412 = arith.subf %411, %318 : vector<16x128xf32>
    %413 = math.exp %412 : vector<16x128xf32>
    %c160_77 = arith.constant 160 : index
    %c0_78 = arith.constant 0 : index
    %414 = vector.load %arg2[%c160_77, %c0_78] : memref<256x128xf32, #tpu.memory_space<vmem>>, vector<16x128xf32>
    %415 = arith.mulf %413, %414 : vector<16x128xf32>
    %416 = vector.extract_strided_slice %264 {offsets = [10, 0], sizes = [1, 128], strides = [1, 1]} : vector<16x128xf32> to vector<1x128xf32>
    %417 = vector.broadcast %416 : vector<1x128xf32> to vector<16x128xf32>
    %418 = arith.mulf %415, %417 : vector<16x128xf32>
    %419 = arith.addf %379, %415 : vector<16x128xf32>
    %420 = arith.addf %380, %418 : vector<16x128xf32>
    %421 = vector.extract_strided_slice %287 {offsets = [176, 0], sizes = [16, 128], strides = [1, 1]} : vector<256x128xf32> to vector<16x128xf32>
    %422 = arith.subf %421, %318 : vector<16x128xf32>
    %423 = math.exp %422 : vector<16x128xf32>
    %c176_79 = arith.constant 176 : index
    %c0_80 = arith.constant 0 : index
    %424 = vector.load %arg2[%c176_79, %c0_80] : memref<256x128xf32, #tpu.memory_space<vmem>>, vector<16x128xf32>
    %425 = arith.mulf %423, %424 : vector<16x128xf32>
    %426 = vector.extract_strided_slice %264 {offsets = [11, 0], sizes = [1, 128], strides = [1, 1]} : vector<16x128xf32> to vector<1x128xf32>
    %427 = vector.broadcast %426 : vector<1x128xf32> to vector<16x128xf32>
    %428 = arith.mulf %425, %427 : vector<16x128xf32>
    %429 = arith.addf %389, %425 : vector<16x128xf32>
    %430 = arith.addf %390, %428 : vector<16x128xf32>
    %431 = vector.extract_strided_slice %287 {offsets = [192, 0], sizes = [16, 128], strides = [1, 1]} : vector<256x128xf32> to vector<16x128xf32>
    %432 = arith.subf %431, %318 : vector<16x128xf32>
    %433 = math.exp %432 : vector<16x128xf32>
    %c192_81 = arith.constant 192 : index
    %c0_82 = arith.constant 0 : index
    %434 = vector.load %arg2[%c192_81, %c0_82] : memref<256x128xf32, #tpu.memory_space<vmem>>, vector<16x128xf32>
    %435 = arith.mulf %433, %434 : vector<16x128xf32>
    %436 = vector.extract_strided_slice %264 {offsets = [12, 0], sizes = [1, 128], strides = [1, 1]} : vector<16x128xf32> to vector<1x128xf32>
    %437 = vector.broadcast %436 : vector<1x128xf32> to vector<16x128xf32>
    %438 = arith.mulf %435, %437 : vector<16x128xf32>
    %439 = arith.addf %399, %435 : vector<16x128xf32>
    %440 = arith.addf %400, %438 : vector<16x128xf32>
    %441 = vector.extract_strided_slice %287 {offsets = [208, 0], sizes = [16, 128], strides = [1, 1]} : vector<256x128xf32> to vector<16x128xf32>
    %442 = arith.subf %441, %318 : vector<16x128xf32>
    %443 = math.exp %442 : vector<16x128xf32>
    %c208_83 = arith.constant 208 : index
    %c0_84 = arith.constant 0 : index
    %444 = vector.load %arg2[%c208_83, %c0_84] : memref<256x128xf32, #tpu.memory_space<vmem>>, vector<16x128xf32>
    %445 = arith.mulf %443, %444 : vector<16x128xf32>
    %446 = vector.extract_strided_slice %264 {offsets = [13, 0], sizes = [1, 128], strides = [1, 1]} : vector<16x128xf32> to vector<1x128xf32>
    %447 = vector.broadcast %446 : vector<1x128xf32> to vector<16x128xf32>
    %448 = arith.mulf %445, %447 : vector<16x128xf32>
    %449 = arith.addf %409, %445 : vector<16x128xf32>
    %450 = arith.addf %410, %448 : vector<16x128xf32>
    %451 = vector.extract_strided_slice %287 {offsets = [224, 0], sizes = [16, 128], strides = [1, 1]} : vector<256x128xf32> to vector<16x128xf32>
    %452 = arith.subf %451, %318 : vector<16x128xf32>
    %453 = math.exp %452 : vector<16x128xf32>
    %c224_85 = arith.constant 224 : index
    %c0_86 = arith.constant 0 : index
    %454 = vector.load %arg2[%c224_85, %c0_86] : memref<256x128xf32, #tpu.memory_space<vmem>>, vector<16x128xf32>
    %455 = arith.mulf %453, %454 : vector<16x128xf32>
    %456 = vector.extract_strided_slice %264 {offsets = [14, 0], sizes = [1, 128], strides = [1, 1]} : vector<16x128xf32> to vector<1x128xf32>
    %457 = vector.broadcast %456 : vector<1x128xf32> to vector<16x128xf32>
    %458 = arith.mulf %455, %457 : vector<16x128xf32>
    %459 = arith.addf %419, %455 : vector<16x128xf32>
    %460 = arith.addf %420, %458 : vector<16x128xf32>
    %461 = vector.extract_strided_slice %287 {offsets = [240, 0], sizes = [16, 128], strides = [1, 1]} : vector<256x128xf32> to vector<16x128xf32>
    %462 = arith.subf %461, %318 : vector<16x128xf32>
    %463 = math.exp %462 : vector<16x128xf32>
    %c240_87 = arith.constant 240 : index
    %c0_88 = arith.constant 0 : index
    %464 = vector.load %arg2[%c240_87, %c0_88] : memref<256x128xf32, #tpu.memory_space<vmem>>, vector<16x128xf32>
    %465 = arith.mulf %463, %464 : vector<16x128xf32>
    %466 = vector.extract_strided_slice %264 {offsets = [15, 0], sizes = [1, 128], strides = [1, 1]} : vector<16x128xf32> to vector<1x128xf32>
    %467 = vector.broadcast %466 : vector<1x128xf32> to vector<16x128xf32>
    %468 = arith.mulf %465, %467 : vector<16x128xf32>
    %469 = arith.addf %429, %465 : vector<16x128xf32>
    %470 = arith.addf %430, %468 : vector<16x128xf32>
    %471 = arith.addf %439, %449 : vector<16x128xf32>
    %472 = arith.addf %459, %469 : vector<16x128xf32>
    %473 = arith.addf %471, %472 : vector<16x128xf32>
    %474 = arith.addf %440, %450 : vector<16x128xf32>
    %475 = arith.addf %460, %470 : vector<16x128xf32>
    %476 = arith.addf %474, %475 : vector<16x128xf32>
    %cst_89 = arith.constant 1.000000e-30 : f32
    %477 = vector.broadcast %cst_89 : f32 to vector<16x128xf32>
    %478 = arith.maximumf %473, %477 : vector<16x128xf32>
    %479 = tpu.reciprocal %478 {approx = true} : vector<16x128xf32> -> vector<16x128xf32>
    %480 = arith.mulf %476, %479 : vector<16x128xf32>
    %cst_90 = arith.constant 0.000000e+00 : f32
    %481 = vector.broadcast %cst_90 : f32 to vector<16x128xf32>
    %482 = arith.maximumf %480, %481 : vector<16x128xf32>
    %483 = arith.addf %482, %254 : vector<16x128xf32>
    %cst_91 = arith.constant dense<0.000000e+00> : vector<16xf32>
    %484 = vector.multi_reduction <add>, %483, %cst_91 [1] : vector<16x128xf32> to vector<16xf32>
    %485 = vector.shape_cast %484 : vector<16xf32> to vector<16x1xf32>
    %cst_92 = arith.constant 3.125000e-02 : f32
    %486 = vector.broadcast %cst_92 : f32 to vector<16x1xf32>
    %487 = arith.mulf %485, %486 : vector<16x1xf32>
    %488 = vector.broadcast %487 : vector<16x1xf32> to vector<16x128xf32>
    %489 = arith.subf %483, %488 : vector<16x128xf32>
    %490 = arith.mulf %489, %4 : vector<16x128xf32>
    %491 = arith.mulf %490, %490 : vector<16x128xf32>
    %cst_93 = arith.constant dense<0.000000e+00> : vector<16xf32>
    %492 = vector.multi_reduction <add>, %491, %cst_93 [1] : vector<16x128xf32> to vector<16xf32>
    %493 = vector.shape_cast %492 : vector<16xf32> to vector<16x1xf32>
    %cst_94 = arith.constant 3.125000e-02 : f32
    %494 = vector.broadcast %cst_94 : f32 to vector<16x1xf32>
    %495 = arith.mulf %493, %494 : vector<16x1xf32>
    %cst_95 = arith.constant 9.99999974E-6 : f32
    %496 = vector.broadcast %cst_95 : f32 to vector<16x1xf32>
    %497 = arith.addf %495, %496 : vector<16x1xf32>
    %498 = math.rsqrt %497 : vector<16x1xf32>
    %499 = vector.broadcast %498 : vector<16x1xf32> to vector<16x128xf32>
    %500 = arith.mulf %490, %499 : vector<16x128xf32>
    %501 = vector.broadcast %257 : vector<1x128xf32> to vector<16x128xf32>
    %502 = arith.mulf %500, %501 : vector<16x128xf32>
    %503 = vector.broadcast %258 : vector<1x128xf32> to vector<16x128xf32>
    %504 = arith.addf %502, %503 : vector<16x128xf32>
    %c8 = arith.constant 8 : index
    %c0_96 = arith.constant 0 : index
    %505 = vector.load %arg3[%c8, %c0_96] : memref<16x128xf32, #tpu.memory_space<vmem>>, vector<1x128xf32>
    %c9 = arith.constant 9 : index
    %c0_97 = arith.constant 0 : index
    %506 = vector.load %arg3[%c9, %c0_97] : memref<16x128xf32, #tpu.memory_space<vmem>>, vector<1x128xf32>
    %507 = arith.truncf %504 : vector<16x128xf32> to vector<16x128xbf16>
    %c0_98 = arith.constant 0 : index
    %c0_99 = arith.constant 0 : index
    %508 = vector.load %arg6[%c0_98, %c0_99] : memref<256x128xbf16, #tpu.memory_space<vmem>>, vector<128x128xbf16>
    %cst_100 = arith.constant dense<0.000000e+00> : vector<16x128xf32>
    %509 = tpu.matmul %507, %508, %cst_100 {dimension_numbers = #tpu.dot_dimension_numbers<[1], [0], [0], [1], [0, 0, 1, 1], [], []>} : vector<16x128xbf16>, vector<128x128xbf16>, vector<16x128xf32> -> vector<16x128xf32>
    %510 = vector.broadcast %505 : vector<1x128xf32> to vector<16x128xf32>
    %511 = arith.addf %509, %510 : vector<16x128xf32>
    %cst_101 = arith.constant 0.000000e+00 : f32
    %512 = vector.broadcast %cst_101 : f32 to vector<16x128xf32>
    %513 = arith.maximumf %511, %512 : vector<16x128xf32>
    %514 = arith.truncf %513 : vector<16x128xf32> to vector<16x128xbf16>
    %c128_102 = arith.constant 128 : index
    %c0_103 = arith.constant 0 : index
    %515 = vector.load %arg6[%c128_102, %c0_103] : memref<256x128xbf16, #tpu.memory_space<vmem>>, vector<128x128xbf16>
    %cst_104 = arith.constant dense<0.000000e+00> : vector<16x128xf32>
    %516 = tpu.matmul %514, %515, %cst_104 {dimension_numbers = #tpu.dot_dimension_numbers<[1], [0], [0], [1], [0, 0, 1, 1], [], []>} : vector<16x128xbf16>, vector<128x128xbf16>, vector<16x128xf32> -> vector<16x128xf32>
    %517 = vector.broadcast %506 : vector<1x128xf32> to vector<16x128xf32>
    %518 = arith.addf %516, %517 : vector<16x128xf32>
    %c0_105 = arith.constant 0 : index
    %c0_106 = arith.constant 0 : index
    %519 = vector.load %arg7[%c0_105, %c0_106] : memref<16x128xf32, #tpu.memory_space<vmem>>, vector<16x128xf32>
    tpu.vector_store %arg7[%c0_105, %c0_106], %518 {strides = array<i32>} : memref<16x128xf32, #tpu.memory_space<vmem>>, vector<16x128xf32>,
    %c0_107 = arith.constant 0 : index
    %c0_108 = arith.constant 0 : index
    %520 = vector.load %arg8[%c0_107, %c0_108] : memref<16x128xf32, #tpu.memory_space<vmem>>, vector<16x128xf32>
    tpu.vector_store %arg8[%c0_107, %c0_108], %504 {strides = array<i32>} : memref<16x128xf32, #tpu.memory_space<vmem>>, vector<16x128xf32>,
    return
  }
  func.func @transform_0(%arg0: i32) -> (i32, i32) {
    %c0_i32 = arith.constant 0 : i32
    %c0_i32_0 = arith.constant 0 : i32
    return %arg0, %c0_i32 : i32, i32
  }
  func.func @transform_1(%arg0: i32) -> (i32, i32) {
    %c0_i32 = arith.constant 0 : i32
    %c0_i32_0 = arith.constant 0 : i32
    %c0_i32_1 = arith.constant 0 : i32
    return %c0_i32, %c0_i32_0 : i32, i32
  }
  func.func @transform_2(%arg0: i32) -> (i32, i32) {
    %c0_i32 = arith.constant 0 : i32
    %c0_i32_0 = arith.constant 0 : i32
    %c0_i32_1 = arith.constant 0 : i32
    return %c0_i32, %c0_i32_0 : i32, i32
  }
  func.func @transform_3(%arg0: i32) -> (i32, i32) {
    %c0_i32 = arith.constant 0 : i32
    %c0_i32_0 = arith.constant 0 : i32
    %c0_i32_1 = arith.constant 0 : i32
    return %c0_i32, %c0_i32_0 : i32, i32
  }
  func.func @transform_4(%arg0: i32) -> (i32, i32) {
    %c0_i32 = arith.constant 0 : i32
    %c0_i32_0 = arith.constant 0 : i32
    %c0_i32_1 = arith.constant 0 : i32
    return %c0_i32, %c0_i32_0 : i32, i32
  }
  func.func @transform_5(%arg0: i32) -> (i32, i32) {
    %c0_i32 = arith.constant 0 : i32
    %c0_i32_0 = arith.constant 0 : i32
    %c0_i32_1 = arith.constant 0 : i32
    return %c0_i32, %c0_i32_0 : i32, i32
  }
  func.func @transform_6(%arg0: i32) -> (i32, i32) {
    %c0_i32 = arith.constant 0 : i32
    %c0_i32_0 = arith.constant 0 : i32
    return %arg0, %c0_i32 : i32, i32
  }
  func.func @transform_7(%arg0: i32) -> (i32, i32) {
    %c0_i32 = arith.constant 0 : i32
    %c0_i32_0 = arith.constant 0 : i32
    return %arg0, %c0_i32 : i32, i32
  }
}

</mosaic_0001>

<llo_original>
// kernel: _lambda_.1
$region0: #{_lambda_.1}
  #allocation0 [shape = 'u32[]', space=smem, size = 0x4, offset = 0x4, fixed_abs, tag = 'smem constant byte address 0x4 - core index']
  #allocation1 [shape = 'u32[144,128]{1,0:T(1,128)}', space=vmem, size = 0x12000, scoped, tag = 'internal scratch']
  %s0 = inlined_call_operand.vmem [shape: f32[128,128], index: 0, kind: input, shape index: {}]
  %s1 = inlined_call_operand.vmem [shape: f32[256,128], index: 1, kind: input, shape index: {}]
  %s2 = inlined_call_operand.vmem [shape: f32[16,128], index: 2, kind: input, shape index: {}]
  %s3 = inlined_call_operand.vmem [shape: bf16[256,256], index: 3, kind: input, shape index: {}]
  %s4 = inlined_call_operand.vmem [shape: bf16[256,128], index: 4, kind: input, shape index: {}]
  %s5 = inlined_call_operand.vmem [shape: bf16[256,128], index: 5, kind: input, shape index: {}]
  %s6 = inlined_call_operand.hbm [shape: f32[128,128], index: 6, kind: output, shape index: {0}]
  %s7 = inlined_call_operand.hbm [shape: f32[128,128], index: 7, kind: output, shape index: {1}]
  %8 = xla_tuple %s6, %s7
  %s9 = sld [smem:[#allocation0]]
  $region65: #{_lambda_.1} parent=0
    _
  %s11 = ssub.s32 1, %s9
  %s12 = scalar_select 0, %s11, %s9
  $region1: #{_lambda_.1} parent=0
    #allocation2 [shape = 'u8[16384]{0}', space=vmem, size = 0x4000, scoped, tag = 'output window, operand 0']
    #allocation3 [shape = 's32[2]{0}', space=sflag, size = 0x8, scoped, tag = 'scoped memory for _lambda_.1']
    #allocation4 [shape = 'u8[16384]{0}', space=vmem, size = 0x4000, scoped, tag = 'output window, operand 1']
    #allocation5 [shape = 's32[2]{0}', space=sflag, size = 0x8, scoped, tag = 'scoped memory for _lambda_.1']
    %13 = vsyncpa [#allocation3], 0
    %s14 = scalar_lea.sflag [#allocation3], 1
    %15 = vsyncpa %s14, 0
    %16 = vsyncpa [#allocation5], 0
    %s17 = scalar_lea.sflag [#allocation5], 1
    %18 = vsyncpa %s17, 0
    loop: start=0, step=1, limit=10
    $region2: #{_lambda_.1} parent=1 // loop_pre_header
      _
    $region3: #{_lambda_.1} parent=1 // loop_header
      %s20 = sphi 0, %s24
      %p21 = scmp.ge.s32.totalorder %s20, 10
      %s30 = sphi 0, %s32
      %s33 = sphi 0, %s30
      %s34 = sphi 0, %s33
      %s50 = sphi 0, %s34
      %s54 = sphi 0, %s54
      %s56 = sphi 0, %s54
      %s57 = sphi 0, %s56
      %s71 = sphi 0, %s57
      %s75 = sphi 0, %s75
      %s77 = sphi 0, %s75
      %s78 = sphi 0, %s77
      %s92 = sphi 0, %s78
      %s96 = sphi 0, %s96
      %s98 = sphi 0, %s96
      %s99 = sphi 0, %s98
      %s113 = sphi 0, %s99
      %s117 = sphi 0, %s117
      %s119 = sphi 0, %s117
      %s120 = sphi 0, %s119
      %s134 = sphi 0, %s120
      %s138 = sphi 0, %s138
      %s140 = sphi 0, %s138
      %s141 = sphi 0, %s140
      %s155 = sphi 0, %s141
      %s161 = sphi 0, %s163
      %s164 = sphi 0, %s161
      %s165 = sphi 0, %s164
      %s181 = sphi 0, %s165
      %s187 = sphi 0, %s189
      %s190 = sphi 0, %s187
      %s191 = sphi 0, %s190
      %s207 = sphi 0, %s191
    $region4: #{_lambda_.1} parent=1 // loop_header_branch
      %23 = sbr.rel (%p21) target = $region8
    $region5: #{_lambda_.1} parent=1 // loop_body
      %s25 = ssub.s32 %s20, 1
      %s26 = ssub.s32 %s20, 2
      %s27 = sadd.s32 %s20, 1
      %s28 = ssub.s32 %s20, %s27
      %p29 = scmp.eq.s32.totalorder %s28, 0
      %s31 = sadd.s32 %s30, 1
      %s32 = scalar_select %p29, %s30, %s31
      %p35 = pneg %p29
      %p36 = scmp.eq.s32.totalorder %s20, 7
      %p37 = por %p35, %p36
      %p38 = scmp.ne.s32.totalorder %s30, %s33
      %p39 = scmp.eq.s32.totalorder %s20, 0
      %p40 = por %p38, %p39
      %p41 = scmp.ne.s32.totalorder %s30, %s33
      %p42 = scmp.eq.s32.totalorder %s25, 7
      %p43 = por %p41, %p42
      %p44 = scmp.ne.s32.totalorder %s33, %s34
      %p45 = scmp.eq.s32.totalorder %s25, 0
      %p46 = por %p44, %p45
      %p47 = scmp.ne.s32.totalorder %s33, %s34
      %p48 = scmp.eq.s32.totalorder %s26, 7
      %p49 = por %p47, %p48
      %p51 = scmp.ne.s32.totalorder %s34, %s50
      %p52 = scmp.eq.s32.totalorder %s26, 0
      %p53 = por %p51, %p52
      %s55 = sadd.s32 %s54, 1
      %p58 = scmp.eq.s32.totalorder %s20, 7
      %p59 = scmp.ne.s32.totalorder %s54, %s56
      %p60 = scmp.eq.s32.totalorder %s20, 0
      %p61 = por %p59, %p60
      %p62 = scmp.ne.s32.totalorder %s54, %s56
      %p63 = scmp.eq.s32.totalorder %s25, 7
      %p64 = por %p62, %p63
      %p65 = scmp.ne.s32.totalorder %s56, %s57
      %p66 = scmp.eq.s32.totalorder %s25, 0
      %p67 = por %p65, %p66
      %p68 = scmp.ne.s32.totalorder %s56, %s57
      %p69 = scmp.eq.s32.totalorder %s26, 7
      %p70 = por %p68, %p69
      %p72 = scmp.ne.s32.totalorder %s57, %s71
      %p73 = scmp.eq.s32.totalorder %s26, 0
      %p74 = por %p72, %p73
      %s76 = sadd.s32 %s75, 1
      %p79 = scmp.eq.s32.totalorder %s20, 7
      %p80 = scmp.ne.s32.totalorder %s75, %s77
      %p81 = scmp.eq.s32.totalorder %s20, 0
      %p82 = por %p80, %p81
      %p83 = scmp.ne.s32.totalorder %s75, %s77
      %p84 = scmp.eq.s32.totalorder %s25, 7
      %p85 = por %p83, %p84
      %p86 = scmp.ne.s32.totalorder %s77, %s78
      %p87 = scmp.eq.s32.totalorder %s25, 0
      %p88 = por %p86, %p87
      %p89 = scmp.ne.s32.totalorder %s77, %s78
      %p90 = scmp.eq.s32.totalorder %s26, 7
      %p91 = por %p89, %p90
      %p93 = scmp.ne.s32.totalorder %s78, %s92
      %p94 = scmp.eq.s32.totalorder %s26, 0
      %p95 = por %p93, %p94
      %s97 = sadd.s32 %s96, 1
      %p100 = scmp.eq.s32.totalorder %s20, 7
      %p101 = scmp.ne.s32.totalorder %s96, %s98
      %p102 = scmp.eq.s32.totalorder %s20, 0
      %p103 = por %p101, %p102
      %p104 = scmp.ne.s32.totalorder %s96, %s98
      %p105 = scmp.eq.s32.totalorder %s25, 7
      %p106 = por %p104, %p105
      %p107 = scmp.ne.s32.totalorder %s98, %s99
      %p108 = scmp.eq.s32.totalorder %s25, 0
      %p109 = por %p107, %p108
      %p110 = scmp.ne.s32.totalorder %s98, %s99
      %p111 = scmp.eq.s32.totalorder %s26, 7
      %p112 = por %p110, %p111
      %p114 = scmp.ne.s32.totalorder %s99, %s113
      %p115 = scmp.eq.s32.totalorder %s26, 0
      %p116 = por %p114, %p115
      %s118 = sadd.s32 %s117, 1
      %p121 = scmp.eq.s32.totalorder %s20, 7
      %p122 = scmp.ne.s32.totalorder %s117, %s119
      %p123 = scmp.eq.s32.totalorder %s20, 0
      %p124 = por %p122, %p123
      %p125 = scmp.ne.s32.totalorder %s117, %s119
      %p126 = scmp.eq.s32.totalorder %s25, 7
      %p127 = por %p125, %p126
      %p128 = scmp.ne.s32.totalorder %s119, %s120
      %p129 = scmp.eq.s32.totalorder %s25, 0
      %p130 = por %p128, %p129
      %p131 = scmp.ne.s32.totalorder %s119, %s120
      %p132 = scmp.eq.s32.totalorder %s26, 7
      %p133 = por %p131, %p132
      %p135 = scmp.ne.s32.totalorder %s120, %s134
      %p136 = scmp.eq.s32.totalorder %s26, 0
      %p137 = por %p135, %p136
      %s139 = sadd.s32 %s138, 1
      %p142 = scmp.eq.s32.totalorder %s20, 7
      %p143 = scmp.ne.s32.totalorder %s138, %s140
      %p144 = scmp.eq.s32.totalorder %s20, 0
      %p145 = por %p143, %p144
      %p146 = scmp.ne.s32.totalorder %s138, %s140
      %p147 = scmp.eq.s32.totalorder %s25, 7
      %p148 = por %p146, %p147
      %p149 = scmp.ne.s32.totalorder %s140, %s141
      %p150 = scmp.eq.s32.totalorder %s25, 0
      %p151 = por %p149, %p150
      %p152 = scmp.ne.s32.totalorder %s140, %s141
      %p153 = scmp.eq.s32.totalorder %s26, 7
      %p154 = por %p152, %p153
      %p156 = scmp.ne.s32.totalorder %s141, %s155
      %p157 = scmp.eq.s32.totalorder %s26, 0
      %p158 = por %p156, %p157
      %s159 = ssub.s32 %s20, %s27
      %p160 = scmp.eq.s32.totalorder %s159, 0
      %s162 = sadd.s32 %s161, 1
      %s163 = scalar_select %p160, %s161, %s162
      %p166 = pneg %p160
      %p167 = scmp.eq.s32.totalorder %s20, 7
      %p168 = por %p166, %p167
      %p169 = scmp.ne.s32.totalorder %s161, %s164
      %p170 = scmp.eq.s32.totalorder %s20, 0
      %p171 = por %p169, %p170
      %p172 = scmp.ne.s32.totalorder %s161, %s164
      %p173 = scmp.eq.s32.totalorder %s25, 7
      %p174 = por %p172, %p173
      %p175 = scmp.ne.s32.totalorder %s164, %s165
      %p176 = scmp.eq.s32.totalorder %s25, 0
      %p177 = por %p175, %p176
      %p178 = scmp.ne.s32.totalorder %s164, %s165
      %p179 = scmp.eq.s32.totalorder %s26, 7
      %p180 = por %p178, %p179
      %p182 = scmp.ne.s32.totalorder %s165, %s181
      %p183 = scmp.eq.s32.totalorder %s26, 0
      %p184 = por %p182, %p183
      %s185 = ssub.s32 %s20, %s27
      %p186 = scmp.eq.s32.totalorder %s185, 0
      %s188 = sadd.s32 %s187, 1
      %s189 = scalar_select %p186, %s187, %s188
      %p192 = pneg %p186
      %p193 = scmp.eq.s32.totalorder %s20, 7
      %p194 = por %p192, %p193
      %p195 = scmp.ne.s32.totalorder %s187, %s190
      %p196 = scmp.eq.s32.totalorder %s20, 0
      %p197 = por %p195, %p196
      %p198 = scmp.ne.s32.totalorder %s187, %s190
      %p199 = scmp.eq.s32.totalorder %s25, 7
      %p200 = por %p198, %p199
      %p201 = scmp.ne.s32.totalorder %s190, %s191
      %p202 = scmp.eq.s32.totalorder %s25, 0
      %p203 = por %p201, %p202
      %p204 = scmp.ne.s32.totalorder %s190, %s191
      %p205 = scmp.eq.s32.totalorder %s26, 7
      %p206 = por %p204, %p205
      %p208 = scmp.ne.s32.totalorder %s191, %s207
      %p209 = scmp.eq.s32.totalorder %s26, 0
      %p210 = por %p208, %p209
      %p211 = scmp.le.s32.totalorder 1, %s20
      %p212 = scmp.lt.s32.totalorder %s20, 9
      %p213 = pnand %p211, %p212
      %p214 = pneg %p213
      // Predicated region
      $region9: #{_lambda_.1} parent=5 // pred_check
        _
      $region10: #{_lambda_.1} parent=5 // pred_check_branch
        %216 = sbr.rel (%p213) target = $region12
      $region11: #{_lambda_.1} parent=5 // pred_region
        %s217 = ssub.s32 %s20, 1
        // Predicated region
        $region13: #{_lambda_.1} parent=11 // pred_check
          %p218 = pneg %p67
        $region14: #{_lambda_.1} parent=11 // pred_check_branch
          %220 = sbr.rel (%p218) target = $region16
        $region15: #{_lambda_.1} parent=11 // pred_region
          _
        $region16: #{_lambda_.1} parent=11 // pred_fallthru
          _
        // Predicated region
        $region17: #{_lambda_.1} parent=11 // pred_check
          %p221 = pneg %p88
        $region18: #{_lambda_.1} parent=11 // pred_check_branch
          %223 = sbr.rel (%p221) target = $region20
        $region19: #{_lambda_.1} parent=11 // pred_region
          _
        $region20: #{_lambda_.1} parent=11 // pred_fallthru
          _
        // Predicated region
        $region21: #{_lambda_.1} parent=11 // pred_check
          %p224 = pneg %p109
        $region22: #{_lambda_.1} parent=11 // pred_check_branch
          %226 = sbr.rel (%p224) target = $region24
        $region23: #{_lambda_.1} parent=11 // pred_region
          _
        $region24: #{_lambda_.1} parent=11 // pred_fallthru
          _
        // Predicated region
        $region25: #{_lambda_.1} parent=11 // pred_check
          %p227 = pneg %p130
        $region26: #{_lambda_.1} parent=11 // pred_check_branch
          %229 = sbr.rel (%p227) target = $region28
        $region27: #{_lambda_.1} parent=11 // pred_region
          _
        $region28: #{_lambda_.1} parent=11 // pred_fallthru
          _
        // Predicated region
        $region29: #{_lambda_.1} parent=11 // pred_check
          %p230 = pneg %p151
        $region30: #{_lambda_.1} parent=11 // pred_check_branch
          %232 = sbr.rel (%p230) target = $region32
        $region31: #{_lambda_.1} parent=11 // pred_region
          _
        $region32: #{_lambda_.1} parent=11 // pred_fallthru
          _
      $region12: #{_lambda_.1} parent=5 // pred_fallthru
        _
      %p233 = scmp.lt.s32.totalorder %s20, 8
      // Predicated region
      $region33: #{_lambda_.1} parent=5 // pred_check
        %p234 = pneg %p233
      $region34: #{_lambda_.1} parent=5 // pred_check_branch
        %236 = sbr.rel (%p234) target = $region36
      $region35: #{_lambda_.1} parent=5 // pred_region
        // Predicated region
        $region37: #{_lambda_.1} parent=35 // pred_check
          %p237 = pneg %p40
        $region38: #{_lambda_.1} parent=35 // pred_check_branch
          %239 = sbr.rel (%p237) target = $region40
        $region39: #{_lambda_.1} parent=35 // pred_region
          %s240 = smul.u32 2, %s20
          %p241 = scmp.lt.s32.totalorder %s240, 15
          %s242 = scalar_select %p241, %s240, 15
          %s243 = smul.addr %s242, 8
          %s244 = scalar_lea.vmem %s0, %s243
          %s245 = smul.u32 2, %s20
        $region40: #{_lambda_.1} parent=35 // pred_fallthru
          _
      $region36: #{_lambda_.1} parent=5 // pred_fallthru
        _
      %p246 = scmp.le.s32.totalorder 1, %s20
      %p247 = scmp.lt.s32.totalorder %s20, 9
      %p248 = pnand %p246, %p247
      %p249 = pneg %p248
      // Predicated region
      $region41: #{_lambda_.1} parent=5 // pred_check
        _
      $region42: #{_lambda_.1} parent=5 // pred_check_branch
        %251 = sbr.rel (%p248) target = $region44
      $region43: #{_lambda_.1} parent=5 // pred_region
        %s252 = ssub.s32 %s20, 1
        %s253 = smul.u32 2, %s25
        %p254 = scmp.lt.s32.totalorder %s253, 15
        %s255 = scalar_select %p254, %s253, 15
        %s256 = smul.addr %s255, 8
        %s257 = scalar_lea.vmem %s0, %s256
        %p258 = pneg %p46
        %p259 = pneg %p43
        %p260 = pneg %p67
        %p261 = pneg %p64
        %p262 = pneg %p88
        %p263 = pneg %p85
        %p264 = pneg %p109
        %p265 = pneg %p106
        %p266 = pneg %p130
        %p267 = pneg %p127
        %p268 = pneg %p151
        %p269 = pneg %p148
        %p270 = pneg %p177
        %p271 = pneg %p174
        %s272 = sand.u32 %s164, 1
        %s273 = scalar_lea.sflag [#allocation3], %s272
        %s274 = sand.u32 %s164, 1
        %s275 = smul.addr %s274, 16
        %s276 = scalar_lea.vmem [#allocation2], %s275
        %p277 = pneg %p203
        %p278 = pneg %p200
        %s279 = sand.u32 %s190, 1
        %s280 = scalar_lea.sflag [#allocation5], %s279
        %s281 = sand.u32 %s190, 1
        %s282 = smul.addr %s281, 16
        %s283 = scalar_lea.vmem [#allocation4], %s282
        %s284 = smul.u32 2, %s25
        %p285 = scmp.lt.s32.totalorder %s284, 15
        %s286 = scalar_select %p285, %s284, 15
        %s287 = smul.addr %s286, 8
        %s288 = scalar_lea.vmem %s0, %s287
        %s289 = smul.u32 2, %s25
        %s290 = smul.u32 2, %s25
        %s291 = smul.u32 2, %s25
        %v293 = vlaneseq
        %v294 = vand.u32 %v293, 127
        %vm295 = vcmp.lt.s32.totalorder %v294, 32
        %v296 = vsel %vm295, 1, 0
        %v297 = vcvt.s32.f32 %v296
        %v298 = vld [vmem:[%s288] sm:$0xff]
        %v299 = vld [vmem:[%s288 + $0x8] sm:$0xff]
        %v300 = vld [vmem:[%s2] sm:$0x1]
        %v301 = vld [vmem:[%s2 + $0x1] sm:$0x1]
        %v302 = vld [vmem:[%s2 + $0x2] sm:$0x1]
        %v303 = vld [vmem:[%s2 + $0x3] sm:$0x1]
        %v304 = vpack.c.bf16 %v299, %v298
        %v305 = vld [vmem:[%s3] sm:$0xff]
        %v306 = vld [vmem:[%s3 + $0x8] sm:$0xff]
        %v307 = vld [vmem:[%s3 + $0x10] sm:$0xff]
        %v308 = vld [vmem:[%s3 + $0x18] sm:$0xff]
        %v309 = vld [vmem:[%s3 + $0x20] sm:$0xff]
        %v310 = vld [vmem:[%s3 + $0x28] sm:$0xff]
        %v311 = vld [vmem:[%s3 + $0x30] sm:$0xff]
        %v312 = vld [vmem:[%s3 + $0x38] sm:$0xff]
        %v313 = vld [vmem:[%s3 + $0x40] sm:$0xff]
        %v314 = vld [vmem:[%s3 + $0x48] sm:$0xff]
        %v315 = vld [vmem:[%s3 + $0x50] sm:$0xff]
        %v316 = vld [vmem:[%s3 + $0x58] sm:$0xff]
        %v317 = vld [vmem:[%s3 + $0x60] sm:$0xff]
        %v318 = vld [vmem:[%s3 + $0x68] sm:$0xff]
        %v319 = vld [vmem:[%s3 + $0x70] sm:$0xff]
        %v320 = vld [vmem:[%s3 + $0x78] sm:$0xff]
        %v337 = vunpack.c.l.b16 %v305
        %v338 = vunpack.c.h.b16 %v305
        %v339 = vunpack.c.l.b16 %v306
        %v340 = vunpack.c.h.b16 %v306
        %v341 = vunpack.c.l.b16 %v307
        %v342 = vunpack.c.h.b16 %v307
        %v343 = vunpack.c.l.b16 %v308
        %v344 = vunpack.c.h.b16 %v308
        %v345 = vunpack.c.l.b16 %v309
        %v346 = vunpack.c.h.b16 %v309
        %v347 = vunpack.c.l.b16 %v310
        %v348 = vunpack.c.h.b16 %v310
        %v349 = vunpack.c.l.b16 %v311
        %v350 = vunpack.c.h.b16 %v311
        %v351 = vunpack.c.l.b16 %v312
        %v352 = vunpack.c.h.b16 %v312
        %v353 = vunpack.c.l.b16 %v313
        %v354 = vunpack.c.h.b16 %v313
        %v355 = vunpack.c.l.b16 %v314
        %v356 = vunpack.c.h.b16 %v314
        %v357 = vunpack.c.l.b16 %v315
        %v358 = vunpack.c.h.b16 %v315
        %v359 = vunpack.c.l.b16 %v316
        %v360 = vunpack.c.h.b16 %v316
        %v361 = vunpack.c.l.b16 %v317
        %v362 = vunpack.c.h.b16 %v317
        %v363 = vunpack.c.l.b16 %v318
        %v364 = vunpack.c.h.b16 %v318
        %v365 = vunpack.c.l.b16 %v319
        %v366 = vunpack.c.h.b16 %v319
        %v367 = vunpack.c.l.b16 %v320
        %v368 = vunpack.c.h.b16 %v320
        %v369 = vpack.c.b16 %v339, %v337
        %v370 = vpack.c.b16 %v340, %v338
        %v371 = vpack.c.b16 %v343, %v341
        %v372 = vpack.c.b16 %v344, %v342
        %v373 = vpack.c.b16 %v347, %v345
        %v374 = vpack.c.b16 %v348, %v346
        %v375 = vpack.c.b16 %v351, %v349
        %v376 = vpack.c.b16 %v352, %v350
        %v377 = vpack.c.b16 %v355, %v353
        %v378 = vpack.c.b16 %v356, %v354
        %v379 = vpack.c.b16 %v359, %v357
        %v380 = vpack.c.b16 %v360, %v358
        %v381 = vpack.c.b16 %v363, %v361
        %v382 = vpack.c.b16 %v364, %v362
        %v383 = vpack.c.b16 %v367, %v365
        %v384 = vpack.c.b16 %v368, %v366
        %401 = vmatprep.subr.bf16.mxu0 %v384
        %402 = vmatpush1.bf16.msra.mxu0 %v383
        %403 = vmatprep.subr.bf16.mxu0 %v382
        %404 = vmatpush1.bf16.msra.mxu0 %v381
        %405 = vmatprep.subr.bf16.mxu0 %v380
        %406 = vmatpush1.bf16.msra.mxu0 %v379
        %407 = vmatprep.subr.bf16.mxu0 %v378
        %408 = vmatpush1.bf16.msra.mxu0 %v377
        %409 = vmatprep.subr.bf16.mxu0 %v376
        %410 = vmatpush1.bf16.msra.mxu0 %v375
        %411 = vmatprep.subr.bf16.mxu0 %v374
        %412 = vmatpush1.bf16.msra.mxu0 %v373
        %413 = vmatprep.subr.bf16.mxu0 %v372
        %414 = vmatpush1.bf16.msra.mxu0 %v371
        %415 = vmatprep.subr.bf16.mxu0 %v370
        %416 = vmatpush1.bf16.msra.mxu0 %v369
        %417 = vmatprep.subr.bf16.mxu0 0
        %418 = vmatpush2.bf16.msra.mxu0 0
        %419 = vmatprep.subr.bf16.mxu0 0
        %420 = vmatpush2.bf16.msra.mxu0 0
        %421 = vmatprep.subr.bf16.mxu0 0
        %422 = vmatpush2.bf16.msra.mxu0 0
        %423 = vmatprep.subr.bf16.mxu0 0
        %424 = vmatpush2.bf16.msra.mxu0 0
        %425 = vmatprep.subr.bf16.mxu0 0
        %426 = vmatpush2.bf16.msra.mxu0 0
        %427 = vmatprep.subr.bf16.mxu0 0
        %428 = vmatpush2.bf16.msra.mxu0 0
        %429 = vmatprep.subr.bf16.mxu0 0
        %430 = vmatpush2.bf16.msra.mxu0 0
        %431 = vmatprep.subr.bf16.mxu0 0
        %432 = vmatpush2.bf16.msra.mxu0 0
        %433 = vmatprep.mubr.bf16.mxu0 0
        %434 = vmatmul.mubr.bf16.gmra.mxu0 %v304
        %v435 = vpop.f32.mrf.mxu0
        %v436 = vadd.f32 0.0, %v435
        %v437 = vpop.f32.mrf.mxu0
        %v438 = vadd.f32 0.0, %v437
        %v439 = vpop.f32.mrf.mxu0
        %v440 = vadd.f32 0.0, %v439
        %v441 = vpop.f32.mrf.mxu0
        %v442 = vadd.f32 0.0, %v441
        %443 = vdwg.mxu0
        %v444 = vlaneseq
        %v445 = vshrl.u32 %v444, 7
        %v446 = vsub.s32 0, %v445
        %v447 = vrot.slane %v300, %v446
        %v448 = vadd.f32 %v436, %v447
        %v449 = vadd.f32 %v440, %v447
        %v450 = vlaneseq
        %v451 = vshrl.u32 %v450, 7
        %v452 = vsub.s32 0, %v451
        %v453 = vrot.slane %v301, %v452
        %v454 = vadd.f32 %v438, %v453
        %v455 = vadd.f32 %v442, %v453
        %v458 = vcombine.high %v448, %v448
        %v460 = vunpack.c.l.s4 1966171168
        %v461 = vunpack.c.0.s8 %v460
        %v462 = vlaneseq
        %v463 = vshrl.u32 %v462, 7
        %v464 = vsub.s32 %v461, %v463
        %v465 = vrot.slane %v448, %v464
        %v467 = vunpack.c.l.s4 1966171168
        %v468 = vunpack.c.0.s8 %v467
        %v469 = vlaneseq
        %v470 = vshrl.u32 %v469, 7
        %v471 = vsub.s32 %v468, %v470
        %v472 = vrot.slane %v458, %v471
        %v473 = vcombine.high %v465, %v465
        %v474 = vcombine.high %v472, %v472
        %v476 = vunpack.c.l.s4 1966171168
        %v477 = vunpack.c.0.s8 %v476
        %v478 = vlaneseq
        %v479 = vshrl.u32 %v478, 7
        %v480 = vsub.s32 %v477, %v479
        %v481 = vrot.slane %v465, %v480
        %v483 = vunpack.c.l.s4 1966171168
        %v484 = vunpack.c.0.s8 %v483
        %v485 = vlaneseq
        %v486 = vshrl.u32 %v485, 7
        %v487 = vsub.s32 %v484, %v486
        %v488 = vrot.slane %v472, %v487
        %v490 = vunpack.c.l.s4 1966171168
        %v491 = vunpack.c.0.s8 %v490
        %v492 = vlaneseq
        %v493 = vshrl.u32 %v492, 7
        %v494 = vsub.s32 %v491, %v493
        %v495 = vrot.slane %v473, %v494
        %v497 = vunpack.c.l.s4 1966171168
        %v498 = vunpack.c.0.s8 %v497
        %v499 = vlaneseq
        %v500 = vshrl.u32 %v499, 7
        %v501 = vsub.s32 %v498, %v500
        %v502 = vrot.slane %v474, %v501
        %v503 = vcombine.high %v481, %v481
        %v504 = vcombine.high %v488, %v488
        %v505 = vcombine.high %v495, %v495
        %v506 = vcombine.high %v502, %v502
        %v507 = vcombine.high %v449, %v449
        %v509 = vunpack.c.l.s4 1966171168
        %v510 = vunpack.c.0.s8 %v509
        %v511 = vlaneseq
        %v512 = vshrl.u32 %v511, 7
        %v513 = vsub.s32 %v510, %v512
        %v514 = vrot.slane %v449, %v513
        %v516 = vunpack.c.l.s4 1966171168
        %v517 = vunpack.c.0.s8 %v516
        %v518 = vlaneseq
        %v519 = vshrl.u32 %v518, 7
        %v520 = vsub.s32 %v517, %v519
        %v521 = vrot.slane %v507, %v520
        %v522 = vcombine.high %v514, %v514
        %v523 = vcombine.high %v521, %v521
        %v525 = vunpack.c.l.s4 1966171168
        %v526 = vunpack.c.0.s8 %v525
        %v527 = vlaneseq
        %v528 = vshrl.u32 %v527, 7
        %v529 = vsub.s32 %v526, %v528
        %v530 = vrot.slane %v514, %v529
        %v532 = vunpack.c.l.s4 1966171168
        %v533 = vunpack.c.0.s8 %v532
        %v534 = vlaneseq
        %v535 = vshrl.u32 %v534, 7
        %v536 = vsub.s32 %v533, %v535
        %v537 = vrot.slane %v521, %v536
        %v539 = vunpack.c.l.s4 1966171168
        %v540 = vunpack.c.0.s8 %v539
        %v541 = vlaneseq
        %v542 = vshrl.u32 %v541, 7
        %v543 = vsub.s32 %v540, %v542
        %v544 = vrot.slane %v522, %v543
        %v546 = vunpack.c.l.s4 1966171168
        %v547 = vunpack.c.0.s8 %v546
        %v548 = vlaneseq
        %v549 = vshrl.u32 %v548, 7
        %v550 = vsub.s32 %v547, %v549
        %v551 = vrot.slane %v523, %v550
        %v552 = vcombine.high %v530, %v530
        %v553 = vcombine.high %v537, %v537
        %v554 = vcombine.high %v544, %v544
        %v555 = vcombine.high %v551, %v551
        %v556 = vlaneseq
        %v557 = vshrl.u32 %v556, 7
        %v558 = vsub.s32 0, %v557
        %v559 = vrot.slane %v481, %v558
        %v560 = vlaneseq
        %v561 = vshrl.u32 %v560, 7
        %v562 = vsub.s32 0, %v561
        %v563 = vrot.slane %v495, %v562
        %v564 = vlaneseq
        %v565 = vshrl.u32 %v564, 7
        %v566 = vsub.s32 0, %v565
        %v567 = vrot.slane %v503, %v566
        %v568 = vlaneseq
        %v569 = vshrl.u32 %v568, 7
        %v570 = vsub.s32 0, %v569
        %v571 = vrot.slane %v505, %v570
        %v572 = vlaneseq
        %v573 = vshrl.u32 %v572, 7
        %v574 = vsub.s32 0, %v573
        %v575 = vrot.slane %v488, %v574
        %v576 = vlaneseq
        %v577 = vshrl.u32 %v576, 7
        %v578 = vsub.s32 0, %v577
        %v579 = vrot.slane %v502, %v578
        %v580 = vlaneseq
        %v581 = vshrl.u32 %v580, 7
        %v582 = vsub.s32 0, %v581
        %v583 = vrot.slane %v504, %v582
        %v584 = vlaneseq
        %v585 = vshrl.u32 %v584, 7
        %v586 = vsub.s32 0, %v585
        %v587 = vrot.slane %v506, %v586
        %v588 = vlaneseq
        %v589 = vshrl.u32 %v588, 7
        %v590 = vsub.s32 0, %v589
        %v591 = vrot.slane %v530, %v590
        %v592 = vlaneseq
        %v593 = vshrl.u32 %v592, 7
        %v594 = vsub.s32 0, %v593
        %v595 = vrot.slane %v544, %v594
        %v596 = vlaneseq
        %v597 = vshrl.u32 %v596, 7
        %v598 = vsub.s32 0, %v597
        %v599 = vrot.slane %v552, %v598
        %v600 = vlaneseq
        %v601 = vshrl.u32 %v600, 7
        %v602 = vsub.s32 0, %v601
        %v603 = vrot.slane %v554, %v602
        %v604 = vlaneseq
        %v605 = vshrl.u32 %v604, 7
        %v606 = vsub.s32 0, %v605
        %v607 = vrot.slane %v537, %v606
        %v608 = vlaneseq
        %v609 = vshrl.u32 %v608, 7
        %v610 = vsub.s32 0, %v609
        %v611 = vrot.slane %v551, %v610
        %v612 = vlaneseq
        %v613 = vshrl.u32 %v612, 7
        %v614 = vsub.s32 0, %v613
        %v615 = vrot.slane %v553, %v614
        %v616 = vlaneseq
        %v617 = vshrl.u32 %v616, 7
        %v618 = vsub.s32 0, %v617
        %v619 = vrot.slane %v555, %v618
        %v636 = vadd.f32 %v559, %v454
        %v637 = vadd.f32 %v559, %v455
        %v638 = vadd.f32 %v563, %v454
        %v639 = vadd.f32 %v563, %v455
        %v640 = vadd.f32 %v567, %v454
        %v641 = vadd.f32 %v567, %v455
        %v642 = vadd.f32 %v571, %v454
        %v643 = vadd.f32 %v571, %v455
        %v644 = vadd.f32 %v575, %v454
        %v645 = vadd.f32 %v575, %v455
        %v646 = vadd.f32 %v579, %v454
        %v647 = vadd.f32 %v579, %v455
        %v648 = vadd.f32 %v583, %v454
        %v649 = vadd.f32 %v583, %v455
        %v650 = vadd.f32 %v587, %v454
        %v651 = vadd.f32 %v587, %v455
        %v652 = vadd.f32 %v591, %v454
        %v653 = vadd.f32 %v591, %v455
        %v654 = vadd.f32 %v595, %v454
        %v655 = vadd.f32 %v595, %v455
        %v656 = vadd.f32 %v599, %v454
        %v657 = vadd.f32 %v599, %v455
        %v658 = vadd.f32 %v603, %v454
        %v659 = vadd.f32 %v603, %v455
        %v660 = vadd.f32 %v607, %v454
        %v661 = vadd.f32 %v607, %v455
        %v662 = vadd.f32 %v611, %v454
        %v663 = vadd.f32 %v611, %v455
        %v664 = vadd.f32 %v615, %v454
        %v665 = vadd.f32 %v615, %v455
        %v666 = vadd.f32 %v619, %v454
        %v667 = vadd.f32 %v619, %v455
        %vm668 = vcmp.ge.f32.partialorder %v636, 0.0
        %vm669 = vcmp.ge.f32.partialorder %v637, 0.0
        %vm670 = vcmp.ge.f32.partialorder %v638, 0.0
        %vm671 = vcmp.ge.f32.partialorder %v639, 0.0
        %vm672 = vcmp.ge.f32.partialorder %v640, 0.0
        %vm673 = vcmp.ge.f32.partialorder %v641, 0.0
        %vm674 = vcmp.ge.f32.partialorder %v642, 0.0
        %vm675 = vcmp.ge.f32.partialorder %v643, 0.0
        %vm676 = vcmp.ge.f32.partialorder %v644, 0.0
        %vm677 = vcmp.ge.f32.partialorder %v645, 0.0
        %vm678 = vcmp.ge.f32.partialorder %v646, 0.0
        %vm679 = vcmp.ge.f32.partialorder %v647, 0.0
        %vm680 = vcmp.ge.f32.partialorder %v648, 0.0
        %vm681 = vcmp.ge.f32.partialorder %v649, 0.0
        %vm682 = vcmp.ge.f32.partialorder %v650, 0.0
        %vm683 = vcmp.ge.f32.partialorder %v651, 0.0
        %vm684 = vcmp.ge.f32.partialorder %v652, 0.0
        %vm685 = vcmp.ge.f32.partialorder %v653, 0.0
        %vm686 = vcmp.ge.f32.partialorder %v654, 0.0
        %vm687 = vcmp.ge.f32.partialorder %v655, 0.0
        %vm688 = vcmp.ge.f32.partialorder %v656, 0.0
        %vm689 = vcmp.ge.f32.partialorder %v657, 0.0
        %vm690 = vcmp.ge.f32.partialorder %v658, 0.0
        %vm691 = vcmp.ge.f32.partialorder %v659, 0.0
        %vm692 = vcmp.ge.f32.partialorder %v660, 0.0
        %vm693 = vcmp.ge.f32.partialorder %v661, 0.0
        %vm694 = vcmp.ge.f32.partialorder %v662, 0.0
        %vm695 = vcmp.ge.f32.partialorder %v663, 0.0
        %vm696 = vcmp.ge.f32.partialorder %v664, 0.0
        %vm697 = vcmp.ge.f32.partialorder %v665, 0.0
        %vm698 = vcmp.ge.f32.partialorder %v666, 0.0
        %vm699 = vcmp.ge.f32.partialorder %v667, 0.0
        %v700 = vmul.f32 %v636, 0.2
        %v701 = vmul.f32 %v637, 0.2
        %v702 = vmul.f32 %v638, 0.2
        %v703 = vmul.f32 %v639, 0.2
        %v704 = vmul.f32 %v640, 0.2
        %v705 = vmul.f32 %v641, 0.2
        %v706 = vmul.f32 %v642, 0.2
        %v707 = vmul.f32 %v643, 0.2
        %v708 = vmul.f32 %v644, 0.2
        %v709 = vmul.f32 %v645, 0.2
        %v710 = vmul.f32 %v646, 0.2
        %v711 = vmul.f32 %v647, 0.2
        %v712 = vmul.f32 %v648, 0.2
        %v713 = vmul.f32 %v649, 0.2
        %v714 = vmul.f32 %v650, 0.2
        %v715 = vmul.f32 %v651, 0.2
        %v716 = vmul.f32 %v652, 0.2
        %v717 = vmul.f32 %v653, 0.2
        %v718 = vmul.f32 %v654, 0.2
        %v719 = vmul.f32 %v655, 0.2
        %v720 = vmul.f32 %v656, 0.2
        %v721 = vmul.f32 %v657, 0.2
        %v722 = vmul.f32 %v658, 0.2
        %v723 = vmul.f32 %v659, 0.2
        %v724 = vmul.f32 %v660, 0.2
        %v725 = vmul.f32 %v661, 0.2
        %v726 = vmul.f32 %v662, 0.2
        %v727 = vmul.f32 %v663, 0.2
        %v728 = vmul.f32 %v664, 0.2
        %v729 = vmul.f32 %v665, 0.2
        %v730 = vmul.f32 %v666, 0.2
        %v731 = vmul.f32 %v667, 0.2
        %v732 = vsel %vm668, %v636, %v700
        %v733 = vsel %vm669, %v637, %v701
        %v734 = vsel %vm670, %v638, %v702
        %v735 = vsel %vm671, %v639, %v703
        %v736 = vsel %vm672, %v640, %v704
        %v737 = vsel %vm673, %v641, %v705
        %v738 = vsel %vm674, %v642, %v706
        %v739 = vsel %vm675, %v643, %v707
        %v740 = vsel %vm676, %v644, %v708
        %v741 = vsel %vm677, %v645, %v709
        %v742 = vsel %vm678, %v646, %v710
        %v743 = vsel %vm679, %v647, %v711
        %v744 = vsel %vm680, %v648, %v712
        %v745 = vsel %vm681, %v649, %v713
        %v746 = vsel %vm682, %v650, %v714
        %v747 = vsel %vm683, %v651, %v715
        %v748 = vsel %vm684, %v652, %v716
        %v749 = vsel %vm685, %v653, %v717
        %v750 = vsel %vm686, %v654, %v718
        %v751 = vsel %vm687, %v655, %v719
        %v752 = vsel %vm688, %v656, %v720
        %v753 = vsel %vm689, %v657, %v721
        %v754 = vsel %vm690, %v658, %v722
        %v755 = vsel %vm691, %v659, %v723
        %v756 = vsel %vm692, %v660, %v724
        %v757 = vsel %vm693, %v661, %v725
        %v758 = vsel %vm694, %v662, %v726
        %v759 = vsel %vm695, %v663, %v727
        %v760 = vsel %vm696, %v664, %v728
        %v761 = vsel %vm697, %v665, %v729
        %v762 = vsel %vm698, %v666, %v730
        %v763 = vsel %vm699, %v667, %v731
        %v764 = vpack.c.bf16 %v733, %v732
        %v765 = vpack.c.bf16 %v735, %v734
        %v766 = vpack.c.bf16 %v737, %v736
        %v767 = vpack.c.bf16 %v739, %v738
        %v768 = vpack.c.bf16 %v741, %v740
        %v769 = vpack.c.bf16 %v743, %v742
        %v770 = vpack.c.bf16 %v745, %v744
        %v771 = vpack.c.bf16 %v747, %v746
        %v772 = vpack.c.bf16 %v749, %v748
        %v773 = vpack.c.bf16 %v751, %v750
        %v774 = vpack.c.bf16 %v753, %v752
        %v775 = vpack.c.bf16 %v755, %v754
        %v776 = vpack.c.bf16 %v757, %v756
        %v777 = vpack.c.bf16 %v759, %v758
        %v778 = vpack.c.bf16 %v761, %v760
        %v779 = vpack.c.bf16 %v763, %v762
        %v780 = vld [vmem:[%s4] sm:$0xf]
        %v781 = vld [vmem:[%s4 + $0x4] sm:$0xf]
        %v782 = vld [vmem:[%s4 + $0x8] sm:$0xf]
        %v783 = vld [vmem:[%s4 + $0xc] sm:$0xf]
        %v784 = vld [vmem:[%s4 + $0x10] sm:$0xf]
        %v785 = vld [vmem:[%s4 + $0x14] sm:$0xf]
        %v786 = vld [vmem:[%s4 + $0x18] sm:$0xf]
        %v787 = vld [vmem:[%s4 + $0x1c] sm:$0xf]
        %v788 = vld [vmem:[%s4 + $0x20] sm:$0xf]
        %v789 = vld [vmem:[%s4 + $0x24] sm:$0xf]
        %v790 = vld [vmem:[%s4 + $0x28] sm:$0xf]
        %v791 = vld [vmem:[%s4 + $0x2c] sm:$0xf]
        %v792 = vld [vmem:[%s4 + $0x30] sm:$0xf]
        %v793 = vld [vmem:[%s4 + $0x34] sm:$0xf]
        %v794 = vld [vmem:[%s4 + $0x38] sm:$0xf]
        %v795 = vld [vmem:[%s4 + $0x3c] sm:$0xf]
        %v796 = vld [vmem:[%s1] sm:$0xff]
        %v797 = vld [vmem:[%s1 + $0x8] sm:$0xff]
        %v798 = vld [vmem:[%s1 + $0x10] sm:$0xff]
        %v799 = vld [vmem:[%s1 + $0x18] sm:$0xff]
        %v800 = vld [vmem:[%s1 + $0x20] sm:$0xff]
        %v801 = vld [vmem:[%s1 + $0x28] sm:$0xff]
        %v802 = vld [vmem:[%s1 + $0x30] sm:$0xff]
        %v803 = vld [vmem:[%s1 + $0x38] sm:$0xff]
        %v804 = vld [vmem:[%s1 + $0x40] sm:$0xff]
        %v805 = vld [vmem:[%s1 + $0x48] sm:$0xff]
        %v806 = vld [vmem:[%s1 + $0x50] sm:$0xff]
        %v807 = vld [vmem:[%s1 + $0x58] sm:$0xff]
        %v808 = vld [vmem:[%s1 + $0x60] sm:$0xff]
        %v809 = vld [vmem:[%s1 + $0x68] sm:$0xff]
        %v810 = vld [vmem:[%s1 + $0x70] sm:$0xff]
        %v811 = vld [vmem:[%s1 + $0x78] sm:$0xff]
        %v812 = vld [vmem:[%s1 + $0x80] sm:$0xff]
        %v813 = vld [vmem:[%s1 + $0x88] sm:$0xff]
        %v814 = vld [vmem:[%s1 + $0x90] sm:$0xff]
        %v815 = vld [vmem:[%s1 + $0x98] sm:$0xff]
        %v816 = vld [vmem:[%s1 + $0xa0] sm:$0xff]
        %v817 = vld [vmem:[%s1 + $0xa8] sm:$0xff]
        %v818 = vld [vmem:[%s1 + $0xb0] sm:$0xff]
        %v819 = vld [vmem:[%s1 + $0xb8] sm:$0xff]
        %v820 = vld [vmem:[%s1 + $0xc0] sm:$0xff]
        %v821 = vld [vmem:[%s1 + $0xc8] sm:$0xff]
        %v822 = vld [vmem:[%s1 + $0xd0] sm:$0xff]
        %v823 = vld [vmem:[%s1 + $0xd8] sm:$0xff]
        %v824 = vld [vmem:[%s1 + $0xe0] sm:$0xff]
        %v825 = vld [vmem:[%s1 + $0xe8] sm:$0xff]
        %v826 = vld [vmem:[%s1 + $0xf0] sm:$0xff]
        %v827 = vld [vmem:[%s1 + $0xf8] sm:$0xff]
        %v828 = vsub.f32 %v796, 1.0
        %v829 = vsub.f32 %v797, 1.0
        %v830 = vsub.f32 %v798, 1.0
        %v831 = vsub.f32 %v799, 1.0
        %v832 = vsub.f32 %v800, 1.0
        %v833 = vsub.f32 %v801, 1.0
        %v834 = vsub.f32 %v802, 1.0
        %v835 = vsub.f32 %v803, 1.0
        %v836 = vsub.f32 %v804, 1.0
        %v837 = vsub.f32 %v805, 1.0
        %v838 = vsub.f32 %v806, 1.0
        %v839 = vsub.f32 %v807, 1.0
        %v840 = vsub.f32 %v808, 1.0
        %v841 = vsub.f32 %v809, 1.0
        %v842 = vsub.f32 %v810, 1.0
        %v843 = vsub.f32 %v811, 1.0
        %v844 = vsub.f32 %v812, 1.0
        %v845 = vsub.f32 %v813, 1.0
        %v846 = vsub.f32 %v814, 1.0
        %v847 = vsub.f32 %v815, 1.0
        %v848 = vsub.f32 %v816, 1.0
        %v849 = vsub.f32 %v817, 1.0
        %v850 = vsub.f32 %v818, 1.0
        %v851 = vsub.f32 %v819, 1.0
        %v852 = vsub.f32 %v820, 1.0
        %v853 = vsub.f32 %v821, 1.0
        %v854 = vsub.f32 %v822, 1.0
        %v855 = vsub.f32 %v823, 1.0
        %v856 = vsub.f32 %v824, 1.0
        %v857 = vsub.f32 %v825, 1.0
        %v858 = vsub.f32 %v826, 1.0
        %v859 = vsub.f32 %v827, 1.0
        %v860 = vmul.f32 %v828, 1e+30
        %v861 = vmul.f32 %v829, 1e+30
        %v862 = vmul.f32 %v830, 1e+30
        %v863 = vmul.f32 %v831, 1e+30
        %v864 = vmul.f32 %v832, 1e+30
        %v865 = vmul.f32 %v833, 1e+30
        %v866 = vmul.f32 %v834, 1e+30
        %v867 = vmul.f32 %v835, 1e+30
        %v868 = vmul.f32 %v836, 1e+30
        %v869 = vmul.f32 %v837, 1e+30
        %v870 = vmul.f32 %v838, 1e+30
        %v871 = vmul.f32 %v839, 1e+30
        %v872 = vmul.f32 %v840, 1e+30
        %v873 = vmul.f32 %v841, 1e+30
        %v874 = vmul.f32 %v842, 1e+30
        %v875 = vmul.f32 %v843, 1e+30
        %v876 = vmul.f32 %v844, 1e+30
        %v877 = vmul.f32 %v845, 1e+30
        %v878 = vmul.f32 %v846, 1e+30
        %v879 = vmul.f32 %v847, 1e+30
        %v880 = vmul.f32 %v848, 1e+30
        %v881 = vmul.f32 %v849, 1e+30
        %v882 = vmul.f32 %v850, 1e+30
        %v883 = vmul.f32 %v851, 1e+30
        %v884 = vmul.f32 %v852, 1e+30
        %v885 = vmul.f32 %v853, 1e+30
        %v886 = vmul.f32 %v854, 1e+30
        %v887 = vmul.f32 %v855, 1e+30
        %v888 = vmul.f32 %v856, 1e+30
        %v889 = vmul.f32 %v857, 1e+30
        %v890 = vmul.f32 %v858, 1e+30
        %v891 = vmul.f32 %v859, 1e+30
        %v908 = vunpack.c.l.b16 %v780
        %v909 = vunpack.c.l.b16 %v781
        %v910 = vunpack.c.l.b16 %v782
        %v911 = vunpack.c.l.b16 %v783
        %v912 = vunpack.c.l.b16 %v784
        %v913 = vunpack.c.l.b16 %v785
        %v914 = vunpack.c.l.b16 %v786
        %v915 = vunpack.c.l.b16 %v787
        %v916 = vunpack.c.l.b16 %v788
        %v917 = vunpack.c.l.b16 %v789
        %v918 = vunpack.c.l.b16 %v790
        %v919 = vunpack.c.l.b16 %v791
        %v920 = vunpack.c.l.b16 %v792
        %v921 = vunpack.c.l.b16 %v793
        %v922 = vunpack.c.l.b16 %v794
        %v923 = vunpack.c.l.b16 %v795
        %v924 = vpack.c.b16 %v909, %v908
        %v925 = vpack.c.b16 %v911, %v910
        %v926 = vpack.c.b16 %v913, %v912
        %v927 = vpack.c.b16 %v915, %v914
        %v928 = vpack.c.b16 %v917, %v916
        %v929 = vpack.c.b16 %v919, %v918
        %v930 = vpack.c.b16 %v921, %v920
        %v931 = vpack.c.b16 %v923, %v922
        %940 = vmatprep.subr.bf16.mxu0 0
        %941 = vmatpush1.bf16.msra.mxu0 %v931
        %942 = vmatprep.subr.bf16.mxu0 0
        %943 = vmatpush1.bf16.msra.mxu0 %v930
        %944 = vmatprep.subr.bf16.mxu0 0
        %945 = vmatpush1.bf16.msra.mxu0 %v929
        %946 = vmatprep.subr.bf16.mxu0 0
        %947 = vmatpush1.bf16.msra.mxu0 %v928
        %948 = vmatprep.subr.bf16.mxu0 0
        %949 = vmatpush1.bf16.msra.mxu0 %v927
        %950 = vmatprep.subr.bf16.mxu0 0
        %951 = vmatpush1.bf16.msra.mxu0 %v926
        %952 = vmatprep.subr.bf16.mxu0 0
        %953 = vmatpush1.bf16.msra.mxu0 %v925
        %954 = vmatprep.subr.bf16.mxu0 0
        %955 = vmatpush1.bf16.msra.mxu0 %v924
        %956 = vmatprep.subr.bf16.mxu0 0
        %957 = vmatpush2.bf16.msra.mxu0 0
        %958 = vmatprep.subr.bf16.mxu0 0
        %959 = vmatpush2.bf16.msra.mxu0 0
        %960 = vmatprep.subr.bf16.mxu0 0
        %961 = vmatpush2.bf16.msra.mxu0 0
        %962 = vmatprep.subr.bf16.mxu0 0
        %963 = vmatpush2.bf16.msra.mxu0 0
        %964 = vmatprep.subr.bf16.mxu0 0
        %965 = vmatpush2.bf16.msra.mxu0 0
        %966 = vmatprep.subr.bf16.mxu0 0
        %967 = vmatpush2.bf16.msra.mxu0 0
        %968 = vmatprep.subr.bf16.mxu0 0
        %969 = vmatpush2.bf16.msra.mxu0 0
        %970 = vmatprep.subr.bf16.mxu0 0
        %971 = vmatpush2.bf16.msra.mxu0 0
        %972 = vmatprep.mubr.bf16.mxu0 0
        %973 = vmatmul.mubr.bf16.gmra.mxu0 %v764
        %v974 = vpop.f32.mrf.mxu0
        %v975 = vadd.f32 %v860, %v974
        %v976 = vpop.f32.mrf.mxu0
        %v977 = vpop.f32.mrf.mxu0
        %v978 = vadd.f32 %v861, %v977
        %v979 = vpop.f32.mrf.mxu0
        %980 = vmatprep.mubr.bf16.mxu0 0
        %981 = vmatmul.mubr.bf16.gmra.mxu0 %v765
        %v982 = vpop.f32.mrf.mxu0
        %v983 = vadd.f32 %v862, %v982
        %v984 = vpop.f32.mrf.mxu0
        %v985 = vpop.f32.mrf.mxu0
        %v986 = vadd.f32 %v863, %v985
        %v987 = vpop.f32.mrf.mxu0
        %988 = vmatprep.mubr.bf16.mxu0 0
        %989 = vmatmul.mubr.bf16.gmra.mxu0 %v766
        %v990 = vpop.f32.mrf.mxu0
        %v991 = vadd.f32 %v864, %v990
        %v992 = vpop.f32.mrf.mxu0
        %v993 = vpop.f32.mrf.mxu0
        %v994 = vadd.f32 %v865, %v993
        %v995 = vpop.f32.mrf.mxu0
        %996 = vmatprep.mubr.bf16.mxu0 0
        %997 = vmatmul.mubr.bf16.gmra.mxu0 %v767
        %v998 = vpop.f32.mrf.mxu0
        %v999 = vadd.f32 %v866, %v998
        %v1000 = vpop.f32.mrf.mxu0
        %v1001 = vpop.f32.mrf.mxu0
        %v1002 = vadd.f32 %v867, %v1001
        %v1003 = vpop.f32.mrf.mxu0
        %1004 = vmatprep.mubr.bf16.mxu0 0
        %1005 = vmatmul.mubr.bf16.gmra.mxu0 %v768
        %v1006 = vpop.f32.mrf.mxu0
        %v1007 = vadd.f32 %v868, %v1006
        %v1008 = vpop.f32.mrf.mxu0
        %v1009 = vpop.f32.mrf.mxu0
        %v1010 = vadd.f32 %v869, %v1009
        %v1011 = vpop.f32.mrf.mxu0
        %1012 = vmatprep.mubr.bf16.mxu0 0
        %1013 = vmatmul.mubr.bf16.gmra.mxu0 %v769
        %v1014 = vpop.f32.mrf.mxu0
        %v1015 = vadd.f32 %v870, %v1014
        %v1016 = vpop.f32.mrf.mxu0
        %v1017 = vpop.f32.mrf.mxu0
        %v1018 = vadd.f32 %v871, %v1017
        %v1019 = vpop.f32.mrf.mxu0
        %1020 = vmatprep.mubr.bf16.mxu0 0
        %1021 = vmatmul.mubr.bf16.gmra.mxu0 %v770
        %v1022 = vpop.f32.mrf.mxu0
        %v1023 = vadd.f32 %v872, %v1022
        %v1024 = vpop.f32.mrf.mxu0
        %v1025 = vpop.f32.mrf.mxu0
        %v1026 = vadd.f32 %v873, %v1025
        %v1027 = vpop.f32.mrf.mxu0
        %1028 = vmatprep.mubr.bf16.mxu0 0
        %1029 = vmatmul.mubr.bf16.gmra.mxu0 %v771
        %v1030 = vpop.f32.mrf.mxu0
        %v1031 = vadd.f32 %v874, %v1030
        %v1032 = vpop.f32.mrf.mxu0
        %v1033 = vpop.f32.mrf.mxu0
        %v1034 = vadd.f32 %v875, %v1033
        %v1035 = vpop.f32.mrf.mxu0
        %1036 = vmatprep.mubr.bf16.mxu0 0
        %1037 = vmatmul.mubr.bf16.gmra.mxu0 %v772
        %v1038 = vpop.f32.mrf.mxu0
        %v1039 = vadd.f32 %v876, %v1038
        %v1040 = vpop.f32.mrf.mxu0
        %v1041 = vpop.f32.mrf.mxu0
        %v1042 = vadd.f32 %v877, %v1041
        %v1043 = vpop.f32.mrf.mxu0
        %1044 = vmatprep.mubr.bf16.mxu0 0
        %1045 = vmatmul.mubr.bf16.gmra.mxu0 %v773
        %v1046 = vpop.f32.mrf.mxu0
        %v1047 = vadd.f32 %v878, %v1046
        %v1048 = vpop.f32.mrf.mxu0
        %v1049 = vpop.f32.mrf.mxu0
        %v1050 = vadd.f32 %v879, %v1049
        %v1051 = vpop.f32.mrf.mxu0
        %1052 = vmatprep.mubr.bf16.mxu0 0
        %1053 = vmatmul.mubr.bf16.gmra.mxu0 %v774
        %v1054 = vpop.f32.mrf.mxu0
        %v1055 = vadd.f32 %v880, %v1054
        %v1056 = vpop.f32.mrf.mxu0
        %v1057 = vpop.f32.mrf.mxu0
        %v1058 = vadd.f32 %v881, %v1057
        %v1059 = vpop.f32.mrf.mxu0
        %1060 = vmatprep.mubr.bf16.mxu0 0
        %1061 = vmatmul.mubr.bf16.gmra.mxu0 %v775
        %v1062 = vpop.f32.mrf.mxu0
        %v1063 = vadd.f32 %v882, %v1062
        %v1064 = vpop.f32.mrf.mxu0
        %v1065 = vpop.f32.mrf.mxu0
        %v1066 = vadd.f32 %v883, %v1065
        %v1067 = vpop.f32.mrf.mxu0
        %1068 = vmatprep.mubr.bf16.mxu0 0
        %1069 = vmatmul.mubr.bf16.gmra.mxu0 %v776
        %v1070 = vpop.f32.mrf.mxu0
        %v1071 = vadd.f32 %v884, %v1070
        %v1072 = vpop.f32.mrf.mxu0
        %v1073 = vpop.f32.mrf.mxu0
        %v1074 = vadd.f32 %v885, %v1073
        %v1075 = vpop.f32.mrf.mxu0
        %1076 = vmatprep.mubr.bf16.mxu0 0
        %1077 = vmatmul.mubr.bf16.gmra.mxu0 %v777
        %v1078 = vpop.f32.mrf.mxu0
        %v1079 = vadd.f32 %v886, %v1078
        %v1080 = vpop.f32.mrf.mxu0
        %v1081 = vpop.f32.mrf.mxu0
        %v1082 = vadd.f32 %v887, %v1081
        %v1083 = vpop.f32.mrf.mxu0
        %1084 = vmatprep.mubr.bf16.mxu0 0
        %1085 = vmatmul.mubr.bf16.gmra.mxu0 %v778
        %v1086 = vpop.f32.mrf.mxu0
        %v1087 = vadd.f32 %v888, %v1086
        %v1088 = vpop.f32.mrf.mxu0
        %v1089 = vpop.f32.mrf.mxu0
        %v1090 = vadd.f32 %v889, %v1089
        %v1091 = vpop.f32.mrf.mxu0
        %1092 = vmatprep.mubr.bf16.mxu0 0
        %1093 = vmatmul.mubr.bf16.gmra.mxu0 %v779
        %v1094 = vpop.f32.mrf.mxu0
        %v1095 = vadd.f32 %v890, %v1094
        %v1096 = vpop.f32.mrf.mxu0
        %v1097 = vpop.f32.mrf.mxu0
        %v1098 = vadd.f32 %v891, %v1097
        %v1099 = vpop.f32.mrf.mxu0
        %1100 = vdwg.mxu0
        %v1101 = vmax.f32 %v975, %v983
        %v1102 = vmax.f32 %v978, %v986
        %v1103 = vmax.f32 %v991, %v999
        %v1104 = vmax.f32 %v994, %v1002
        %v1105 = vmax.f32 %v1007, %v1015
        %v1106 = vmax.f32 %v1010, %v1018
        %v1107 = vmax.f32 %v1023, %v1031
        %v1108 = vmax.f32 %v1026, %v1034
        %v1109 = vmax.f32 %v1039, %v1047
        %v1110 = vmax.f32 %v1042, %v1050
        %v1111 = vmax.f32 %v1055, %v1063
        %v1112 = vmax.f32 %v1058, %v1066
        %v1113 = vmax.f32 %v1071, %v1079
        %v1114 = vmax.f32 %v1074, %v1082
        %v1115 = vmax.f32 %v1087, %v1095
        %v1116 = vmax.f32 %v1090, %v1098
        %v1117 = vmax.f32 %v1101, %v1103
        %v1118 = vmax.f32 %v1102, %v1104
        %v1119 = vmax.f32 %v1105, %v1107
        %v1120 = vmax.f32 %v1106, %v1108
        %v1121 = vmax.f32 %v1109, %v1111
        %v1122 = vmax.f32 %v1110, %v1112
        %v1123 = vmax.f32 %v1113, %v1115
        %v1124 = vmax.f32 %v1114, %v1116
        %v1125 = vmax.f32 %v1117, %v1119
        %v1126 = vmax.f32 %v1118, %v1120
        %v1127 = vmax.f32 %v1121, %v1123
        %v1128 = vmax.f32 %v1122, %v1124
        %v1129 = vmax.f32 %v1125, %v1127
        %v1130 = vmax.f32 %v1126, %v1128
        %v1131 = vsub.f32 %v975, %v1129
        %v1132 = vsub.f32 %v978, %v1130
        %v1133 = vmul.f32 %v1131, 1.442695
        %v1134 = vpow.pop %v1133
        %v1135 = vmul.f32 %v1132, 1.442695
        %v1136 = vpow.pop %v1135
        %v1137 = vld [vmem:[%s1] sm:$0xff]
        %v1138 = vld [vmem:[%s1 + $0x8] sm:$0xff]
        %v1139 = vmul.f32 %v1134, %v1137
        %v1140 = vmul.f32 %v1136, %v1138
        %v1141 = vlaneseq
        %v1142 = vshrl.u32 %v1141, 7
        %v1143 = vsub.s32 0, %v1142
        %v1144 = vrot.slane %v448, %v1143
        %v1145 = vmul.f32 %v1139, %v1144
        %v1146 = vmul.f32 %v1140, %v1144
        %v1147 = vsub.f32 %v983, %v1129
        %v1148 = vsub.f32 %v986, %v1130
        %v1149 = vmul.f32 %v1147, 1.442695
        %v1150 = vpow.pop %v1149
        %v1151 = vmul.f32 %v1148, 1.442695
        %v1152 = vpow.pop %v1151
        %v1153 = vld [vmem:[%s1 + $0x10] sm:$0xff]
        %v1154 = vld [vmem:[%s1 + $0x18] sm:$0xff]
        %v1155 = vmul.f32 %v1150, %v1153
        %v1156 = vmul.f32 %v1152, %v1154
        %v1157 = vlaneseq
        %v1158 = vshrl.u32 %v1157, 7
        %v1159 = vsub.s32 1, %v1158
        %v1160 = vrot.slane %v448, %v1159
        %v1161 = vmul.f32 %v1155, %v1160
        %v1162 = vmul.f32 %v1156, %v1160
        %v1163 = vsub.f32 %v991, %v1129
        %v1164 = vsub.f32 %v994, %v1130
        %v1165 = vmul.f32 %v1163, 1.442695
        %v1166 = vpow.pop %v1165
        %v1167 = vmul.f32 %v1164, 1.442695
        %v1168 = vpow.pop %v1167
        %v1169 = vld [vmem:[%s1 + $0x20] sm:$0xff]
        %v1170 = vld [vmem:[%s1 + $0x28] sm:$0xff]
        %v1171 = vmul.f32 %v1166, %v1169
        %v1172 = vmul.f32 %v1168, %v1170
        %v1173 = vlaneseq
        %v1174 = vshrl.u32 %v1173, 7
        %v1175 = vsub.s32 2, %v1174
        %v1176 = vrot.slane %v448, %v1175
        %v1177 = vmul.f32 %v1171, %v1176
        %v1178 = vmul.f32 %v1172, %v1176
        %v1179 = vsub.f32 %v999, %v1129
        %v1180 = vsub.f32 %v1002, %v1130
        %v1181 = vmul.f32 %v1179, 1.442695
        %v1182 = vpow.pop %v1181
        %v1183 = vmul.f32 %v1180, 1.442695
        %v1184 = vpow.pop %v1183
        %v1185 = vld [vmem:[%s1 + $0x30] sm:$0xff]
        %v1186 = vld [vmem:[%s1 + $0x38] sm:$0xff]
        %v1187 = vmul.f32 %v1182, %v1185
        %v1188 = vmul.f32 %v1184, %v1186
        %v1189 = vlaneseq
        %v1190 = vshrl.u32 %v1189, 7
        %v1191 = vsub.s32 3, %v1190
        %v1192 = vrot.slane %v448, %v1191
        %v1193 = vmul.f32 %v1187, %v1192
        %v1194 = vmul.f32 %v1188, %v1192
        %v1195 = vsub.f32 %v1007, %v1129
        %v1196 = vsub.f32 %v1010, %v1130
        %v1197 = vmul.f32 %v1195, 1.442695
        %v1198 = vpow.pop %v1197
        %v1199 = vmul.f32 %v1196, 1.442695
        %v1200 = vpow.pop %v1199
        %v1201 = vld [vmem:[%s1 + $0x40] sm:$0xff]
        %v1202 = vld [vmem:[%s1 + $0x48] sm:$0xff]
        %v1203 = vmul.f32 %v1198, %v1201
        %v1204 = vmul.f32 %v1200, %v1202
        %v1205 = vlaneseq
        %v1206 = vshrl.u32 %v1205, 7
        %v1207 = vsub.s32 4, %v1206
        %v1208 = vrot.slane %v448, %v1207
        %v1209 = vmul.f32 %v1203, %v1208
        %v1210 = vmul.f32 %v1204, %v1208
        %v1211 = vadd.f32 %v1139, %v1203
        %v1212 = vadd.f32 %v1140, %v1204
        %v1213 = vadd.f32 %v1145, %v1209
        %v1214 = vadd.f32 %v1146, %v1210
        %v1215 = vsub.f32 %v1015, %v1129
        %v1216 = vsub.f32 %v1018, %v1130
        %v1217 = vmul.f32 %v1215, 1.442695
        %v1218 = vpow.pop %v1217
        %v1219 = vmul.f32 %v1216, 1.442695
        %v1220 = vpow.pop %v1219
        %v1221 = vld [vmem:[%s1 + $0x50] sm:$0xff]
        %v1222 = vld [vmem:[%s1 + $0x58] sm:$0xff]
        %v1223 = vmul.f32 %v1218, %v1221
        %v1224 = vmul.f32 %v1220, %v1222
        %v1225 = vlaneseq
        %v1226 = vshrl.u32 %v1225, 7
        %v1227 = vsub.s32 5, %v1226
        %v1228 = vrot.slane %v448, %v1227
        %v1229 = vmul.f32 %v1223, %v1228
        %v1230 = vmul.f32 %v1224, %v1228
        %v1231 = vadd.f32 %v1155, %v1223
        %v1232 = vadd.f32 %v1156, %v1224
        %v1233 = vadd.f32 %v1161, %v1229
        %v1234 = vadd.f32 %v1162, %v1230
        %v1235 = vsub.f32 %v1023, %v1129
        %v1236 = vsub.f32 %v1026, %v1130
        %v1237 = vmul.f32 %v1235, 1.442695
        %v1238 = vpow.pop %v1237
        %v1239 = vmul.f32 %v1236, 1.442695
        %v1240 = vpow.pop %v1239
        %v1241 = vld [vmem:[%s1 + $0x60] sm:$0xff]
        %v1242 = vld [vmem:[%s1 + $0x68] sm:$0xff]
        %v1243 = vmul.f32 %v1238, %v1241
        %v1244 = vmul.f32 %v1240, %v1242
        %v1245 = vlaneseq
        %v1246 = vshrl.u32 %v1245, 7
        %v1247 = vsub.s32 6, %v1246
        %v1248 = vrot.slane %v448, %v1247
        %v1249 = vmul.f32 %v1243, %v1248
        %v1250 = vmul.f32 %v1244, %v1248
        %v1251 = vadd.f32 %v1171, %v1243
        %v1252 = vadd.f32 %v1172, %v1244
        %v1253 = vadd.f32 %v1177, %v1249
        %v1254 = vadd.f32 %v1178, %v1250
        %v1255 = vsub.f32 %v1031, %v1129
        %v1256 = vsub.f32 %v1034, %v1130
        %v1257 = vmul.f32 %v1255, 1.442695
        %v1258 = vpow.pop %v1257
        %v1259 = vmul.f32 %v1256, 1.442695
        %v1260 = vpow.pop %v1259
        %v1261 = vld [vmem:[%s1 + $0x70] sm:$0xff]
        %v1262 = vld [vmem:[%s1 + $0x78] sm:$0xff]
        %v1263 = vmul.f32 %v1258, %v1261
        %v1264 = vmul.f32 %v1260, %v1262
        %v1265 = vlaneseq
        %v1266 = vshrl.u32 %v1265, 7
        %v1267 = vsub.s32 7, %v1266
        %v1268 = vrot.slane %v448, %v1267
        %v1269 = vmul.f32 %v1263, %v1268
        %v1270 = vmul.f32 %v1264, %v1268
        %v1271 = vadd.f32 %v1187, %v1263
        %v1272 = vadd.f32 %v1188, %v1264
        %v1273 = vadd.f32 %v1193, %v1269
        %v1274 = vadd.f32 %v1194, %v1270
        %v1275 = vsub.f32 %v1039, %v1129
        %v1276 = vsub.f32 %v1042, %v1130
        %v1277 = vmul.f32 %v1275, 1.442695
        %v1278 = vpow.pop %v1277
        %v1279 = vmul.f32 %v1276, 1.442695
        %v1280 = vpow.pop %v1279
        %v1281 = vld [vmem:[%s1 + $0x80] sm:$0xff]
        %v1282 = vld [vmem:[%s1 + $0x88] sm:$0xff]
        %v1283 = vmul.f32 %v1278, %v1281
        %v1284 = vmul.f32 %v1280, %v1282
        %v1285 = vlaneseq
        %v1286 = vshrl.u32 %v1285, 7
        %v1287 = vsub.s32 0, %v1286
        %v1288 = vrot.slane %v449, %v1287
        %v1289 = vmul.f32 %v1283, %v1288
        %v1290 = vmul.f32 %v1284, %v1288
        %v1291 = vadd.f32 %v1211, %v1283
        %v1292 = vadd.f32 %v1212, %v1284
        %v1293 = vadd.f32 %v1213, %v1289
        %v1294 = vadd.f32 %v1214, %v1290
        %v1295 = vsub.f32 %v1047, %v1129
        %v1296 = vsub.f32 %v1050, %v1130
        %v1297 = vmul.f32 %v1295, 1.442695
        %v1298 = vpow.pop %v1297
        %v1299 = vmul.f32 %v1296, 1.442695
        %v1300 = vpow.pop %v1299
        %v1301 = vld [vmem:[%s1 + $0x90] sm:$0xff]
        %v1302 = vld [vmem:[%s1 + $0x98] sm:$0xff]
        %v1303 = vmul.f32 %v1298, %v1301
        %v1304 = vmul.f32 %v1300, %v1302
        %v1305 = vlaneseq
        %v1306 = vshrl.u32 %v1305, 7
        %v1307 = vsub.s32 1, %v1306
        %v1308 = vrot.slane %v449, %v1307
        %v1309 = vmul.f32 %v1303, %v1308
        %v1310 = vmul.f32 %v1304, %v1308
        %v1311 = vadd.f32 %v1231, %v1303
        %v1312 = vadd.f32 %v1232, %v1304
        %v1313 = vadd.f32 %v1233, %v1309
        %v1314 = vadd.f32 %v1234, %v1310
        %v1315 = vsub.f32 %v1055, %v1129
        %v1316 = vsub.f32 %v1058, %v1130
        %v1317 = vmul.f32 %v1315, 1.442695
        %v1318 = vpow.pop %v1317
        %v1319 = vmul.f32 %v1316, 1.442695
        %v1320 = vpow.pop %v1319
        %v1321 = vld [vmem:[%s1 + $0xa0] sm:$0xff]
        %v1322 = vld [vmem:[%s1 + $0xa8] sm:$0xff]
        %v1323 = vmul.f32 %v1318, %v1321
        %v1324 = vmul.f32 %v1320, %v1322
        %v1325 = vlaneseq
        %v1326 = vshrl.u32 %v1325, 7
        %v1327 = vsub.s32 2, %v1326
        %v1328 = vrot.slane %v449, %v1327
        %v1329 = vmul.f32 %v1323, %v1328
        %v1330 = vmul.f32 %v1324, %v1328
        %v1331 = vadd.f32 %v1251, %v1323
        %v1332 = vadd.f32 %v1252, %v1324
        %v1333 = vadd.f32 %v1253, %v1329
        %v1334 = vadd.f32 %v1254, %v1330
        %v1335 = vsub.f32 %v1063, %v1129
        %v1336 = vsub.f32 %v1066, %v1130
        %v1337 = vmul.f32 %v1335, 1.442695
        %v1338 = vpow.pop %v1337
        %v1339 = vmul.f32 %v1336, 1.442695
        %v1340 = vpow.pop %v1339
        %v1341 = vld [vmem:[%s1 + $0xb0] sm:$0xff]
        %v1342 = vld [vmem:[%s1 + $0xb8] sm:$0xff]
        %v1343 = vmul.f32 %v1338, %v1341
        %v1344 = vmul.f32 %v1340, %v1342
        %v1345 = vlaneseq
        %v1346 = vshrl.u32 %v1345, 7
        %v1347 = vsub.s32 3, %v1346
        %v1348 = vrot.slane %v449, %v1347
        %v1349 = vmul.f32 %v1343, %v1348
        %v1350 = vmul.f32 %v1344, %v1348
        %v1351 = vadd.f32 %v1271, %v1343
        %v1352 = vadd.f32 %v1272, %v1344
        %v1353 = vadd.f32 %v1273, %v1349
        %v1354 = vadd.f32 %v1274, %v1350
        %v1355 = vsub.f32 %v1071, %v1129
        %v1356 = vsub.f32 %v1074, %v1130
        %v1357 = vmul.f32 %v1355, 1.442695
        %v1358 = vpow.pop %v1357
        %v1359 = vmul.f32 %v1356, 1.442695
        %v1360 = vpow.pop %v1359
        %v1361 = vld [vmem:[%s1 + $0xc0] sm:$0xff]
        %v1362 = vld [vmem:[%s1 + $0xc8] sm:$0xff]
        %v1363 = vmul.f32 %v1358, %v1361
        %v1364 = vmul.f32 %v1360, %v1362
        %v1365 = vlaneseq
        %v1366 = vshrl.u32 %v1365, 7
        %v1367 = vsub.s32 4, %v1366
        %v1368 = vrot.slane %v449, %v1367
        %v1369 = vmul.f32 %v1363, %v1368
        %v1370 = vmul.f32 %v1364, %v1368
        %v1371 = vadd.f32 %v1291, %v1363
        %v1372 = vadd.f32 %v1292, %v1364
        %v1373 = vadd.f32 %v1293, %v1369
        %v1374 = vadd.f32 %v1294, %v1370
        %v1375 = vsub.f32 %v1079, %v1129
        %v1376 = vsub.f32 %v1082, %v1130
        %v1377 = vmul.f32 %v1375, 1.442695
        %v1378 = vpow.pop %v1377
        %v1379 = vmul.f32 %v1376, 1.442695
        %v1380 = vpow.pop %v1379
        %v1381 = vld [vmem:[%s1 + $0xd0] sm:$0xff]
        %v1382 = vld [vmem:[%s1 + $0xd8] sm:$0xff]
        %v1383 = vmul.f32 %v1378, %v1381
        %v1384 = vmul.f32 %v1380, %v1382
        %v1385 = vlaneseq
        %v1386 = vshrl.u32 %v1385, 7
        %v1387 = vsub.s32 5, %v1386
        %v1388 = vrot.slane %v449, %v1387
        %v1389 = vmul.f32 %v1383, %v1388
        %v1390 = vmul.f32 %v1384, %v1388
        %v1391 = vadd.f32 %v1311, %v1383
        %v1392 = vadd.f32 %v1312, %v1384
        %v1393 = vadd.f32 %v1313, %v1389
        %v1394 = vadd.f32 %v1314, %v1390
        %v1395 = vsub.f32 %v1087, %v1129
        %v1396 = vsub.f32 %v1090, %v1130
        %v1397 = vmul.f32 %v1395, 1.442695
        %v1398 = vpow.pop %v1397
        %v1399 = vmul.f32 %v1396, 1.442695
        %v1400 = vpow.pop %v1399
        %v1401 = vld [vmem:[%s1 + $0xe0] sm:$0xff]
        %v1402 = vld [vmem:[%s1 + $0xe8] sm:$0xff]
        %v1403 = vmul.f32 %v1398, %v1401
        %v1404 = vmul.f32 %v1400, %v1402
        %v1405 = vlaneseq
        %v1406 = vshrl.u32 %v1405, 7
        %v1407 = vsub.s32 6, %v1406
        %v1408 = vrot.slane %v449, %v1407
        %v1409 = vmul.f32 %v1403, %v1408
        %v1410 = vmul.f32 %v1404, %v1408
        %v1411 = vadd.f32 %v1331, %v1403
        %v1412 = vadd.f32 %v1332, %v1404
        %v1413 = vadd.f32 %v1333, %v1409
        %v1414 = vadd.f32 %v1334, %v1410
        %v1415 = vsub.f32 %v1095, %v1129
        %v1416 = vsub.f32 %v1098, %v1130
        %v1417 = vmul.f32 %v1415, 1.442695
        %v1418 = vpow.pop %v1417
        %v1419 = vmul.f32 %v1416, 1.442695
        %v1420 = vpow.pop %v1419
        %v1421 = vmul.f32 %v1418, %v826
        %v1422 = vmul.f32 %v1420, %v827
        %v1423 = vlaneseq
        %v1424 = vshrl.u32 %v1423, 7
        %v1425 = vsub.s32 7, %v1424
        %v1426 = vrot.slane %v449, %v1425
        %v1427 = vmul.f32 %v1421, %v1426
        %v1428 = vmul.f32 %v1422, %v1426
        %v1429 = vadd.f32 %v1351, %v1421
        %v1430 = vadd.f32 %v1352, %v1422
        %v1431 = vadd.f32 %v1353, %v1427
        %v1432 = vadd.f32 %v1354, %v1428
        %v1433 = vadd.f32 %v1371, %v1391
        %v1434 = vadd.f32 %v1372, %v1392
        %v1435 = vadd.f32 %v1411, %v1429
        %v1436 = vadd.f32 %v1412, %v1430
        %v1437 = vadd.f32 %v1433, %v1435
        %v1438 = vadd.f32 %v1434, %v1436
        %v1439 = vadd.f32 %v1373, %v1393
        %v1440 = vadd.f32 %v1374, %v1394
        %v1441 = vadd.f32 %v1413, %v1431
        %v1442 = vadd.f32 %v1414, %v1432
        %v1443 = vadd.f32 %v1439, %v1441
        %v1444 = vadd.f32 %v1440, %v1442
        %v1445 = vmax.f32 %v1437, 1e-30
        %v1446 = vmax.f32 %v1438, 1e-30
        %v1447 = vrcp.pop %v1445
        %v1448 = vrcp.pop %v1446
        %v1449 = vmul.f32 %v1443, %v1447
        %v1450 = vmul.f32 %v1444, %v1448
        %v1451 = vmax.f32 %v1449, 0.0
        %v1452 = vmax.f32 %v1450, 0.0
        %1453 = vadd.xlane.f32.xlu0 %v1451
        %v1454 = vpop.xlane.xlu0 %1453
        %1455 = vadd.xlane.f32.xlu0 %v1452
        %v1456 = vpop.xlane.xlu0 %1455
        %v1457 = vmul.f32 %v1454, 0.03125
        %v1458 = vmul.f32 %v1456, 0.03125
        %v1459 = vsub.f32 %v1451, %v1457
        %v1460 = vsub.f32 %v1452, %v1458
        %v1461 = vmul.f32 %v1459, %v297
        %v1462 = vmul.f32 %v1460, %v297
        %v1463 = vmul.f32 %v1461, %v1461
        %v1464 = vmul.f32 %v1462, %v1462
        %1465 = vadd.xlane.f32.xlu0 %v1463
        %v1466 = vpop.xlane.xlu0 %1465
        %1467 = vadd.xlane.f32.xlu0 %v1464
        %v1468 = vpop.xlane.xlu0 %1467
        %v1469 = vmul.f32 %v1466, 0.03125
        %v1470 = vmul.f32 %v1468, 0.03125
        %v1471 = vadd.f32 %v1469, 1e-05
        %v1472 = vadd.f32 %v1470, 1e-05
        %v1473 = vrsqrt.pop %v1471
        %v1474 = vrsqrt.pop %v1472
        %v1475 = vmul.f32 %v1461, %v1473
        %v1476 = vmul.f32 %v1462, %v1474
        %v1477 = vlaneseq
        %v1478 = vshrl.u32 %v1477, 7
        %v1479 = vsub.s32 0, %v1478
        %v1480 = vrot.slane %v302, %v1479
        %v1481 = vmul.f32 %v1475, %v1480
        %v1482 = vmul.f32 %v1476, %v1480
        %v1483 = vlaneseq
        %v1484 = vshrl.u32 %v1483, 7
        %v1485 = vsub.s32 0, %v1484
        %v1486 = vrot.slane %v303, %v1485
        %v1487 = vadd.f32 %v1481, %v1486
        %v1488 = vadd.f32 %v1482, %v1486
        %v1489 = vld [vmem:[%s2 + $0x4] sm:$0x1]
        %v1490 = vld [vmem:[%s2 + $0x5] sm:$0x1]
        %v1491 = vld [vmem:[%s2 + $0x6] sm:$0x1]
        %v1492 = vld [vmem:[%s2 + $0x7] sm:$0x1]
        %v1493 = vpack.c.bf16 %v1488, %v1487
        %v1494 = vld [vmem:[%s3 + $0x80] sm:$0xff]
        %v1495 = vld [vmem:[%s3 + $0x88] sm:$0xff]
        %v1496 = vld [vmem:[%s3 + $0x90] sm:$0xff]
        %v1497 = vld [vmem:[%s3 + $0x98] sm:$0xff]
        %v1498 = vld [vmem:[%s3 + $0xa0] sm:$0xff]
        %v1499 = vld [vmem:[%s3 + $0xa8] sm:$0xff]
        %v1500 = vld [vmem:[%s3 + $0xb0] sm:$0xff]
        %v1501 = vld [vmem:[%s3 + $0xb8] sm:$0xff]
        %v1502 = vld [vmem:[%s3 + $0xc0] sm:$0xff]
        %v1503 = vld [vmem:[%s3 + $0xc8] sm:$0xff]
        %v1504 = vld [vmem:[%s3 + $0xd0] sm:$0xff]
        %v1505 = vld [vmem:[%s3 + $0xd8] sm:$0xff]
        %v1506 = vld [vmem:[%s3 + $0xe0] sm:$0xff]
        %v1507 = vld [vmem:[%s3 + $0xe8] sm:$0xff]
        %v1508 = vld [vmem:[%s3 + $0xf0] sm:$0xff]
        %v1509 = vld [vmem:[%s3 + $0xf8] sm:$0xff]
        %v1526 = vunpack.c.l.b16 %v1494
        %v1527 = vunpack.c.h.b16 %v1494
        %v1528 = vunpack.c.l.b16 %v1495
        %v1529 = vunpack.c.h.b16 %v1495
        %v1530 = vunpack.c.l.b16 %v1496
        %v1531 = vunpack.c.h.b16 %v1496
        %v1532 = vunpack.c.l.b16 %v1497
        %v1533 = vunpack.c.h.b16 %v1497
        %v1534 = vunpack.c.l.b16 %v1498
        %v1535 = vunpack.c.h.b16 %v1498
        %v1536 = vunpack.c.l.b16 %v1499
        %v1537 = vunpack.c.h.b16 %v1499
        %v1538 = vunpack.c.l.b16 %v1500
        %v1539 = vunpack.c.h.b16 %v1500
        %v1540 = vunpack.c.l.b16 %v1501
        %v1541 = vunpack.c.h.b16 %v1501
        %v1542 = vunpack.c.l.b16 %v1502
        %v1543 = vunpack.c.h.b16 %v1502
        %v1544 = vunpack.c.l.b16 %v1503
        %v1545 = vunpack.c.h.b16 %v1503
        %v1546 = vunpack.c.l.b16 %v1504
        %v1547 = vunpack.c.h.b16 %v1504
        %v1548 = vunpack.c.l.b16 %v1505
        %v1549 = vunpack.c.h.b16 %v1505
        %v1550 = vunpack.c.l.b16 %v1506
        %v1551 = vunpack.c.h.b16 %v1506
        %v1552 = vunpack.c.l.b16 %v1507
        %v1553 = vunpack.c.h.b16 %v1507
        %v1554 = vunpack.c.l.b16 %v1508
        %v1555 = vunpack.c.h.b16 %v1508
        %v1556 = vunpack.c.l.b16 %v1509
        %v1557 = vunpack.c.h.b16 %v1509
        %v1558 = vpack.c.b16 %v1528, %v1526
        %v1559 = vpack.c.b16 %v1529, %v1527
        %v1560 = vpack.c.b16 %v1532, %v1530
        %v1561 = vpack.c.b16 %v1533, %v1531
        %v1562 = vpack.c.b16 %v1536, %v1534
        %v1563 = vpack.c.b16 %v1537, %v1535
        %v1564 = vpack.c.b16 %v1540, %v1538
        %v1565 = vpack.c.b16 %v1541, %v1539
        %v1566 = vpack.c.b16 %v1544, %v1542
        %v1567 = vpack.c.b16 %v1545, %v1543
        %v1568 = vpack.c.b16 %v1548, %v1546
        %v1569 = vpack.c.b16 %v1549, %v1547
        %v1570 = vpack.c.b16 %v1552, %v1550
        %v1571 = vpack.c.b16 %v1553, %v1551
        %v1572 = vpack.c.b16 %v1556, %v1554
        %v1573 = vpack.c.b16 %v1557, %v1555
        %1590 = vmatprep.subr.bf16.mxu0 %v1573
        %1591 = vmatpush1.bf16.msra.mxu0 %v1572
        %1592 = vmatprep.subr.bf16.mxu0 %v1571
        %1593 = vmatpush1.bf16.msra.mxu0 %v1570
        %1594 = vmatprep.subr.bf16.mxu0 %v1569
        %1595 = vmatpush1.bf16.msra.mxu0 %v1568
        %1596 = vmatprep.subr.bf16.mxu0 %v1567
        %1597 = vmatpush1.bf16.msra.mxu0 %v1566
        %1598 = vmatprep.subr.bf16.mxu0 %v1565
        %1599 = vmatpush1.bf16.msra.mxu0 %v1564
        %1600 = vmatprep.subr.bf16.mxu0 %v1563
        %1601 = vmatpush1.bf16.msra.mxu0 %v1562
        %1602 = vmatprep.subr.bf16.mxu0 %v1561
        %1603 = vmatpush1.bf16.msra.mxu0 %v1560
        %1604 = vmatprep.subr.bf16.mxu0 %v1559
        %1605 = vmatpush1.bf16.msra.mxu0 %v1558
        %1606 = vmatprep.subr.bf16.mxu0 0
        %1607 = vmatpush2.bf16.msra.mxu0 0
        %1608 = vmatprep.subr.bf16.mxu0 0
        %1609 = vmatpush2.bf16.msra.mxu0 0
        %1610 = vmatprep.subr.bf16.mxu0 0
        %1611 = vmatpush2.bf16.msra.mxu0 0
        %1612 = vmatprep.subr.bf16.mxu0 0
        %1613 = vmatpush2.bf16.msra.mxu0 0
        %1614 = vmatprep.subr.bf16.mxu0 0
        %1615 = vmatpush2.bf16.msra.mxu0 0
        %1616 = vmatprep.subr.bf16.mxu0 0
        %1617 = vmatpush2.bf16.msra.mxu0 0
        %1618 = vmatprep.subr.bf16.mxu0 0
        %1619 = vmatpush2.bf16.msra.mxu0 0
        %1620 = vmatprep.subr.bf16.mxu0 0
        %1621 = vmatpush2.bf16.msra.mxu0 0
        %1622 = vmatprep.mubr.bf16.mxu0 0
        %1623 = vmatmul.mubr.bf16.gmra.mxu0 %v1493
        %v1624 = vpop.f32.mrf.mxu0
        %v1625 = vadd.f32 0.0, %v1624
        %v1626 = vpop.f32.mrf.mxu0
        %v1627 = vadd.f32 0.0, %v1626
        %v1628 = vpop.f32.mrf.mxu0
        %v1629 = vadd.f32 0.0, %v1628
        %v1630 = vpop.f32.mrf.mxu0
        %v1631 = vadd.f32 0.0, %v1630
        %1632 = vdwg.mxu0
        %v1633 = vlaneseq
        %v1634 = vshrl.u32 %v1633, 7
        %v1635 = vsub.s32 0, %v1634
        %v1636 = vrot.slane %v1489, %v1635
        %v1637 = vadd.f32 %v1625, %v1636
        %v1638 = vadd.f32 %v1629, %v1636
        %v1639 = vlaneseq
        %v1640 = vshrl.u32 %v1639, 7
        %v1641 = vsub.s32 0, %v1640
        %v1642 = vrot.slane %v1490, %v1641
        %v1643 = vadd.f32 %v1627, %v1642
        %v1644 = vadd.f32 %v1631, %v1642
        %v1647 = vcombine.high %v1637, %v1637
        %v1649 = vunpack.c.l.s4 1966171168
        %v1650 = vunpack.c.0.s8 %v1649
        %v1651 = vlaneseq
        %v1652 = vshrl.u32 %v1651, 7
        %v1653 = vsub.s32 %v1650, %v1652
        %v1654 = vrot.slane %v1637, %v1653
        %v1656 = vunpack.c.l.s4 1966171168
        %v1657 = vunpack.c.0.s8 %v1656
        %v1658 = vlaneseq
        %v1659 = vshrl.u32 %v1658, 7
        %v1660 = vsub.s32 %v1657, %v1659
        %v1661 = vrot.slane %v1647, %v1660
        %v1662 = vcombine.high %v1654, %v1654
        %v1663 = vcombine.high %v1661, %v1661
        %v1665 = vunpack.c.l.s4 1966171168
        %v1666 = vunpack.c.0.s8 %v1665
        %v1667 = vlaneseq
        %v1668 = vshrl.u32 %v1667, 7
        %v1669 = vsub.s32 %v1666, %v1668
        %v1670 = vrot.slane %v1654, %v1669
        %v1672 = vunpack.c.l.s4 1966171168
        %v1673 = vunpack.c.0.s8 %v1672
        %v1674 = vlaneseq
        %v1675 = vshrl.u32 %v1674, 7
        %v1676 = vsub.s32 %v1673, %v1675
        %v1677 = vrot.slane %v1661, %v1676
        %v1679 = vunpack.c.l.s4 1966171168
        %v1680 = vunpack.c.0.s8 %v1679
        %v1681 = vlaneseq
        %v1682 = vshrl.u32 %v1681, 7
        %v1683 = vsub.s32 %v1680, %v1682
        %v1684 = vrot.slane %v1662, %v1683
        %v1686 = vunpack.c.l.s4 1966171168
        %v1687 = vunpack.c.0.s8 %v1686
        %v1688 = vlaneseq
        %v1689 = vshrl.u32 %v1688, 7
        %v1690 = vsub.s32 %v1687, %v1689
        %v1691 = vrot.slane %v1663, %v1690
        %v1692 = vcombine.high %v1670, %v1670
        %v1693 = vcombine.high %v1677, %v1677
        %v1694 = vcombine.high %v1684, %v1684
        %v1695 = vcombine.high %v1691, %v1691
        %v1696 = vcombine.high %v1638, %v1638
        %v1698 = vunpack.c.l.s4 1966171168
        %v1699 = vunpack.c.0.s8 %v1698
        %v1700 = vlaneseq
        %v1701 = vshrl.u32 %v1700, 7
        %v1702 = vsub.s32 %v1699, %v1701
        %v1703 = vrot.slane %v1638, %v1702
        %v1705 = vunpack.c.l.s4 1966171168
        %v1706 = vunpack.c.0.s8 %v1705
        %v1707 = vlaneseq
        %v1708 = vshrl.u32 %v1707, 7
        %v1709 = vsub.s32 %v1706, %v1708
        %v1710 = vrot.slane %v1696, %v1709
        %v1711 = vcombine.high %v1703, %v1703
        %v1712 = vcombine.high %v1710, %v1710
        %v1714 = vunpack.c.l.s4 1966171168
        %v1715 = vunpack.c.0.s8 %v1714
        %v1716 = vlaneseq
        %v1717 = vshrl.u32 %v1716, 7
        %v1718 = vsub.s32 %v1715, %v1717
        %v1719 = vrot.slane %v1703, %v1718
        %v1721 = vunpack.c.l.s4 1966171168
        %v1722 = vunpack.c.0.s8 %v1721
        %v1723 = vlaneseq
        %v1724 = vshrl.u32 %v1723, 7
        %v1725 = vsub.s32 %v1722, %v1724
        %v1726 = vrot.slane %v1710, %v1725
        %v1728 = vunpack.c.l.s4 1966171168
        %v1729 = vunpack.c.0.s8 %v1728
        %v1730 = vlaneseq
        %v1731 = vshrl.u32 %v1730, 7
        %v1732 = vsub.s32 %v1729, %v1731
        %v1733 = vrot.slane %v1711, %v1732
        %v1735 = vunpack.c.l.s4 1966171168
        %v1736 = vunpack.c.0.s8 %v1735
        %v1737 = vlaneseq
        %v1738 = vshrl.u32 %v1737, 7
        %v1739 = vsub.s32 %v1736, %v1738
        %v1740 = vrot.slane %v1712, %v1739
        %v1741 = vcombine.high %v1719, %v1719
        %v1742 = vcombine.high %v1726, %v1726
        %v1743 = vcombine.high %v1733, %v1733
        %v1744 = vcombine.high %v1740, %v1740
        %v1745 = vlaneseq
        %v1746 = vshrl.u32 %v1745, 7
        %v1747 = vsub.s32 0, %v1746
        %v1748 = vrot.slane %v1670, %v1747
        %v1749 = vlaneseq
        %v1750 = vshrl.u32 %v1749, 7
        %v1751 = vsub.s32 0, %v1750
        %v1752 = vrot.slane %v1684, %v1751
        %v1753 = vlaneseq
        %v1754 = vshrl.u32 %v1753, 7
        %v1755 = vsub.s32 0, %v1754
        %v1756 = vrot.slane %v1692, %v1755
        %v1757 = vlaneseq
        %v1758 = vshrl.u32 %v1757, 7
        %v1759 = vsub.s32 0, %v1758
        %v1760 = vrot.slane %v1694, %v1759
        %v1761 = vlaneseq
        %v1762 = vshrl.u32 %v1761, 7
        %v1763 = vsub.s32 0, %v1762
        %v1764 = vrot.slane %v1677, %v1763
        %v1765 = vlaneseq
        %v1766 = vshrl.u32 %v1765, 7
        %v1767 = vsub.s32 0, %v1766
        %v1768 = vrot.slane %v1691, %v1767
        %v1769 = vlaneseq
        %v1770 = vshrl.u32 %v1769, 7
        %v1771 = vsub.s32 0, %v1770
        %v1772 = vrot.slane %v1693, %v1771
        %v1773 = vlaneseq
        %v1774 = vshrl.u32 %v1773, 7
        %v1775 = vsub.s32 0, %v1774
        %v1776 = vrot.slane %v1695, %v1775
        %v1777 = vlaneseq
        %v1778 = vshrl.u32 %v1777, 7
        %v1779 = vsub.s32 0, %v1778
        %v1780 = vrot.slane %v1719, %v1779
        %v1781 = vlaneseq
        %v1782 = vshrl.u32 %v1781, 7
        %v1783 = vsub.s32 0, %v1782
        %v1784 = vrot.slane %v1733, %v1783
        %v1785 = vlaneseq
        %v1786 = vshrl.u32 %v1785, 7
        %v1787 = vsub.s32 0, %v1786
        %v1788 = vrot.slane %v1741, %v1787
        %v1789 = vlaneseq
        %v1790 = vshrl.u32 %v1789, 7
        %v1791 = vsub.s32 0, %v1790
        %v1792 = vrot.slane %v1743, %v1791
        %v1793 = vlaneseq
        %v1794 = vshrl.u32 %v1793, 7
        %v1795 = vsub.s32 0, %v1794
        %v1796 = vrot.slane %v1726, %v1795
        %v1797 = vlaneseq
        %v1798 = vshrl.u32 %v1797, 7
        %v1799 = vsub.s32 0, %v1798
        %v1800 = vrot.slane %v1740, %v1799
        %v1801 = vlaneseq
        %v1802 = vshrl.u32 %v1801, 7
        %v1803 = vsub.s32 0, %v1802
        %v1804 = vrot.slane %v1742, %v1803
        %v1805 = vlaneseq
        %v1806 = vshrl.u32 %v1805, 7
        %v1807 = vsub.s32 0, %v1806
        %v1808 = vrot.slane %v1744, %v1807
        %v1825 = vadd.f32 %v1748, %v1643
        %v1826 = vadd.f32 %v1748, %v1644
        %v1827 = vadd.f32 %v1752, %v1643
        %v1828 = vadd.f32 %v1752, %v1644
        %v1829 = vadd.f32 %v1756, %v1643
        %v1830 = vadd.f32 %v1756, %v1644
        %v1831 = vadd.f32 %v1760, %v1643
        %v1832 = vadd.f32 %v1760, %v1644
        %v1833 = vadd.f32 %v1764, %v1643
        %v1834 = vadd.f32 %v1764, %v1644
        %v1835 = vadd.f32 %v1768, %v1643
        %v1836 = vadd.f32 %v1768, %v1644
        %v1837 = vadd.f32 %v1772, %v1643
        %v1838 = vadd.f32 %v1772, %v1644
        %v1839 = vadd.f32 %v1776, %v1643
        %v1840 = vadd.f32 %v1776, %v1644
        %v1841 = vadd.f32 %v1780, %v1643
        %v1842 = vadd.f32 %v1780, %v1644
        %v1843 = vadd.f32 %v1784, %v1643
        %v1844 = vadd.f32 %v1784, %v1644
        %v1845 = vadd.f32 %v1788, %v1643
        %v1846 = vadd.f32 %v1788, %v1644
        %v1847 = vadd.f32 %v1792, %v1643
        %v1848 = vadd.f32 %v1792, %v1644
        %v1849 = vadd.f32 %v1796, %v1643
        %v1850 = vadd.f32 %v1796, %v1644
        %v1851 = vadd.f32 %v1800, %v1643
        %v1852 = vadd.f32 %v1800, %v1644
        %v1853 = vadd.f32 %v1804, %v1643
        %v1854 = vadd.f32 %v1804, %v1644
        %v1855 = vadd.f32 %v1808, %v1643
        %v1856 = vadd.f32 %v1808, %v1644
        %vm1857 = vcmp.ge.f32.partialorder %v1825, 0.0
        %vm1858 = vcmp.ge.f32.partialorder %v1826, 0.0
        %vm1859 = vcmp.ge.f32.partialorder %v1827, 0.0
        %vm1860 = vcmp.ge.f32.partialorder %v1828, 0.0
        %vm1861 = vcmp.ge.f32.partialorder %v1829, 0.0
        %vm1862 = vcmp.ge.f32.partialorder %v1830, 0.0
        %vm1863 = vcmp.ge.f32.partialorder %v1831, 0.0
        %vm1864 = vcmp.ge.f32.partialorder %v1832, 0.0
        %vm1865 = vcmp.ge.f32.partialorder %v1833, 0.0
        %vm1866 = vcmp.ge.f32.partialorder %v1834, 0.0
        %vm1867 = vcmp.ge.f32.partialorder %v1835, 0.0
        %vm1868 = vcmp.ge.f32.partialorder %v1836, 0.0
        %vm1869 = vcmp.ge.f32.partialorder %v1837, 0.0
        %vm1870 = vcmp.ge.f32.partialorder %v1838, 0.0
        %vm1871 = vcmp.ge.f32.partialorder %v1839, 0.0
        %vm1872 = vcmp.ge.f32.partialorder %v1840, 0.0
        %vm1873 = vcmp.ge.f32.partialorder %v1841, 0.0
        %vm1874 = vcmp.ge.f32.partialorder %v1842, 0.0
        %vm1875 = vcmp.ge.f32.partialorder %v1843, 0.0
        %vm1876 = vcmp.ge.f32.partialorder %v1844, 0.0
        %vm1877 = vcmp.ge.f32.partialorder %v1845, 0.0
        %vm1878 = vcmp.ge.f32.partialorder %v1846, 0.0
        %vm1879 = vcmp.ge.f32.partialorder %v1847, 0.0
        %vm1880 = vcmp.ge.f32.partialorder %v1848, 0.0
        %vm1881 = vcmp.ge.f32.partialorder %v1849, 0.0
        %vm1882 = vcmp.ge.f32.partialorder %v1850, 0.0
        %vm1883 = vcmp.ge.f32.partialorder %v1851, 0.0
        %vm1884 = vcmp.ge.f32.partialorder %v1852, 0.0
        %vm1885 = vcmp.ge.f32.partialorder %v1853, 0.0
        %vm1886 = vcmp.ge.f32.partialorder %v1854, 0.0
        %vm1887 = vcmp.ge.f32.partialorder %v1855, 0.0
        %vm1888 = vcmp.ge.f32.partialorder %v1856, 0.0
        %v1889 = vmul.f32 %v1825, 0.2
        %v1890 = vmul.f32 %v1826, 0.2
        %v1891 = vmul.f32 %v1827, 0.2
        %v1892 = vmul.f32 %v1828, 0.2
        %v1893 = vmul.f32 %v1829, 0.2
        %v1894 = vmul.f32 %v1830, 0.2
        %v1895 = vmul.f32 %v1831, 0.2
        %v1896 = vmul.f32 %v1832, 0.2
        %v1897 = vmul.f32 %v1833, 0.2
        %v1898 = vmul.f32 %v1834, 0.2
        %v1899 = vmul.f32 %v1835, 0.2
        %v1900 = vmul.f32 %v1836, 0.2
        %v1901 = vmul.f32 %v1837, 0.2
        %v1902 = vmul.f32 %v1838, 0.2
        %v1903 = vmul.f32 %v1839, 0.2
        %v1904 = vmul.f32 %v1840, 0.2
        %v1905 = vmul.f32 %v1841, 0.2
        %v1906 = vmul.f32 %v1842, 0.2
        %v1907 = vmul.f32 %v1843, 0.2
        %v1908 = vmul.f32 %v1844, 0.2
        %v1909 = vmul.f32 %v1845, 0.2
        %v1910 = vmul.f32 %v1846, 0.2
        %v1911 = vmul.f32 %v1847, 0.2
        %v1912 = vmul.f32 %v1848, 0.2
        %v1913 = vmul.f32 %v1849, 0.2
        %v1914 = vmul.f32 %v1850, 0.2
        %v1915 = vmul.f32 %v1851, 0.2
        %v1916 = vmul.f32 %v1852, 0.2
        %v1917 = vmul.f32 %v1853, 0.2
        %v1918 = vmul.f32 %v1854, 0.2
        %v1919 = vmul.f32 %v1855, 0.2
        %v1920 = vmul.f32 %v1856, 0.2
        %v1921 = vsel %vm1857, %v1825, %v1889
        %v1922 = vsel %vm1858, %v1826, %v1890
        %v1923 = vsel %vm1859, %v1827, %v1891
        %v1924 = vsel %vm1860, %v1828, %v1892
        %v1925 = vsel %vm1861, %v1829, %v1893
        %v1926 = vsel %vm1862, %v1830, %v1894
        %v1927 = vsel %vm1863, %v1831, %v1895
        %v1928 = vsel %vm1864, %v1832, %v1896
        %v1929 = vsel %vm1865, %v1833, %v1897
        %v1930 = vsel %vm1866, %v1834, %v1898
        %v1931 = vsel %vm1867, %v1835, %v1899
        %v1932 = vsel %vm1868, %v1836, %v1900
        %v1933 = vsel %vm1869, %v1837, %v1901
        %v1934 = vsel %vm1870, %v1838, %v1902
        %v1935 = vsel %vm1871, %v1839, %v1903
        %v1936 = vsel %vm1872, %v1840, %v1904
        %v1937 = vsel %vm1873, %v1841, %v1905
        %v1938 = vsel %vm1874, %v1842, %v1906
        %v1939 = vsel %vm1875, %v1843, %v1907
        %v1940 = vsel %vm1876, %v1844, %v1908
        %v1941 = vsel %vm1877, %v1845, %v1909
        %v1942 = vsel %vm1878, %v1846, %v1910
        %v1943 = vsel %vm1879, %v1847, %v1911
        %v1944 = vsel %vm1880, %v1848, %v1912
        %v1945 = vsel %vm1881, %v1849, %v1913
        %v1946 = vsel %vm1882, %v1850, %v1914
        %v1947 = vsel %vm1883, %v1851, %v1915
        %v1948 = vsel %vm1884, %v1852, %v1916
        %v1949 = vsel %vm1885, %v1853, %v1917
        %v1950 = vsel %vm1886, %v1854, %v1918
        %v1951 = vsel %vm1887, %v1855, %v1919
        %v1952 = vsel %vm1888, %v1856, %v1920
        %v1953 = vpack.c.bf16 %v1922, %v1921
        %v1954 = vpack.c.bf16 %v1924, %v1923
        %v1955 = vpack.c.bf16 %v1926, %v1925
        %v1956 = vpack.c.bf16 %v1928, %v1927
        %v1957 = vpack.c.bf16 %v1930, %v1929
        %v1958 = vpack.c.bf16 %v1932, %v1931
        %v1959 = vpack.c.bf16 %v1934, %v1933
        %v1960 = vpack.c.bf16 %v1936, %v1935
        %v1961 = vpack.c.bf16 %v1938, %v1937
        %v1962 = vpack.c.bf16 %v1940, %v1939
        %v1963 = vpack.c.bf16 %v1942, %v1941
        %v1964 = vpack.c.bf16 %v1944, %v1943
        %v1965 = vpack.c.bf16 %v1946, %v1945
        %v1966 = vpack.c.bf16 %v1948, %v1947
        %v1967 = vpack.c.bf16 %v1950, %v1949
        %v1968 = vpack.c.bf16 %v1952, %v1951
        %v1969 = vld [vmem:[%s4 + $0x40] sm:$0xf]
        %v1970 = vld [vmem:[%s4 + $0x44] sm:$0xf]
        %v1971 = vld [vmem:[%s4 + $0x48] sm:$0xf]
        %v1972 = vld [vmem:[%s4 + $0x4c] sm:$0xf]
        %v1973 = vld [vmem:[%s4 + $0x50] sm:$0xf]
        %v1974 = vld [vmem:[%s4 + $0x54] sm:$0xf]
        %v1975 = vld [vmem:[%s4 + $0x58] sm:$0xf]
        %v1976 = vld [vmem:[%s4 + $0x5c] sm:$0xf]
        %v1977 = vld [vmem:[%s4 + $0x60] sm:$0xf]
        %v1978 = vld [vmem:[%s4 + $0x64] sm:$0xf]
        %v1979 = vld [vmem:[%s4 + $0x68] sm:$0xf]
        %v1980 = vld [vmem:[%s4 + $0x6c] sm:$0xf]
        %v1981 = vld [vmem:[%s4 + $0x70] sm:$0xf]
        %v1982 = vld [vmem:[%s4 + $0x74] sm:$0xf]
        %v1983 = vld [vmem:[%s4 + $0x78] sm:$0xf]
        %v1984 = vld [vmem:[%s4 + $0x7c] sm:$0xf]
        %v2001 = vunpack.c.l.b16 %v1969
        %v2002 = vunpack.c.l.b16 %v1970
        %v2003 = vunpack.c.l.b16 %v1971
        %v2004 = vunpack.c.l.b16 %v1972
        %v2005 = vunpack.c.l.b16 %v1973
        %v2006 = vunpack.c.l.b16 %v1974
        %v2007 = vunpack.c.l.b16 %v1975
        %v2008 = vunpack.c.l.b16 %v1976
        %v2009 = vunpack.c.l.b16 %v1977
        %v2010 = vunpack.c.l.b16 %v1978
        %v2011 = vunpack.c.l.b16 %v1979
        %v2012 = vunpack.c.l.b16 %v1980
        %v2013 = vunpack.c.l.b16 %v1981
        %v2014 = vunpack.c.l.b16 %v1982
        %v2015 = vunpack.c.l.b16 %v1983
        %v2016 = vunpack.c.l.b16 %v1984
        %v2017 = vpack.c.b16 %v2002, %v2001
        %v2018 = vpack.c.b16 %v2004, %v2003
        %v2019 = vpack.c.b16 %v2006, %v2005
        %v2020 = vpack.c.b16 %v2008, %v2007
        %v2021 = vpack.c.b16 %v2010, %v2009
        %v2022 = vpack.c.b16 %v2012, %v2011
        %v2023 = vpack.c.b16 %v2014, %v2013
        %v2024 = vpack.c.b16 %v2016, %v2015
        %2033 = vmatprep.subr.bf16.mxu0 0
        %2034 = vmatpush1.bf16.msra.mxu0 %v2024
        %2035 = vmatprep.subr.bf16.mxu0 0
        %2036 = vmatpush1.bf16.msra.mxu0 %v2023
        %2037 = vmatprep.subr.bf16.mxu0 0
        %2038 = vmatpush1.bf16.msra.mxu0 %v2022
        %2039 = vmatprep.subr.bf16.mxu0 0
        %2040 = vmatpush1.bf16.msra.mxu0 %v2021
        %2041 = vmatprep.subr.bf16.mxu0 0
        %2042 = vmatpush1.bf16.msra.mxu0 %v2020
        %2043 = vmatprep.subr.bf16.mxu0 0
        %2044 = vmatpush1.bf16.msra.mxu0 %v2019
        %2045 = vmatprep.subr.bf16.mxu0 0
        %2046 = vmatpush1.bf16.msra.mxu0 %v2018
        %2047 = vmatprep.subr.bf16.mxu0 0
        %2048 = vmatpush1.bf16.msra.mxu0 %v2017
        %2049 = vmatprep.subr.bf16.mxu0 0
        %2050 = vmatpush2.bf16.msra.mxu0 0
        %2051 = vmatprep.subr.bf16.mxu0 0
        %2052 = vmatpush2.bf16.msra.mxu0 0
        %2053 = vmatprep.subr.bf16.mxu0 0
        %2054 = vmatpush2.bf16.msra.mxu0 0
        %2055 = vmatprep.subr.bf16.mxu0 0
        %2056 = vmatpush2.bf16.msra.mxu0 0
        %2057 = vmatprep.subr.bf16.mxu0 0
        %2058 = vmatpush2.bf16.msra.mxu0 0
        %2059 = vmatprep.subr.bf16.mxu0 0
        %2060 = vmatpush2.bf16.msra.mxu0 0
        %2061 = vmatprep.subr.bf16.mxu0 0
        %2062 = vmatpush2.bf16.msra.mxu0 0
        %2063 = vmatprep.subr.bf16.mxu0 0
        %2064 = vmatpush2.bf16.msra.mxu0 0
        %2065 = vmatprep.mubr.bf16.mxu0 0
        %2066 = vmatmul.mubr.bf16.gmra.mxu0 %v1953
        %v2067 = vpop.f32.mrf.mxu0
        %v2068 = vadd.f32 %v860, %v2067
        %v2069 = vpop.f32.mrf.mxu0
        %v2070 = vpop.f32.mrf.mxu0
        %v2071 = vadd.f32 %v861, %v2070
        %v2072 = vpop.f32.mrf.mxu0
        %2073 = vmatprep.mubr.bf16.mxu0 0
        %2074 = vmatmul.mubr.bf16.gmra.mxu0 %v1954
        %v2075 = vpop.f32.mrf.mxu0
        %v2076 = vadd.f32 %v862, %v2075
        %v2077 = vpop.f32.mrf.mxu0
        %v2078 = vpop.f32.mrf.mxu0
        %v2079 = vadd.f32 %v863, %v2078
        %v2080 = vpop.f32.mrf.mxu0
        %2081 = vmatprep.mubr.bf16.mxu0 0
        %2082 = vmatmul.mubr.bf16.gmra.mxu0 %v1955
        %v2083 = vpop.f32.mrf.mxu0
        %v2084 = vadd.f32 %v864, %v2083
        %v2085 = vpop.f32.mrf.mxu0
        %v2086 = vpop.f32.mrf.mxu0
        %v2087 = vadd.f32 %v865, %v2086
        %v2088 = vpop.f32.mrf.mxu0
        %2089 = vmatprep.mubr.bf16.mxu0 0
        %2090 = vmatmul.mubr.bf16.gmra.mxu0 %v1956
        %v2091 = vpop.f32.mrf.mxu0
        %v2092 = vadd.f32 %v866, %v2091
        %v2093 = vpop.f32.mrf.mxu0
        %v2094 = vpop.f32.mrf.mxu0
        %v2095 = vadd.f32 %v867, %v2094
        %v2096 = vpop.f32.mrf.mxu0
        %2097 = vmatprep.mubr.bf16.mxu0 0
        %2098 = vmatmul.mubr.bf16.gmra.mxu0 %v1957
        %v2099 = vpop.f32.mrf.mxu0
        %v2100 = vadd.f32 %v868, %v2099
        %v2101 = vpop.f32.mrf.mxu0
        %v2102 = vpop.f32.mrf.mxu0
        %v2103 = vadd.f32 %v869, %v2102
        %v2104 = vpop.f32.mrf.mxu0
        %2105 = vmatprep.mubr.bf16.mxu0 0
        %2106 = vmatmul.mubr.bf16.gmra.mxu0 %v1958
        %v2107 = vpop.f32.mrf.mxu0
        %v2108 = vadd.f32 %v870, %v2107
        %v2109 = vpop.f32.mrf.mxu0
        %v2110 = vpop.f32.mrf.mxu0
        %v2111 = vadd.f32 %v871, %v2110
        %v2112 = vpop.f32.mrf.mxu0
        %2113 = vmatprep.mubr.bf16.mxu0 0
        %2114 = vmatmul.mubr.bf16.gmra.mxu0 %v1959
        %v2115 = vpop.f32.mrf.mxu0
        %v2116 = vadd.f32 %v872, %v2115
        %v2117 = vpop.f32.mrf.mxu0
        %v2118 = vpop.f32.mrf.mxu0
        %v2119 = vadd.f32 %v873, %v2118
        %v2120 = vpop.f32.mrf.mxu0
        %2121 = vmatprep.mubr.bf16.mxu0 0
        %2122 = vmatmul.mubr.bf16.gmra.mxu0 %v1960
        %v2123 = vpop.f32.mrf.mxu0
        %v2124 = vadd.f32 %v874, %v2123
        %v2125 = vpop.f32.mrf.mxu0
        %v2126 = vpop.f32.mrf.mxu0
        %v2127 = vadd.f32 %v875, %v2126
        %v2128 = vpop.f32.mrf.mxu0
        %2129 = vmatprep.mubr.bf16.mxu0 0
        %2130 = vmatmul.mubr.bf16.gmra.mxu0 %v1961
        %v2131 = vpop.f32.mrf.mxu0
        %v2132 = vadd.f32 %v876, %v2131
        %v2133 = vpop.f32.mrf.mxu0
        %v2134 = vpop.f32.mrf.mxu0
        %v2135 = vadd.f32 %v877, %v2134
        %v2136 = vpop.f32.mrf.mxu0
        %2137 = vmatprep.mubr.bf16.mxu0 0
        %2138 = vmatmul.mubr.bf16.gmra.mxu0 %v1962
        %v2139 = vpop.f32.mrf.mxu0
        %v2140 = vadd.f32 %v878, %v2139
        %v2141 = vpop.f32.mrf.mxu0
        %v2142 = vpop.f32.mrf.mxu0
        %v2143 = vadd.f32 %v879, %v2142
        %v2144 = vpop.f32.mrf.mxu0
        %2145 = vmatprep.mubr.bf16.mxu0 0
        %2146 = vmatmul.mubr.bf16.gmra.mxu0 %v1963
        %v2147 = vpop.f32.mrf.mxu0
        %v2148 = vadd.f32 %v880, %v2147
        %v2149 = vpop.f32.mrf.mxu0
        %v2150 = vpop.f32.mrf.mxu0
        %v2151 = vadd.f32 %v881, %v2150
        %v2152 = vpop.f32.mrf.mxu0
        %2153 = vmatprep.mubr.bf16.mxu0 0
        %2154 = vmatmul.mubr.bf16.gmra.mxu0 %v1964
        %v2155 = vpop.f32.mrf.mxu0
        %v2156 = vadd.f32 %v882, %v2155
        %v2157 = vpop.f32.mrf.mxu0
        %v2158 = vpop.f32.mrf.mxu0
        %v2159 = vadd.f32 %v883, %v2158
        %v2160 = vpop.f32.mrf.mxu0
        %2161 = vmatprep.mubr.bf16.mxu0 0
        %2162 = vmatmul.mubr.bf16.gmra.mxu0 %v1965
        %v2163 = vpop.f32.mrf.mxu0
        %v2164 = vadd.f32 %v884, %v2163
        %v2165 = vpop.f32.mrf.mxu0
        %v2166 = vpop.f32.mrf.mxu0
        %v2167 = vadd.f32 %v885, %v2166
        %v2168 = vpop.f32.mrf.mxu0
        %2169 = vmatprep.mubr.bf16.mxu0 0
        %2170 = vmatmul.mubr.bf16.gmra.mxu0 %v1966
        %v2171 = vpop.f32.mrf.mxu0
        %v2172 = vadd.f32 %v886, %v2171
        %v2173 = vpop.f32.mrf.mxu0
        %v2174 = vpop.f32.mrf.mxu0
        %v2175 = vadd.f32 %v887, %v2174
        %v2176 = vpop.f32.mrf.mxu0
        %2177 = vmatprep.mubr.bf16.mxu0 0
        %2178 = vmatmul.mubr.bf16.gmra.mxu0 %v1967
        %v2179 = vpop.f32.mrf.mxu0
        %v2180 = vadd.f32 %v888, %v2179
        %v2181 = vpop.f32.mrf.mxu0
        %v2182 = vpop.f32.mrf.mxu0
        %v2183 = vadd.f32 %v889, %v2182
        %v2184 = vpop.f32.mrf.mxu0
        %2185 = vmatprep.mubr.bf16.mxu0 0
        %2186 = vmatmul.mubr.bf16.gmra.mxu0 %v1968
        %v2187 = vpop.f32.mrf.mxu0
        %v2188 = vadd.f32 %v890, %v2187
        %v2189 = vpop.f32.mrf.mxu0
        %v2190 = vpop.f32.mrf.mxu0
        %v2191 = vadd.f32 %v891, %v2190
        %v2192 = vpop.f32.mrf.mxu0
        %2193 = vdwg.mxu0
        %v2194 = vmax.f32 %v2068, %v2076
        %v2195 = vmax.f32 %v2071, %v2079
        %v2196 = vmax.f32 %v2084, %v2092
        %v2197 = vmax.f32 %v2087, %v2095
        %v2198 = vmax.f32 %v2100, %v2108
        %v2199 = vmax.f32 %v2103, %v2111
        %v2200 = vmax.f32 %v2116, %v2124
        %v2201 = vmax.f32 %v2119, %v2127
        %v2202 = vmax.f32 %v2132, %v2140
        %v2203 = vmax.f32 %v2135, %v2143
        %v2204 = vmax.f32 %v2148, %v2156
        %v2205 = vmax.f32 %v2151, %v2159
        %v2206 = vmax.f32 %v2164, %v2172
        %v2207 = vmax.f32 %v2167, %v2175
        %v2208 = vmax.f32 %v2180, %v2188
        %v2209 = vmax.f32 %v2183, %v2191
        %v2210 = vmax.f32 %v2194, %v2196
        %v2211 = vmax.f32 %v2195, %v2197
        %v2212 = vmax.f32 %v2198, %v2200
        %v2213 = vmax.f32 %v2199, %v2201
        %v2214 = vmax.f32 %v2202, %v2204
        %v2215 = vmax.f32 %v2203, %v2205
        %v2216 = vmax.f32 %v2206, %v2208
        %v2217 = vmax.f32 %v2207, %v2209
        %v2218 = vmax.f32 %v2210, %v2212
        %v2219 = vmax.f32 %v2211, %v2213
        %v2220 = vmax.f32 %v2214, %v2216
        %v2221 = vmax.f32 %v2215, %v2217
        %v2222 = vmax.f32 %v2218, %v2220
        %v2223 = vmax.f32 %v2219, %v2221
        %v2224 = vsub.f32 %v2068, %v2222
        %v2225 = vsub.f32 %v2071, %v2223
        %v2226 = vmul.f32 %v2224, 1.442695
        %v2227 = vpow.pop %v2226
        %v2228 = vmul.f32 %v2225, 1.442695
        %v2229 = vpow.pop %v2228
        %v2230 = vmul.f32 %v2227, %v1137
        %v2231 = vmul.f32 %v2229, %v1138
        %v2232 = vlaneseq
        %v2233 = vshrl.u32 %v2232, 7
        %v2234 = vsub.s32 0, %v2233
        %v2235 = vrot.slane %v1637, %v2234
        %v2236 = vmul.f32 %v2230, %v2235
        %v2237 = vmul.f32 %v2231, %v2235
        %v2238 = vsub.f32 %v2076, %v2222
        %v2239 = vsub.f32 %v2079, %v2223
        %v2240 = vmul.f32 %v2238, 1.442695
        %v2241 = vpow.pop %v2240
        %v2242 = vmul.f32 %v2239, 1.442695
        %v2243 = vpow.pop %v2242
        %v2244 = vmul.f32 %v2241, %v1153
        %v2245 = vmul.f32 %v2243, %v1154
        %v2246 = vlaneseq
        %v2247 = vshrl.u32 %v2246, 7
        %v2248 = vsub.s32 1, %v2247
        %v2249 = vrot.slane %v1637, %v2248
        %v2250 = vmul.f32 %v2244, %v2249
        %v2251 = vmul.f32 %v2245, %v2249
        %v2252 = vsub.f32 %v2084, %v2222
        %v2253 = vsub.f32 %v2087, %v2223
        %v2254 = vmul.f32 %v2252, 1.442695
        %v2255 = vpow.pop %v2254
        %v2256 = vmul.f32 %v2253, 1.442695
        %v2257 = vpow.pop %v2256
        %v2258 = vmul.f32 %v2255, %v1169
        %v2259 = vmul.f32 %v2257, %v1170
        %v2260 = vlaneseq
        %v2261 = vshrl.u32 %v2260, 7
        %v2262 = vsub.s32 2, %v2261
        %v2263 = vrot.slane %v1637, %v2262
        %v2264 = vmul.f32 %v2258, %v2263
        %v2265 = vmul.f32 %v2259, %v2263
        %v2266 = vsub.f32 %v2092, %v2222
        %v2267 = vsub.f32 %v2095, %v2223
        %v2268 = vmul.f32 %v2266, 1.442695
        %v2269 = vpow.pop %v2268
        %v2270 = vmul.f32 %v2267, 1.442695
        %v2271 = vpow.pop %v2270
        %v2272 = vmul.f32 %v2269, %v1185
        %v2273 = vmul.f32 %v2271, %v1186
        %v2274 = vlaneseq
        %v2275 = vshrl.u32 %v2274, 7
        %v2276 = vsub.s32 3, %v2275
        %v2277 = vrot.slane %v1637, %v2276
        %v2278 = vmul.f32 %v2272, %v2277
        %v2279 = vmul.f32 %v2273, %v2277
        %v2280 = vsub.f32 %v2100, %v2222
        %v2281 = vsub.f32 %v2103, %v2223
        %v2282 = vmul.f32 %v2280, 1.442695
        %v2283 = vpow.pop %v2282
        %v2284 = vmul.f32 %v2281, 1.442695
        %v2285 = vpow.pop %v2284
        %v2286 = vmul.f32 %v2283, %v1201
        %v2287 = vmul.f32 %v2285, %v1202
        %v2288 = vlaneseq
        %v2289 = vshrl.u32 %v2288, 7
        %v2290 = vsub.s32 4, %v2289
        %v2291 = vrot.slane %v1637, %v2290
        %v2292 = vmul.f32 %v2286, %v2291
        %v2293 = vmul.f32 %v2287, %v2291
        %v2294 = vadd.f32 %v2230, %v2286
        %v2295 = vadd.f32 %v2231, %v2287
        %v2296 = vadd.f32 %v2236, %v2292
        %v2297 = vadd.f32 %v2237, %v2293
        %v2298 = vsub.f32 %v2108, %v2222
        %v2299 = vsub.f32 %v2111, %v2223
        %v2300 = vmul.f32 %v2298, 1.442695
        %v2301 = vpow.pop %v2300
        %v2302 = vmul.f32 %v2299, 1.442695
        %v2303 = vpow.pop %v2302
        %v2304 = vmul.f32 %v2301, %v1221
        %v2305 = vmul.f32 %v2303, %v1222
        %v2306 = vlaneseq
        %v2307 = vshrl.u32 %v2306, 7
        %v2308 = vsub.s32 5, %v2307
        %v2309 = vrot.slane %v1637, %v2308
        %v2310 = vmul.f32 %v2304, %v2309
        %v2311 = vmul.f32 %v2305, %v2309
        %v2312 = vadd.f32 %v2244, %v2304
        %v2313 = vadd.f32 %v2245, %v2305
        %v2314 = vadd.f32 %v2250, %v2310
        %v2315 = vadd.f32 %v2251, %v2311
        %v2316 = vsub.f32 %v2116, %v2222
        %v2317 = vsub.f32 %v2119, %v2223
        %v2318 = vmul.f32 %v2316, 1.442695
        %v2319 = vpow.pop %v2318
        %v2320 = vmul.f32 %v2317, 1.442695
        %v2321 = vpow.pop %v2320
        %v2322 = vmul.f32 %v2319, %v1241
        %v2323 = vmul.f32 %v2321, %v1242
        %v2324 = vlaneseq
        %v2325 = vshrl.u32 %v2324, 7
        %v2326 = vsub.s32 6, %v2325
        %v2327 = vrot.slane %v1637, %v2326
        %v2328 = vmul.f32 %v2322, %v2327
        %v2329 = vmul.f32 %v2323, %v2327
        %v2330 = vadd.f32 %v2258, %v2322
        %v2331 = vadd.f32 %v2259, %v2323
        %v2332 = vadd.f32 %v2264, %v2328
        %v2333 = vadd.f32 %v2265, %v2329
        %v2334 = vsub.f32 %v2124, %v2222
        %v2335 = vsub.f32 %v2127, %v2223
        %v2336 = vmul.f32 %v2334, 1.442695
        %v2337 = vpow.pop %v2336
        %v2338 = vmul.f32 %v2335, 1.442695
        %v2339 = vpow.pop %v2338
        %v2340 = vmul.f32 %v2337, %v1261
        %v2341 = vmul.f32 %v2339, %v1262
        %v2342 = vlaneseq
        %v2343 = vshrl.u32 %v2342, 7
        %v2344 = vsub.s32 7, %v2343
        %v2345 = vrot.slane %v1637, %v2344
        %v2346 = vmul.f32 %v2340, %v2345
        %v2347 = vmul.f32 %v2341, %v2345
        %v2348 = vadd.f32 %v2272, %v2340
        %v2349 = vadd.f32 %v2273, %v2341
        %v2350 = vadd.f32 %v2278, %v2346
        %v2351 = vadd.f32 %v2279, %v2347
        %v2352 = vsub.f32 %v2132, %v2222
        %v2353 = vsub.f32 %v2135, %v2223
        %v2354 = vmul.f32 %v2352, 1.442695
        %v2355 = vpow.pop %v2354
        %v2356 = vmul.f32 %v2353, 1.442695
        %v2357 = vpow.pop %v2356
        %v2358 = vmul.f32 %v2355, %v1281
        %v2359 = vmul.f32 %v2357, %v1282
        %v2360 = vlaneseq
        %v2361 = vshrl.u32 %v2360, 7
        %v2362 = vsub.s32 0, %v2361
        %v2363 = vrot.slane %v1638, %v2362
        %v2364 = vmul.f32 %v2358, %v2363
        %v2365 = vmul.f32 %v2359, %v2363
        %v2366 = vadd.f32 %v2294, %v2358
        %v2367 = vadd.f32 %v2295, %v2359
        %v2368 = vadd.f32 %v2296, %v2364
        %v2369 = vadd.f32 %v2297, %v2365
        %v2370 = vsub.f32 %v2140, %v2222
        %v2371 = vsub.f32 %v2143, %v2223
        %v2372 = vmul.f32 %v2370, 1.442695
        %v2373 = vpow.pop %v2372
        %v2374 = vmul.f32 %v2371, 1.442695
        %v2375 = vpow.pop %v2374
        %v2376 = vmul.f32 %v2373, %v1301
        %v2377 = vmul.f32 %v2375, %v1302
        %v2378 = vlaneseq
        %v2379 = vshrl.u32 %v2378, 7
        %v2380 = vsub.s32 1, %v2379
        %v2381 = vrot.slane %v1638, %v2380
        %v2382 = vmul.f32 %v2376, %v2381
        %v2383 = vmul.f32 %v2377, %v2381
        %v2384 = vadd.f32 %v2312, %v2376
        %v2385 = vadd.f32 %v2313, %v2377
        %v2386 = vadd.f32 %v2314, %v2382
        %v2387 = vadd.f32 %v2315, %v2383
        %v2388 = vsub.f32 %v2148, %v2222
        %v2389 = vsub.f32 %v2151, %v2223
        %v2390 = vmul.f32 %v2388, 1.442695
        %v2391 = vpow.pop %v2390
        %v2392 = vmul.f32 %v2389, 1.442695
        %v2393 = vpow.pop %v2392
        %v2394 = vmul.f32 %v2391, %v1321
        %v2395 = vmul.f32 %v2393, %v1322
        %v2396 = vlaneseq
        %v2397 = vshrl.u32 %v2396, 7
        %v2398 = vsub.s32 2, %v2397
        %v2399 = vrot.slane %v1638, %v2398
        %v2400 = vmul.f32 %v2394, %v2399
        %v2401 = vmul.f32 %v2395, %v2399
        %v2402 = vadd.f32 %v2330, %v2394
        %v2403 = vadd.f32 %v2331, %v2395
        %v2404 = vadd.f32 %v2332, %v2400
        %v2405 = vadd.f32 %v2333, %v2401
        %v2406 = vsub.f32 %v2156, %v2222
        %v2407 = vsub.f32 %v2159, %v2223
        %v2408 = vmul.f32 %v2406, 1.442695
        %v2409 = vpow.pop %v2408
        %v2410 = vmul.f32 %v2407, 1.442695
        %v2411 = vpow.pop %v2410
        %v2412 = vmul.f32 %v2409, %v1341
        %v2413 = vmul.f32 %v2411, %v1342
        %v2414 = vlaneseq
        %v2415 = vshrl.u32 %v2414, 7
        %v2416 = vsub.s32 3, %v2415
        %v2417 = vrot.slane %v1638, %v2416
        %v2418 = vmul.f32 %v2412, %v2417
        %v2419 = vmul.f32 %v2413, %v2417
        %v2420 = vadd.f32 %v2348, %v2412
        %v2421 = vadd.f32 %v2349, %v2413
        %v2422 = vadd.f32 %v2350, %v2418
        %v2423 = vadd.f32 %v2351, %v2419
        %v2424 = vsub.f32 %v2164, %v2222
        %v2425 = vsub.f32 %v2167, %v2223
        %v2426 = vmul.f32 %v2424, 1.442695
        %v2427 = vpow.pop %v2426
        %v2428 = vmul.f32 %v2425, 1.442695
        %v2429 = vpow.pop %v2428
        %v2430 = vmul.f32 %v2427, %v1361
        %v2431 = vmul.f32 %v2429, %v1362
        %v2432 = vlaneseq
        %v2433 = vshrl.u32 %v2432, 7
        %v2434 = vsub.s32 4, %v2433
        %v2435 = vrot.slane %v1638, %v2434
        %v2436 = vmul.f32 %v2430, %v2435
        %v2437 = vmul.f32 %v2431, %v2435
        %v2438 = vadd.f32 %v2366, %v2430
        %v2439 = vadd.f32 %v2367, %v2431
        %v2440 = vadd.f32 %v2368, %v2436
        %v2441 = vadd.f32 %v2369, %v2437
        %v2442 = vsub.f32 %v2172, %v2222
        %v2443 = vsub.f32 %v2175, %v2223
        %v2444 = vmul.f32 %v2442, 1.442695
        %v2445 = vpow.pop %v2444
        %v2446 = vmul.f32 %v2443, 1.442695
        %v2447 = vpow.pop %v2446
        %v2448 = vmul.f32 %v2445, %v1381
        %v2449 = vmul.f32 %v2447, %v1382
        %v2450 = vlaneseq
        %v2451 = vshrl.u32 %v2450, 7
        %v2452 = vsub.s32 5, %v2451
        %v2453 = vrot.slane %v1638, %v2452
        %v2454 = vmul.f32 %v2448, %v2453
        %v2455 = vmul.f32 %v2449, %v2453
        %v2456 = vadd.f32 %v2384, %v2448
        %v2457 = vadd.f32 %v2385, %v2449
        %v2458 = vadd.f32 %v2386, %v2454
        %v2459 = vadd.f32 %v2387, %v2455
        %v2460 = vsub.f32 %v2180, %v2222
        %v2461 = vsub.f32 %v2183, %v2223
        %v2462 = vmul.f32 %v2460, 1.442695
        %v2463 = vpow.pop %v2462
        %v2464 = vmul.f32 %v2461, 1.442695
        %v2465 = vpow.pop %v2464
        %v2466 = vmul.f32 %v2463, %v1401
        %v2467 = vmul.f32 %v2465, %v1402
        %v2468 = vlaneseq
        %v2469 = vshrl.u32 %v2468, 7
        %v2470 = vsub.s32 6, %v2469
        %v2471 = vrot.slane %v1638, %v2470
        %v2472 = vmul.f32 %v2466, %v2471
        %v2473 = vmul.f32 %v2467, %v2471
        %v2474 = vadd.f32 %v2402, %v2466
        %v2475 = vadd.f32 %v2403, %v2467
        %v2476 = vadd.f32 %v2404, %v2472
        %v2477 = vadd.f32 %v2405, %v2473
        %v2478 = vsub.f32 %v2188, %v2222
        %v2479 = vsub.f32 %v2191, %v2223
        %v2480 = vmul.f32 %v2478, 1.442695
        %v2481 = vpow.pop %v2480
        %v2482 = vmul.f32 %v2479, 1.442695
        %v2483 = vpow.pop %v2482
        %v2484 = vmul.f32 %v2481, %v826
        %v2485 = vmul.f32 %v2483, %v827
        %v2486 = vlaneseq
        %v2487 = vshrl.u32 %v2486, 7
        %v2488 = vsub.s32 7, %v2487
        %v2489 = vrot.slane %v1638, %v2488
        %v2490 = vmul.f32 %v2484, %v2489
        %v2491 = vmul.f32 %v2485, %v2489
        %v2492 = vadd.f32 %v2420, %v2484
        %v2493 = vadd.f32 %v2421, %v2485
        %v2494 = vadd.f32 %v2422, %v2490
        %v2495 = vadd.f32 %v2423, %v2491
        %v2496 = vadd.f32 %v2438, %v2456
        %v2497 = vadd.f32 %v2439, %v2457
        %v2498 = vadd.f32 %v2474, %v2492
        %v2499 = vadd.f32 %v2475, %v2493
        %v2500 = vadd.f32 %v2496, %v2498
        %v2501 = vadd.f32 %v2497, %v2499
        %v2502 = vadd.f32 %v2440, %v2458
        %v2503 = vadd.f32 %v2441, %v2459
        %v2504 = vadd.f32 %v2476, %v2494
        %v2505 = vadd.f32 %v2477, %v2495
        %v2506 = vadd.f32 %v2502, %v2504
        %v2507 = vadd.f32 %v2503, %v2505
        %v2508 = vmax.f32 %v2500, 1e-30
        %v2509 = vmax.f32 %v2501, 1e-30
        %v2510 = vrcp.pop %v2508
        %v2511 = vrcp.pop %v2509
        %v2512 = vmul.f32 %v2506, %v2510
        %v2513 = vmul.f32 %v2507, %v2511
        %v2514 = vmax.f32 %v2512, 0.0
        %v2515 = vmax.f32 %v2513, 0.0
        %v2516 = vadd.f32 %v2514, %v1487
        %v2517 = vadd.f32 %v2515, %v1488
        %2518 = vadd.xlane.f32.xlu0 %v2516
        %v2519 = vpop.xlane.xlu0 %2518
        %2520 = vadd.xlane.f32.xlu0 %v2517
        %v2521 = vpop.xlane.xlu0 %2520
        %v2522 = vmul.f32 %v2519, 0.03125
        %v2523 = vmul.f32 %v2521, 0.03125
        %v2524 = vsub.f32 %v2516, %v2522
        %v2525 = vsub.f32 %v2517, %v2523
        %v2526 = vmul.f32 %v2524, %v297
        %v2527 = vmul.f32 %v2525, %v297
        %v2528 = vmul.f32 %v2526, %v2526
        %v2529 = vmul.f32 %v2527, %v2527
        %2530 = vadd.xlane.f32.xlu0 %v2528
        %v2531 = vpop.xlane.xlu0 %2530
        %2532 = vadd.xlane.f32.xlu0 %v2529
        %v2533 = vpop.xlane.xlu0 %2532
        %v2534 = vmul.f32 %v2531, 0.03125
        %v2535 = vmul.f32 %v2533, 0.03125
        %v2536 = vadd.f32 %v2534, 1e-05
        %v2537 = vadd.f32 %v2535, 1e-05
        %v2538 = vrsqrt.pop %v2536
        %v2539 = vrsqrt.pop %v2537
        %v2540 = vmul.f32 %v2526, %v2538
        %v2541 = vmul.f32 %v2527, %v2539
        %v2542 = vlaneseq
        %v2543 = vshrl.u32 %v2542, 7
        %v2544 = vsub.s32 0, %v2543
        %v2545 = vrot.slane %v1491, %v2544
        %v2546 = vmul.f32 %v2540, %v2545
        %v2547 = vmul.f32 %v2541, %v2545
        %v2548 = vlaneseq
        %v2549 = vshrl.u32 %v2548, 7
        %v2550 = vsub.s32 0, %v2549
        %v2551 = vrot.slane %v1492, %v2550
        %v2552 = vadd.f32 %v2546, %v2551
        %v2553 = vadd.f32 %v2547, %v2551
        %v2554 = vld [vmem:[%s2 + $0x8] sm:$0x1]
        %v2555 = vld [vmem:[%s2 + $0x9] sm:$0x1]
        %v2556 = vpack.c.bf16 %v2553, %v2552
        %v2557 = vld [vmem:[%s5] sm:$0xf]
        %v2558 = vld [vmem:[%s5 + $0x4] sm:$0xf]
        %v2559 = vld [vmem:[%s5 + $0x8] sm:$0xf]
        %v2560 = vld [vmem:[%s5 + $0xc] sm:$0xf]
        %v2561 = vld [vmem:[%s5 + $0x10] sm:$0xf]
        %v2562 = vld [vmem:[%s5 + $0x14] sm:$0xf]
        %v2563 = vld [vmem:[%s5 + $0x18] sm:$0xf]
        %v2564 = vld [vmem:[%s5 + $0x1c] sm:$0xf]
        %v2565 = vld [vmem:[%s5 + $0x20] sm:$0xf]
        %v2566 = vld [vmem:[%s5 + $0x24] sm:$0xf]
        %v2567 = vld [vmem:[%s5 + $0x28] sm:$0xf]
        %v2568 = vld [vmem:[%s5 + $0x2c] sm:$0xf]
        %v2569 = vld [vmem:[%s5 + $0x30] sm:$0xf]
        %v2570 = vld [vmem:[%s5 + $0x34] sm:$0xf]
        %v2571 = vld [vmem:[%s5 + $0x38] sm:$0xf]
        %v2572 = vld [vmem:[%s5 + $0x3c] sm:$0xf]
        %v2573 = vlaneseq
        %v2574 = vshrl.u32 %v2573, 7
        %v2575 = vsub.s32 0, %v2574
        %v2576 = vrot.slane %v2554, %v2575
        %v2593 = vunpack.c.l.b16 %v2557
        %v2594 = vunpack.c.l.b16 %v2558
        %v2595 = vunpack.c.l.b16 %v2559
        %v2596 = vunpack.c.l.b16 %v2560
        %v2597 = vunpack.c.l.b16 %v2561
        %v2598 = vunpack.c.l.b16 %v2562
        %v2599 = vunpack.c.l.b16 %v2563
        %v2600 = vunpack.c.l.b16 %v2564
        %v2601 = vunpack.c.l.b16 %v2565
        %v2602 = vunpack.c.l.b16 %v2566
        %v2603 = vunpack.c.l.b16 %v2567
        %v2604 = vunpack.c.l.b16 %v2568
        %v2605 = vunpack.c.l.b16 %v2569
        %v2606 = vunpack.c.l.b16 %v2570
        %v2607 = vunpack.c.l.b16 %v2571
        %v2608 = vunpack.c.l.b16 %v2572
        %v2609 = vpack.c.b16 %v2594, %v2593
        %v2610 = vpack.c.b16 %v2596, %v2595
        %v2611 = vpack.c.b16 %v2598, %v2597
        %v2612 = vpack.c.b16 %v2600, %v2599
        %v2613 = vpack.c.b16 %v2602, %v2601
        %v2614 = vpack.c.b16 %v2604, %v2603
        %v2615 = vpack.c.b16 %v2606, %v2605
        %v2616 = vpack.c.b16 %v2608, %v2607
        %2625 = vmatprep.subr.bf16.mxu0 0
        %2626 = vmatpush1.bf16.msra.mxu0 %v2616
        %2627 = vmatprep.subr.bf16.mxu0 0
        %2628 = vmatpush1.bf16.msra.mxu0 %v2615
        %2629 = vmatprep.subr.bf16.mxu0 0
        %2630 = vmatpush1.bf16.msra.mxu0 %v2614
        %2631 = vmatprep.subr.bf16.mxu0 0
        %2632 = vmatpush1.bf16.msra.mxu0 %v2613
        %2633 = vmatprep.subr.bf16.mxu0 0
        %2634 = vmatpush1.bf16.msra.mxu0 %v2612
        %2635 = vmatprep.subr.bf16.mxu0 0
        %2636 = vmatpush1.bf16.msra.mxu0 %v2611
        %2637 = vmatprep.subr.bf16.mxu0 0
        %2638 = vmatpush1.bf16.msra.mxu0 %v2610
        %2639 = vmatprep.subr.bf16.mxu0 0
        %2640 = vmatpush1.bf16.msra.mxu0 %v2609
        %2641 = vmatprep.subr.bf16.mxu0 0
        %2642 = vmatpush2.bf16.msra.mxu0 0
        %2643 = vmatprep.subr.bf16.mxu0 0
        %2644 = vmatpush2.bf16.msra.mxu0 0
        %2645 = vmatprep.subr.bf16.mxu0 0
        %2646 = vmatpush2.bf16.msra.mxu0 0
        %2647 = vmatprep.subr.bf16.mxu0 0
        %2648 = vmatpush2.bf16.msra.mxu0 0
        %2649 = vmatprep.subr.bf16.mxu0 0
        %2650 = vmatpush2.bf16.msra.mxu0 0
        %2651 = vmatprep.subr.bf16.mxu0 0
        %2652 = vmatpush2.bf16.msra.mxu0 0
        %2653 = vmatprep.subr.bf16.mxu0 0
        %2654 = vmatpush2.bf16.msra.mxu0 0
        %2655 = vmatprep.subr.bf16.mxu0 0
        %2656 = vmatpush2.bf16.msra.mxu0 0
        %2657 = vmatprep.mubr.bf16.mxu0 0
        %2658 = vmatmul.mubr.bf16.gmra.mxu0 %v2556
        %v2659 = vpop.f32.mrf.mxu0
        %v2660 = vadd.f32 %v2576, %v2659
        %v2661 = vpop.f32.mrf.mxu0
        %v2662 = vpop.f32.mrf.mxu0
        %v2663 = vadd.f32 %v2576, %v2662
        %v2664 = vpop.f32.mrf.mxu0
        %2665 = vdwg.mxu0
        %v2666 = vmax.f32 %v2660, 0.0
        %v2667 = vmax.f32 %v2663, 0.0
        %v2668 = vpack.c.bf16 %v2667, %v2666
        %v2669 = vld [vmem:[%s5 + $0x40] sm:$0xf]
        %v2670 = vld [vmem:[%s5 + $0x44] sm:$0xf]
        %v2671 = vld [vmem:[%s5 + $0x48] sm:$0xf]
        %v2672 = vld [vmem:[%s5 + $0x4c] sm:$0xf]
        %v2673 = vld [vmem:[%s5 + $0x50] sm:$0xf]
        %v2674 = vld [vmem:[%s5 + $0x54] sm:$0xf]
        %v2675 = vld [vmem:[%s5 + $0x58] sm:$0xf]
        %v2676 = vld [vmem:[%s5 + $0x5c] sm:$0xf]
        %v2677 = vld [vmem:[%s5 + $0x60] sm:$0xf]
        %v2678 = vld [vmem:[%s5 + $0x64] sm:$0xf]
        %v2679 = vld [vmem:[%s5 + $0x68] sm:$0xf]
        %v2680 = vld [vmem:[%s5 + $0x6c] sm:$0xf]
        %v2681 = vld [vmem:[%s5 + $0x70] sm:$0xf]
        %v2682 = vld [vmem:[%s5 + $0x74] sm:$0xf]
        %v2683 = vld [vmem:[%s5 + $0x78] sm:$0xf]
        %v2684 = vld [vmem:[%s5 + $0x7c] sm:$0xf]
        %v2685 = vlaneseq
        %v2686 = vshrl.u32 %v2685, 7
        %v2687 = vsub.s32 0, %v2686
        %v2688 = vrot.slane %v2555, %v2687
        %v2705 = vunpack.c.l.b16 %v2669
        %v2706 = vunpack.c.l.b16 %v2670
        %v2707 = vunpack.c.l.b16 %v2671
        %v2708 = vunpack.c.l.b16 %v2672
        %v2709 = vunpack.c.l.b16 %v2673
        %v2710 = vunpack.c.l.b16 %v2674
        %v2711 = vunpack.c.l.b16 %v2675
        %v2712 = vunpack.c.l.b16 %v2676
        %v2713 = vunpack.c.l.b16 %v2677
        %v2714 = vunpack.c.l.b16 %v2678
        %v2715 = vunpack.c.l.b16 %v2679
        %v2716 = vunpack.c.l.b16 %v2680
        %v2717 = vunpack.c.l.b16 %v2681
        %v2718 = vunpack.c.l.b16 %v2682
        %v2719 = vunpack.c.l.b16 %v2683
        %v2720 = vunpack.c.l.b16 %v2684
        %v2721 = vpack.c.b16 %v2706, %v2705
        %v2722 = vpack.c.b16 %v2708, %v2707
        %v2723 = vpack.c.b16 %v2710, %v2709
        %v2724 = vpack.c.b16 %v2712, %v2711
        %v2725 = vpack.c.b16 %v2714, %v2713
        %v2726 = vpack.c.b16 %v2716, %v2715
        %v2727 = vpack.c.b16 %v2718, %v2717
        %v2728 = vpack.c.b16 %v2720, %v2719
        %2737 = vmatprep.subr.bf16.mxu0 0
        %2738 = vmatpush1.bf16.msra.mxu0 %v2728
        %2739 = vmatprep.subr.bf16.mxu0 0
        %2740 = vmatpush1.bf16.msra.mxu0 %v2727
        %2741 = vmatprep.subr.bf16.mxu0 0
        %2742 = vmatpush1.bf16.msra.mxu0 %v2726
        %2743 = vmatprep.subr.bf16.mxu0 0
        %2744 = vmatpush1.bf16.msra.mxu0 %v2725
        %2745 = vmatprep.subr.bf16.mxu0 0
        %2746 = vmatpush1.bf16.msra.mxu0 %v2724
        %2747 = vmatprep.subr.bf16.mxu0 0
        %2748 = vmatpush1.bf16.msra.mxu0 %v2723
        %2749 = vmatprep.subr.bf16.mxu0 0
        %2750 = vmatpush1.bf16.msra.mxu0 %v2722
        %2751 = vmatprep.subr.bf16.mxu0 0
        %2752 = vmatpush1.bf16.msra.mxu0 %v2721
        %2753 = vmatprep.subr.bf16.mxu0 0
        %2754 = vmatpush2.bf16.msra.mxu0 0
        %2755 = vmatprep.subr.bf16.mxu0 0
        %2756 = vmatpush2.bf16.msra.mxu0 0
        %2757 = vmatprep.subr.bf16.mxu0 0
        %2758 = vmatpush2.bf16.msra.mxu0 0
        %2759 = vmatprep.subr.bf16.mxu0 0
        %2760 = vmatpush2.bf16.msra.mxu0 0
        %2761 = vmatprep.subr.bf16.mxu0 0
        %2762 = vmatpush2.bf16.msra.mxu0 0
        %2763 = vmatprep.subr.bf16.mxu0 0
        %2764 = vmatpush2.bf16.msra.mxu0 0
        %2765 = vmatprep.subr.bf16.mxu0 0
        %2766 = vmatpush2.bf16.msra.mxu0 0
        %2767 = vmatprep.subr.bf16.mxu0 0
        %2768 = vmatpush2.bf16.msra.mxu0 0
        %2769 = vmatprep.mubr.bf16.mxu0 0
        %2770 = vmatmul.mubr.bf16.gmra.mxu0 %v2668
        %v2771 = vpop.f32.mrf.mxu0
        %v2772 = vadd.f32 %v2688, %v2771
        %v2773 = vpop.f32.mrf.mxu0
        %v2774 = vpop.f32.mrf.mxu0
        %v2775 = vadd.f32 %v2688, %v2774
        %v2776 = vpop.f32.mrf.mxu0
        %2777 = vdwg.mxu0
        %2778 = vst [vmem:[%s276] sm:$0xff] %v2772
        %2779 = vst [vmem:[%s276 + $0x8] sm:$0xff] %v2775
        %2780 = vst [vmem:[%s283] sm:$0xff] %v2552
        %2781 = vst [vmem:[%s283 + $0x8] sm:$0xff] %v2553
        %s2782 = sand.u32 %s164, 1
        %s2783 = scalar_lea.sflag [#allocation3], %s2782
        %s2784 = sand.u32 %s164, 1
        %s2785 = smul.addr %s2784, 16
        %s2786 = scalar_lea.vmem [#allocation2], %s2785
        %s2787 = sand.u32 %s190, 1
        %s2788 = scalar_lea.sflag [#allocation5], %s2787
        %s2789 = sand.u32 %s190, 1
        %s2790 = smul.addr %s2789, 16
        %s2791 = scalar_lea.vmem [#allocation4], %s2790
        // Predicated region
        $region45: #{_lambda_.1} parent=43 // pred_check
          %p2792 = pneg %p174
        $region46: #{_lambda_.1} parent=43 // pred_check_branch
          %2794 = sbr.rel (%p2792) target = $region48
        $region47: #{_lambda_.1} parent=43 // pred_region
          %s2795 = smul.u32 2, %s25
          %s2797 = ssub.s32 256, 256
          %2798 = vsyncadd %s2783, %s2797
          %s2799 = smul.addr %s2795, 128
          %s2800 = scalar_lea.hbm %s6, %s2799
          %s2801 = sshll.u32 %s2786, 4
          %s2802 = int_to_ptr.vmem [resolvable:$true] %s2801
          %2807 = dma.vmem_to_hbm [thread:$0]  %s2802, 256, %s2800, %s2783, 128, 128, 8
        $region48: #{_lambda_.1} parent=43 // pred_fallthru
          _
        // Predicated region
        $region49: #{_lambda_.1} parent=43 // pred_check
          %p2808 = pneg %p200
        $region50: #{_lambda_.1} parent=43 // pred_check_branch
          %2810 = sbr.rel (%p2808) target = $region52
        $region51: #{_lambda_.1} parent=43 // pred_region
          %s2811 = smul.u32 2, %s25
          %s2813 = ssub.s32 256, 256
          %2814 = vsyncadd %s2788, %s2813
          %s2815 = smul.addr %s2811, 128
          %s2816 = scalar_lea.hbm %s7, %s2815
          %s2817 = sshll.u32 %s2791, 4
          %s2818 = int_to_ptr.vmem [resolvable:$true] %s2817
          %2823 = dma.vmem_to_hbm [thread:$0]  %s2818, 256, %s2816, %s2788, 128, 128, 8
        $region52: #{_lambda_.1} parent=43 // pred_fallthru
          _
      $region44: #{_lambda_.1} parent=5 // pred_fallthru
        _
      %p2824 = scmp.le.s32.totalorder 2, %s20
      // Predicated region
      $region53: #{_lambda_.1} parent=5 // pred_check
        %p2825 = pneg %p2824
      $region54: #{_lambda_.1} parent=5 // pred_check_branch
        %2827 = sbr.rel (%p2825) target = $region56
      $region55: #{_lambda_.1} parent=5 // pred_region
        %s2828 = ssub.s32 %s20, 2
        // Predicated region
        $region57: #{_lambda_.1} parent=55 // pred_check
          %p2829 = pneg %p180
        $region58: #{_lambda_.1} parent=55 // pred_check_branch
          %2831 = sbr.rel (%p2829) target = $region60
        $region59: #{_lambda_.1} parent=55 // pred_region
          %s2832 = sand.u32 %s165, 1
          %s2833 = scalar_lea.sflag [#allocation3], %s2832
          %s2834 = sand.u32 %s165, 1
          %s2835 = smul.addr %s2834, 16
          %s2836 = scalar_lea.vmem [#allocation2], %s2835
          %2837 = dma.done %s2833, 256
        $region60: #{_lambda_.1} parent=55 // pred_fallthru
          _
        // Predicated region
        $region61: #{_lambda_.1} parent=55 // pred_check
          %p2838 = pneg %p206
        $region62: #{_lambda_.1} parent=55 // pred_check_branch
          %2840 = sbr.rel (%p2838) target = $region64
        $region63: #{_lambda_.1} parent=55 // pred_region
          %s2841 = sand.u32 %s191, 1
          %s2842 = scalar_lea.sflag [#allocation5], %s2841
          %s2843 = sand.u32 %s191, 1
          %s2844 = smul.addr %s2843, 16
          %s2845 = scalar_lea.vmem [#allocation4], %s2844
          %2846 = dma.done %s2842, 256
        $region64: #{_lambda_.1} parent=55 // pred_fallthru
          _
      $region56: #{_lambda_.1} parent=5 // pred_fallthru
        _
    $region6: #{_lambda_.1} parent=1 // loop_footer
      %s24 = sadd.s32 1, %s20
    $region7: #{_lambda_.1} parent=1 // loop_footer_branch
      %19 = sbr.rel target = $region3
    $region8: #{_lambda_.1} parent=1 // loop_exit
      _
    %2847 = vsyncpa [#allocation3], 1
    %s2848 = scalar_lea.sflag [#allocation3], 1
    %2849 = vsyncpa %s2848, 1
    %2850 = vsyncpa [#allocation5], 1
    %s2851 = scalar_lea.sflag [#allocation5], 1
    %2852 = vsyncpa %s2851, 1

</llo_original>
